<compile_context>
chip_gen: v5e
topology: v5e:2x2
jax: 0.10.0
libtpu: 0.0.40
codegen_flags: <defaults>
</compile_context>

<pallas_src>
import functools

import jax
import jax.numpy as jnp
from jax import lax
from jax.experimental import pallas as pl
from jax.experimental.pallas import tpu as pltpu


# ----------------------------------------------------------------------------
# Kernel 1: SENSE coil reduction  sum_c conj(S_c) * X_c  (+ fused image stats)
# ----------------------------------------------------------------------------

def _coil_reduce_kernel(xr_ref, xi_ref, sr_ref, si_ref, img_ref, acc_ref):
    """Input blocks (1, C, tile_p); image block (1, 2, tile_p); stats (1, 1, 2).

    The stats output accumulates [sum, sum_of_squares] of the reduced image
    across the spatial-tile grid axis (standard output-accumulator pattern).
    """
    t = pl.program_id(1)
    xr = xr_ref[...]
    xi = xi_ref[...]
    sr = sr_ref[...]
    si = si_ref[...]
    rr = jnp.sum(sr * xr + si * xi, axis=1, keepdims=True)   # (1, 1, tile_p)
    ii = jnp.sum(sr * xi - si * xr, axis=1, keepdims=True)

    # Lane-dense stores into the single combined output (real row 0, imag row 1).
    img_ref[:, 0:1, :] = rr
    img_ref[:, 1:2, :] = ii

    @pl.when(t == 0)
    def _init():
        acc_ref[...] = jnp.zeros_like(acc_ref)

    s_val = jnp.sum(rr) + jnp.sum(ii)
    q_val = jnp.sum(rr * rr) + jnp.sum(ii * ii)
    sel = lax.broadcasted_iota(jnp.int32, (1, 1, 2), 2) == 0
    acc_ref[...] += jnp.where(sel, s_val, q_val)


def _choose_tile_p(p, c, budget_bytes=16 * 1024 * 1024, max_tile=65536):
    """Largest 128-multiple divisor of p whose double-buffered working set fits."""
    if p % 128 != 0:
        # TODO(synk): pad/mask odd spatial sizes; single tile is fine at demo sizes.
        return p
    # 4 coil-input blocks + 2 output rows, f32, double-buffered.
    denom = (4 * c + 2) * 4 * 2
    cap = min(max(128, budget_bytes // denom), max_tile, p)
    best, t = 128, 128
    while t <= cap:
        if p % t == 0:
            best = t
        t += 128
    return best


def reduce_and_stats(xr, xi, sr, si):
    """Planar real/imag coil images & sens maps (N, C, D, H, W) ->
       image (N, 2, D, H, W) f32  and per-sample stats (N, 1, 2) = [mean, std]."""
    n, c, d, h, w = xr.shape
    p = d * h * w
    xr = xr.reshape(n, c, p)                       # contiguous views, no copies
    xi = xi.reshape(n, c, p)
    sr = sr.reshape(n, c, p).astype(jnp.float32)
    si = si.reshape(n, c, p).astype(jnp.float32)

    tile_p = _choose_tile_p(p, c)
    n_tiles = p // tile_p

    in_spec = pl.BlockSpec((1, c, tile_p), lambda b, t: (b, 0, t))
    img_spec = pl.BlockSpec((1, 2, tile_p), lambda b, t: (b, 0, t))
    acc_spec = pl.BlockSpec((1, 1, 2), lambda b, t: (b, 0, 0))

    img, raw = pl.pallas_call(
        _coil_reduce_kernel,
        out_shape=(jax.ShapeDtypeStruct((n, 2, p), jnp.float32),
                   jax.ShapeDtypeStruct((n, 1, 2), jnp.float32)),
        grid=(n, n_tiles),
        in_specs=[in_spec] * 4,
        out_specs=(img_spec, acc_spec),
        compiler_params=pltpu.CompilerParams(
            dimension_semantics=("parallel", "arbitrary"),
            vmem_limit_bytes=32 * 1024 * 1024),
    )(xr, xi, sr, si)

    # O(N)-sized finalize (torch's unbiased std, ddof=1).
    cnt = 2.0 * p
    ssum = raw[:, :, 0:1]
    ssq = raw[:, :, 1:2]
    mean = ssum / cnt
    var = (ssq - cnt * mean * mean) / (cnt - 1.0)
    # NOTE: no epsilon guard on std (faithful to the reference); a constant
    # input volume would produce inf/NaN in both implementations.
    std = jnp.sqrt(var)
    stats = jnp.concatenate([mean, std], axis=-1)            # (N, 1, 2)
    return img.reshape(n, 2, d, h, w), stats


# ----------------------------------------------------------------------------
# Kernel 2: fused VisionTransformer3D body
#   grid = (batch_tiles, depth); one transformer block per depth step;
#   tokens carried across depth in a VMEM scratch accumulator.
# ----------------------------------------------------------------------------

def _vit_fused_kernel(xp_ref, stats_ref, pos_ref, pw_ref, pb_ref,
                      ln1g_ref, ln1b_ref, qkvw_ref, qkvb_ref,
                      projw_ref, projb_ref, ln2g_ref, ln2b_ref,
                      fc1w_ref, fc1b_ref, fc2w_ref, fc2b_ref,
                      ng_ref, nb_ref, hw_ref, hb_ref,
                      out_ref, tok_ref,
                      *, num_heads, eps, normalized, use_pos_embedding):
    f32 = jnp.float32
    layer = pl.program_id(1)
    n_layers = pl.num_programs(1)
    b_tile, t, patch_dim = xp_ref.shape
    bt, e = tok_ref.shape                          # bt = b_tile * t
    dh = e // num_heads
    hb = num_heads * b_tile
    scale = dh ** -0.5                             # qk_scale=None -> head_dim**-0.5

    def mm(a, w, bias=None):
        """MXU matmul: bf16 (or f32) weights, f32 accumulation."""
        y = jnp.dot(a.astype(w.dtype), w, preferred_element_type=f32)
        return y if bias is None else y + bias.astype(f32)

    def layernorm(a, g, bias):
        mu = jnp.mean(a, axis=-1, keepdims=True)
        var = jnp.mean((a - mu) ** 2, axis=-1, keepdims=True)
        return (a - mu) * lax.rsqrt(var + eps) * g.astype(f32) + bias.astype(f32)

    # ---- First layer only: normalize -> patch embed -> +pos -> token scratch.
    @pl.when(layer == 0)
    def _embed():
        x = xp_ref[...].astype(f32)                            # (B, T, P)
        if normalized:
            x = (x - stats_ref[:, :, 0:1]) / stats_ref[:, :, 1:2]
        tokens = mm(x.reshape(bt, patch_dim), pw_ref[...], pb_ref[...])   # (BT, E)
        if use_pos_embedding:
            tokens = (tokens.reshape(b_tile, t, e)
                      + pos_ref[0].astype(f32)[None]).reshape(bt, e)
        tok_ref[...] = tokens

    # ---- One transformer block per depth grid step (use_gpsa=(-1,-1) -> MHSA).
    tokens = tok_ref[...]

    y = layernorm(tokens, ln1g_ref[0], ln1b_ref[0])
    qkv = mm(y, qkvw_ref[0], qkvb_ref[0])                      # (BT, 3E)
    qkv3 = qkv.reshape(b_tile, t, 3 * e)                       # leading-dim split: free
    # Fold all heads of all samples into one batch dim -> single batched matmul
    # per attention stage instead of a per-head Python loop.
    slab = jnp.concatenate(
        [qkv3[:, :, j * dh:(j + 1) * dh] for j in range(3 * num_heads)],
        axis=0)                                                # (3*H*B, T, dh)
    q = slab[:hb] * scale                                      # scale folded into q
    k = slab[hb:2 * hb]
    v = slab[2 * hb:]
    s = jnp.einsum("bqd,bkd->bqk", q, k, preferred_element_type=f32)
    s = s - jnp.max(s, axis=-1, keepdims=True)
    pr = jnp.exp(s)
    # NOTE: approx reciprocal (EUP slot) -> ~1e-3 rel-err vs exact torch softmax.
    pr = pr * pl.reciprocal(jnp.sum(pr, axis=-1, keepdims=True), approx=True)
    o = jnp.einsum("bqk,bkd->bqd", pr, v, preferred_element_type=f32)  # (H*B, T, dh)
    attn = jnp.concatenate(
        [o[hh * b_tile:(hh + 1) * b_tile] for hh in range(num_heads)],
        axis=-1).reshape(bt, e)                                # (BT, E)
    tokens = tokens + mm(attn, projw_ref[0], projb_ref[0])     # residual (drop-path=id)

    y = layernorm(tokens, ln2g_ref[0], ln2b_ref[0])
    hid = mm(y, fc1w_ref[0], fc1b_ref[0])
    hid = 0.5 * hid * (1.0 + lax.erf(hid * 0.7071067811865476))   # exact GELU (torch default)
    tokens = tokens + mm(hid, fc2w_ref[0], fc2b_ref[0])
    tok_ref[...] = tokens

    # ---- Last layer only: final LN -> head -> de-normalize -> LANE-DENSE store.
    @pl.when(layer == n_layers - 1)
    def _head():
        yf = layernorm(tokens, ng_ref[...], nb_ref[...])
        out = mm(yf, hw_ref[...], hb_ref[...])                 # (BT, HO)
        ho = out.shape[-1]
        out3 = out.reshape(b_tile, t, ho)                      # leading split: free
        if normalized:
            out3 = out3 * stats_ref[:, :, 1:2] + stats_ref[:, :, 0:1]
        # Pack tokens along lanes so the HBM store is unmasked/lane-dense.
        out_flat = jnp.concatenate([out3[:, tt, :] for tt in range(t)], axis=-1)
        out_ref[...] = out_flat.astype(out_ref.dtype)          # (B, T*HO)


def _choose_batch_tile(n, t, max_rows=512):
    """Samples per grid step: grow the MXU M dim while keeping layout-legal blocks."""
    cands = [b for b in range(1, n + 1) if n % b == 0 and (b == n or b % 8 == 0)]
    fitting = [b for b in cands if b * t <= max(max_rows, t)]
    return max(fitting) if fitting else min(cands)


def vit3d_forward(image, stats, params, patch_size, num_heads,
                  normalized=True, use_pos_embedding=True):
    """VisionTransformer3D forward. image: (N, 2, D, H, W) f32 -> (N, Cout, D, H, W)."""
    n, cin, d, h, w = image.shape
    pd, ph, pw = patch_size
    assert d % pd == 0 and h % ph == 0 and w % pw == 0
    # TODO(synk): reflect padding / unpadding for non-multiple spatial sizes and
    # pos-embedding interpolation (average_size != input size) not implemented.
    gd, gh, gw = d // pd, h // ph, w // pw
    t = gd * gh * gw
    patch_dim = cin * pd * ph * pw
    embed_dim = params["patch_w"].shape[1]
    head_out = params["head_w"].shape[1]
    depth = params["qkv_w"].shape[0]
    cout = head_out // (pd * ph * pw)
    assert embed_dim % num_heads == 0

    # Patch extraction (im2col), fed to the kernel as bf16 (halves input DMA;
    # it is cast to bf16 before the MXU anyway).
    # TODO(synk): fold im2col into the kernel (in-VMEM patch gather) to avoid
    # this one XLA data-movement pass.
    xp = image.reshape(n, cin, gd, pd, gh, ph, gw, pw)
    xp = xp.transpose(0, 2, 4, 6, 1, 3, 5, 7).reshape(n, t, patch_dim)
    xp = xp.astype(jnp.bfloat16)

    b_tile = _choose_batch_tile(n, t)
    t_ho = t * head_out

    def const_spec(arr):
        shape = tuple(arr.shape)
        nd = len(shape)
        return pl.BlockSpec(shape, lambda b, l, _z=(0,) * nd: _z)

    def layer_spec(arr):
        shape = tuple(arr.shape)
        blk = (1,) + shape[1:]
        tail = (0,) * (len(shape) - 1)
        return pl.BlockSpec(blk, lambda b, l, _t=tail: (l,) + _t)

    weight_keys = ("pos_tokens", "patch_w", "patch_b")
    layer_keys = ("ln1_g", "ln1_b", "qkv_w", "qkv_b", "proj_w", "proj_b",
                  "ln2_g", "ln2_b", "fc1_w", "fc1_b", "fc2_w", "fc2_b")
    tail_keys = ("norm_g", "norm_b", "head_w", "head_b")

    in_specs = ([pl.BlockSpec((b_tile, t, patch_dim), lambda b, l: (b, 0, 0)),
                 pl.BlockSpec((b_tile, 1, 2), lambda b, l: (b, 0, 0))]
                + [const_spec(params[k]) for k in weight_keys]
                + [layer_spec(params[k]) for k in layer_keys]
                + [const_spec(params[k]) for k in tail_keys])

    # NOTE: 32 MiB scoped VMEM is plenty at these sizes; raise towards 64-96 MiB
    # on v6e (128 MiB physical) for realistic token counts / embed dims.
    # TODO(synk): realistic 320^3 volumes additionally need flash-style token
    # tiling inside each layer; activations here fit VMEM whole.
    out = pl.pallas_call(
        functools.partial(_vit_fused_kernel, num_heads=num_heads, eps=1e-5,
                          normalized=normalized,
                          use_pos_embedding=use_pos_embedding),
        out_shape=jax.ShapeDtypeStruct((n, t_ho), jnp.float32),
        grid=(n // b_tile, depth),
        in_specs=in_specs,
        out_specs=pl.BlockSpec((b_tile, t_ho), lambda b, l: (b, 0)),
        scratch_shapes=[pltpu.VMEM((b_tile * t, embed_dim), jnp.float32)],
        compiler_params=pltpu.CompilerParams(
            dimension_semantics=("parallel", "arbitrary"),
            vmem_limit_bytes=32 * 1024 * 1024),
    )(xp, stats,
      *[params[k] for k in weight_keys],
      *[params[k] for k in layer_keys],
      *[params[k] for k in tail_keys])

    # seq2img: fold lane-dense token vectors back into (N, Cout, D, H, W).
    out = out.reshape(n, gd, gh, gw, cout, pd, ph, pw)
    out = out.transpose(0, 4, 1, 5, 2, 6, 3, 7).reshape(n, cout, d, h, w)
    return out


# ----------------------------------------------------------------------------
# JAX glue (operators on k-space) and the full module forward
# ----------------------------------------------------------------------------

def backward_operator_split(kspace):
    """Centered, orthonormal 2D iFFT over dims (3, 4) (DIRECT's ifft2).

    Returns planar (real, imag) arrays directly (no channels-last stack that
    would immediately be re-sliced with strided gathers).
    """
    # TODO(synk): FFT has no Pallas equivalent; left in XLA.
    c = kspace[..., 0] + 1j * kspace[..., 1]
    c = jnp.fft.ifftshift(c, axes=(3, 4))
    c = jnp.fft.ifftn(c, axes=(3, 4), norm="ortho")
    c = jnp.fft.fftshift(c, axes=(3, 4))
    return jnp.real(c).astype(jnp.float32), jnp.imag(c).astype(jnp.float32)


def image_domain_mri_vit3d_forward(masked_kspace, sensitivity_map, params,
                                   patch_size, num_heads):
    """Forward of ImageDomainMRIViT3D.

    masked_kspace, sensitivity_map: (N, coil, D, H, W, 2)
    returns: (N, D, H, W, 2)
    """
    xr, xi = backward_operator_split(masked_kspace)       # planar coil images
    sr = sensitivity_map[..., 0]                          # one unavoidable split of
    si = sensitivity_map[..., 1]                          # the channels-last input
    image, stats = reduce_and_stats(xr, xi, sr, si)       # (N,2,D,H,W), (N,1,2)
    out = vit3d_forward(image, stats, params, patch_size, num_heads)
    return jnp.transpose(out, (0, 2, 3, 4, 1))            # .permute(0, 2, 3, 4, 1)


# ----------------------------------------------------------------------------
# Deterministic parameter initialization (synthetic weights, stacked per depth)
# ----------------------------------------------------------------------------

def init_params(key, patch_size, grid_size, embed_dim=32, depth=2, num_heads=4,
                mlp_ratio=4.0, qkv_bias=False, in_channels=2, out_channels=2,
                weight_dtype=jnp.bfloat16):
    del num_heads  # head split happens in the kernel; no per-head params
    pd, ph, pw = patch_size
    patch_dim = in_channels * pd * ph * pw
    head_out = out_channels * pd * ph * pw
    hidden = int(embed_dim * mlp_ratio)
    gd, gh, gw = grid_size
    t = gd * gh * gw

    keys = jax.random.split(key, 7)
    k_patch, k_pos, k_qkv, k_proj, k_fc1, k_fc2, k_head = keys

    def w(k, shape):
        # Big matmul weights stored in bf16 (halves weight DMA, native MXU dtype
        # on v6e/v7x); LN params and biases stay f32.
        return (jax.random.normal(k, shape, jnp.float32) * 0.02).astype(weight_dtype)

    # pos_embedding is (1, E, gd, gh, gw) in PyTorch; pre-flatten to token layout.
    pos = jax.random.normal(k_pos, (1, embed_dim, gd, gh, gw), jnp.float32) * 0.02
    pos_tokens = pos.reshape(1, embed_dim, t).transpose(0, 2, 1)     # (1, T, E)

    zeros = lambda shape: jnp.zeros(shape, jnp.float32)
    ones = lambda shape: jnp.ones(shape, jnp.float32)

    params = {
        "patch_w": w(k_patch, (patch_dim, embed_dim)),
        "patch_b": zeros((1, embed_dim)),
        "pos_tokens": pos_tokens.astype(jnp.float32),
        "ln1_g": ones((depth, 1, embed_dim)),
        "ln1_b": zeros((depth, 1, embed_dim)),
        "qkv_w": w(k_qkv, (depth, embed_dim, 3 * embed_dim)),
        # qkv_bias=False (module default) -> zero bias, created once.
        "qkv_b": zeros((depth, 1, 3 * embed_dim)),
        "proj_w": w(k_proj, (depth, embed_dim, embed_dim)),
        "proj_b": zeros((depth, 1, embed_dim)),
        "ln2_g": ones((depth, 1, embed_dim)),
        "ln2_b": zeros((depth, 1, embed_dim)),
        "fc1_w": w(k_fc1, (depth, embed_dim, hidden)),
        "fc1_b": zeros((depth, 1, hidden)),
        "fc2_w": w(k_fc2, (depth, hidden, embed_dim)),
        "fc2_b": zeros((depth, 1, embed_dim)),
        "norm_g": ones((1, embed_dim)),
        "norm_b": zeros((1, embed_dim)),
        "head_w": w(k_head, (embed_dim, head_out)),
        "head_b": zeros((1, head_out)),
    }
    if qkv_bias:
        pass  # bias already allocated (zeros); real training would initialize it.
    return params


# ----------------------------------------------------------------------------
# Example run
# ----------------------------------------------------------------------------

if __name__ == "__main__":
    key = jax.random.PRNGKey(0)
    # Small shapes: batch=2, coils=2, slices=4, H=W=8, complex=2.
    N, COILS, D, H, W = 2, 2, 4, 8, 8
    patch_size = (2, 4, 4)                        # -> token grid (2, 2, 2), 8 tokens
    grid_size = (D // patch_size[0], H // patch_size[1], W // patch_size[2])
    embed_dim, depth, num_heads = 32, 2, 4        # head_dim = 8

    k1, k2, k3 = jax.random.split(key, 3)
    masked_kspace = jax.random.normal(k1, (N, COILS, D, H, W, 2), jnp.float32)
    sensitivity_map = jax.random.normal(k2, (N, COILS, D, H, W, 2), jnp.float32)
    params = init_params(k3, patch_size, grid_size, embed_dim=embed_dim,
                         depth=depth, num_heads=num_heads)

    fwd = jax.jit(functools.partial(image_domain_mri_vit3d_forward,
                                    patch_size=patch_size, num_heads=num_heads))
    out = fwd(masked_kspace, sensitivity_map, params)
    out = jax.block_until_ready(out)
    assert out.shape == (N, D, H, W, 2), out.shape
    assert out.dtype == jnp.float32
    print("KERNEL_OK")
</pallas_src>

<mosaic_0001>
module attributes {stable_mosaic.version = 11 : i64} {
  func.func @_coil_reduce_kernel(%arg0: i32, %arg1: i32, %arg2: memref<1x2x256xf32, #tpu.memory_space<vmem>>, %arg3: memref<1x2x256xf32, #tpu.memory_space<vmem>>, %arg4: memref<1x2x256xf32, #tpu.memory_space<vmem>>, %arg5: memref<1x2x256xf32, #tpu.memory_space<vmem>>, %arg6: memref<1x2x256xf32, #tpu.memory_space<vmem>>, %arg7: memref<1x1x2xf32, #tpu.memory_space<vmem>>) attributes {dimension_semantics = [#tpu.dimension_semantics<parallel>, #tpu.dimension_semantics<arbitrary>], iteration_bounds = array<i64: 2, 1>, scalar_prefetch = 0 : i64, scratch_operands = 0 : i64, tpu.core_type = #tpu.core_type<tc>, window_params = [{transform_indices = @transform_0, window_bounds = array<i64: 1, 2, 256>}, {transform_indices = @transform_1, window_bounds = array<i64: 1, 2, 256>}, {transform_indices = @transform_2, window_bounds = array<i64: 1, 2, 256>}, {transform_indices = @transform_3, window_bounds = array<i64: 1, 2, 256>}, {transform_indices = @transform_4, window_bounds = array<i64: 1, 2, 256>}, {transform_indices = @transform_5, window_bounds = array<i64: 1, 1, 2>}]} {
    %c0 = arith.constant 0 : index
    %c0_0 = arith.constant 0 : index
    %c0_1 = arith.constant 0 : index
    %0 = vector.load %arg2[%c0, %c0_0, %c0_1] : memref<1x2x256xf32, #tpu.memory_space<vmem>>, vector<1x2x256xf32>
    %c0_2 = arith.constant 0 : index
    %c0_3 = arith.constant 0 : index
    %c0_4 = arith.constant 0 : index
    %1 = vector.load %arg3[%c0_2, %c0_3, %c0_4] : memref<1x2x256xf32, #tpu.memory_space<vmem>>, vector<1x2x256xf32>
    %c0_5 = arith.constant 0 : index
    %c0_6 = arith.constant 0 : index
    %c0_7 = arith.constant 0 : index
    %2 = vector.load %arg4[%c0_5, %c0_6, %c0_7] : memref<1x2x256xf32, #tpu.memory_space<vmem>>, vector<1x2x256xf32>
    %c0_8 = arith.constant 0 : index
    %c0_9 = arith.constant 0 : index
    %c0_10 = arith.constant 0 : index
    %3 = vector.load %arg5[%c0_8, %c0_9, %c0_10] : memref<1x2x256xf32, #tpu.memory_space<vmem>>, vector<1x2x256xf32>
    %4 = arith.mulf %2, %0 : vector<1x2x256xf32>
    %5 = arith.mulf %3, %1 : vector<1x2x256xf32>
    %6 = arith.addf %4, %5 : vector<1x2x256xf32>
    %cst = arith.constant dense<0.000000e+00> : vector<1x256xf32>
    %7 = vector.multi_reduction <add>, %6, %cst [1] : vector<1x2x256xf32> to vector<1x256xf32>
    %8 = vector.shape_cast %7 : vector<1x256xf32> to vector<1x1x256xf32>
    %9 = arith.mulf %2, %1 : vector<1x2x256xf32>
    %10 = arith.mulf %3, %0 : vector<1x2x256xf32>
    %11 = arith.subf %9, %10 : vector<1x2x256xf32>
    %cst_11 = arith.constant dense<0.000000e+00> : vector<1x256xf32>
    %12 = vector.multi_reduction <add>, %11, %cst_11 [1] : vector<1x2x256xf32> to vector<1x256xf32>
    %13 = vector.shape_cast %12 : vector<1x256xf32> to vector<1x1x256xf32>
    %c0_12 = arith.constant 0 : index
    %c0_13 = arith.constant 0 : index
    %c0_14 = arith.constant 0 : index
    %14 = vector.load %arg6[%c0_12, %c0_13, %c0_14] : memref<1x2x256xf32, #tpu.memory_space<vmem>>, vector<1x1x256xf32>
    tpu.vector_store %arg6[%c0_12, %c0_13, %c0_14], %8 {strides = array<i32>} : memref<1x2x256xf32, #tpu.memory_space<vmem>>, vector<1x1x256xf32>,
    %c0_15 = arith.constant 0 : index
    %c1 = arith.constant 1 : index
    %c0_16 = arith.constant 0 : index
    %15 = vector.load %arg6[%c0_15, %c1, %c0_16] : memref<1x2x256xf32, #tpu.memory_space<vmem>>, vector<1x1x256xf32>
    tpu.vector_store %arg6[%c0_15, %c1, %c0_16], %13 {strides = array<i32>} : memref<1x2x256xf32, #tpu.memory_space<vmem>>, vector<1x1x256xf32>,
    %c0_i32 = arith.constant 0 : i32
    %16 = arith.cmpi eq, %arg1, %c0_i32 : i32
    %17 = arith.extui %16 : i1 to i32
    %c0_i32_17 = arith.constant 0 : i32
    %18 = arith.cmpi ne, %17, %c0_i32_17 : i32
    scf.if %18 {
      %cst_29 = arith.constant 0.000000e+00 : f32
      %48 = vector.broadcast %cst_29 : f32 to vector<1x1x2xf32>
      %c0_30 = arith.constant 0 : index
      %c0_31 = arith.constant 0 : index
      %c0_32 = arith.constant 0 : index
      %49 = vector.load %arg7[%c0_30, %c0_31, %c0_32] : memref<1x1x2xf32, #tpu.memory_space<vmem>>, vector<1x1x2xf32>
      tpu.vector_store %arg7[%c0_30, %c0_31, %c0_32], %48 {strides = array<i32>} : memref<1x1x2xf32, #tpu.memory_space<vmem>>, vector<1x1x2xf32>,
    } else {
    }
    %19 = vector.shape_cast %8 : vector<1x1x256xf32> to vector<1x1x1x256xf32>
    %cst_18 = arith.constant dense<0.000000e+00> : vector<1xf32>
    %20 = vector.multi_reduction <add>, %19, %cst_18 [1, 2, 3] : vector<1x1x1x256xf32> to vector<1xf32>
    %21 = vector.shape_cast %20 : vector<1xf32> to vector<1x1x1x1xf32>
    %22 = vector.extract %21[0, 0, 0, 0] : f32 from vector<1x1x1x1xf32>
    %23 = vector.shape_cast %13 : vector<1x1x256xf32> to vector<1x1x1x256xf32>
    %cst_19 = arith.constant dense<0.000000e+00> : vector<1xf32>
    %24 = vector.multi_reduction <add>, %23, %cst_19 [1, 2, 3] : vector<1x1x1x256xf32> to vector<1xf32>
    %25 = vector.shape_cast %24 : vector<1xf32> to vector<1x1x1x1xf32>
    %26 = vector.extract %25[0, 0, 0, 0] : f32 from vector<1x1x1x1xf32>
    %27 = arith.addf %22, %26 : f32
    %28 = arith.mulf %8, %8 : vector<1x1x256xf32>
    %29 = vector.shape_cast %28 : vector<1x1x256xf32> to vector<1x1x1x256xf32>
    %cst_20 = arith.constant dense<0.000000e+00> : vector<1xf32>
    %30 = vector.multi_reduction <add>, %29, %cst_20 [1, 2, 3] : vector<1x1x1x256xf32> to vector<1xf32>
    %31 = vector.shape_cast %30 : vector<1xf32> to vector<1x1x1x1xf32>
    %32 = vector.extract %31[0, 0, 0, 0] : f32 from vector<1x1x1x1xf32>
    %33 = arith.mulf %13, %13 : vector<1x1x256xf32>
    %34 = vector.shape_cast %33 : vector<1x1x256xf32> to vector<1x1x1x256xf32>
    %cst_21 = arith.constant dense<0.000000e+00> : vector<1xf32>
    %35 = vector.multi_reduction <add>, %34, %cst_21 [1, 2, 3] : vector<1x1x1x256xf32> to vector<1xf32>
    %36 = vector.shape_cast %35 : vector<1xf32> to vector<1x1x1x1xf32>
    %37 = vector.extract %36[0, 0, 0, 0] : f32 from vector<1x1x1x1xf32>
    %38 = arith.addf %32, %37 : f32
    %39 = tpu.iota {dimensions = array<i32: 2>} : vector<1x1x2xi32>
    %c0_i32_22 = arith.constant 0 : i32
    %40 = vector.broadcast %c0_i32_22 : i32 to vector<1x1x2xi32>
    %41 = arith.cmpi eq, %39, %40 : vector<1x1x2xi32>
    %c0_23 = arith.constant 0 : index
    %c0_24 = arith.constant 0 : index
    %c0_25 = arith.constant 0 : index
    %42 = vector.load %arg7[%c0_23, %c0_24, %c0_25] : memref<1x1x2xf32, #tpu.memory_space<vmem>>, vector<1x1x2xf32>
    %43 = vector.broadcast %27 : f32 to vector<1x1x2xf32>
    %44 = vector.broadcast %38 : f32 to vector<1x1x2xf32>
    %45 = arith.select %41, %43, %44 : vector<1x1x2xi1>, vector<1x1x2xf32>
    %46 = arith.addf %42, %45 : vector<1x1x2xf32>
    %c0_26 = arith.constant 0 : index
    %c0_27 = arith.constant 0 : index
    %c0_28 = arith.constant 0 : index
    %47 = vector.load %arg7[%c0_26, %c0_27, %c0_28] : memref<1x1x2xf32, #tpu.memory_space<vmem>>, vector<1x1x2xf32>
    tpu.vector_store %arg7[%c0_26, %c0_27, %c0_28], %46 {strides = array<i32>} : memref<1x1x2xf32, #tpu.memory_space<vmem>>, vector<1x1x2xf32>,
    return
  }
  func.func @transform_0(%arg0: i32, %arg1: i32) -> (i32, i32, i32) {
    %c0_i32 = arith.constant 0 : i32
    %c0_i32_0 = arith.constant 0 : i32
    return %arg0, %c0_i32, %arg1 : i32, i32, i32
  }
  func.func @transform_1(%arg0: i32, %arg1: i32) -> (i32, i32, i32) {
    %c0_i32 = arith.constant 0 : i32
    %c0_i32_0 = arith.constant 0 : i32
    return %arg0, %c0_i32, %arg1 : i32, i32, i32
  }
  func.func @transform_2(%arg0: i32, %arg1: i32) -> (i32, i32, i32) {
    %c0_i32 = arith.constant 0 : i32
    %c0_i32_0 = arith.constant 0 : i32
    return %arg0, %c0_i32, %arg1 : i32, i32, i32
  }
  func.func @transform_3(%arg0: i32, %arg1: i32) -> (i32, i32, i32) {
    %c0_i32 = arith.constant 0 : i32
    %c0_i32_0 = arith.constant 0 : i32
    return %arg0, %c0_i32, %arg1 : i32, i32, i32
  }
  func.func @transform_4(%arg0: i32, %arg1: i32) -> (i32, i32, i32) {
    %c0_i32 = arith.constant 0 : i32
    %c0_i32_0 = arith.constant 0 : i32
    return %arg0, %c0_i32, %arg1 : i32, i32, i32
  }
  func.func @transform_5(%arg0: i32, %arg1: i32) -> (i32, i32, i32) {
    %c0_i32 = arith.constant 0 : i32
    %c0_i32_0 = arith.constant 0 : i32
    %c0_i32_1 = arith.constant 0 : i32
    return %arg0, %c0_i32, %c0_i32_0 : i32, i32, i32
  }
}

module attributes {stable_mosaic.version = 11 : i64} {
  func.func @_vit_fused_kernel(%arg0: i32, %arg1: i32, %arg2: memref<2x8x64xbf16, #tpu.memory_space<vmem>>, %arg3: memref<2x1x2xf32, #tpu.memory_space<vmem>>, %arg4: memref<1x8x32xf32, #tpu.memory_space<vmem>>, %arg5: memref<64x32xbf16, #tpu.memory_space<vmem>>, %arg6: memref<1x32xf32, #tpu.memory_space<vmem>>, %arg7: memref<1x1x32xf32, #tpu.memory_space<vmem>>, %arg8: memref<1x1x32xf32, #tpu.memory_space<vmem>>, %arg9: memref<1x32x96xbf16, #tpu.memory_space<vmem>>, %arg10: memref<1x1x96xf32, #tpu.memory_space<vmem>>, %arg11: memref<1x32x32xbf16, #tpu.memory_space<vmem>>, %arg12: memref<1x1x32xf32, #tpu.memory_space<vmem>>, %arg13: memref<1x1x32xf32, #tpu.memory_space<vmem>>, %arg14: memref<1x1x32xf32, #tpu.memory_space<vmem>>, %arg15: memref<1x32x128xbf16, #tpu.memory_space<vmem>>, %arg16: memref<1x1x128xf32, #tpu.memory_space<vmem>>, %arg17: memref<1x128x32xbf16, #tpu.memory_space<vmem>>, %arg18: memref<1x1x32xf32, #tpu.memory_space<vmem>>, %arg19: memref<1x32xf32, #tpu.memory_space<vmem>>, %arg20: memref<1x32xf32, #tpu.memory_space<vmem>>, %arg21: memref<32x64xbf16, #tpu.memory_space<vmem>>, %arg22: memref<1x64xf32, #tpu.memory_space<vmem>>, %arg23: memref<2x512xf32, #tpu.memory_space<vmem>>, %arg24: memref<16x32xf32, #tpu.memory_space<vmem>>) attributes {dimension_semantics = [#tpu.dimension_semantics<parallel>, #tpu.dimension_semantics<arbitrary>], iteration_bounds = array<i64: 1, 2>, scalar_prefetch = 0 : i64, scratch_operands = 1 : i64, tpu.core_type = #tpu.core_type<tc>, window_params = [{transform_indices = @transform_0, window_bounds = array<i64: 2, 8, 64>}, {transform_indices = @transform_1, window_bounds = array<i64: 2, 1, 2>}, {pipeline_mode = #tpu.pipeline_mode<synchronous>, transform_indices = @transform_2, window_bounds = array<i64: 1, 8, 32>}, {pipeline_mode = #tpu.pipeline_mode<synchronous>, transform_indices = @transform_3, window_bounds = array<i64: 64, 32>}, {pipeline_mode = #tpu.pipeline_mode<synchronous>, transform_indices = @transform_4, window_bounds = array<i64: 1, 32>}, {transform_indices = @transform_5, window_bounds = array<i64: 1, 1, 32>}, {transform_indices = @transform_6, window_bounds = array<i64: 1, 1, 32>}, {transform_indices = @transform_7, window_bounds = array<i64: 1, 32, 96>}, {transform_indices = @transform_8, window_bounds = array<i64: 1, 1, 96>}, {transform_indices = @transform_9, window_bounds = array<i64: 1, 32, 32>}, {transform_indices = @transform_10, window_bounds = array<i64: 1, 1, 32>}, {transform_indices = @transform_11, window_bounds = array<i64: 1, 1, 32>}, {transform_indices = @transform_12, window_bounds = array<i64: 1, 1, 32>}, {transform_indices = @transform_13, window_bounds = array<i64: 1, 32, 128>}, {transform_indices = @transform_14, window_bounds = array<i64: 1, 1, 128>}, {transform_indices = @transform_15, window_bounds = array<i64: 1, 128, 32>}, {transform_indices = @transform_16, window_bounds = array<i64: 1, 1, 32>}, {pipeline_mode = #tpu.pipeline_mode<synchronous>, transform_indices = @transform_17, window_bounds = array<i64: 1, 32>}, {pipeline_mode = #tpu.pipeline_mode<synchronous>, transform_indices = @transform_18, window_bounds = array<i64: 1, 32>}, {pipeline_mode = #tpu.pipeline_mode<synchronous>, transform_indices = @transform_19, window_bounds = array<i64: 32, 64>}, {pipeline_mode = #tpu.pipeline_mode<synchronous>, transform_indices = @transform_20, window_bounds = array<i64: 1, 64>}, {transform_indices = @transform_21, window_bounds = array<i64: 2, 512>}]} {
    %c0_i32 = arith.constant 0 : i32
    %0 = arith.cmpi eq, %arg1, %c0_i32 : i32
    %1 = arith.extui %0 : i1 to i32
    %c0_i32_0 = arith.constant 0 : i32
    %2 = arith.cmpi ne, %1, %c0_i32_0 : i32
    scf.if %2 {
      %c0_62 = arith.constant 0 : index
      %c0_63 = arith.constant 0 : index
      %c0_64 = arith.constant 0 : index
      %139 = vector.load %arg2[%c0_62, %c0_63, %c0_64] : memref<2x8x64xbf16, #tpu.memory_space<vmem>>, vector<2x8x64xbf16>
      %140 = arith.extf %139 : vector<2x8x64xbf16> to vector<2x8x64xf32>
      %c0_65 = arith.constant 0 : index
      %c0_66 = arith.constant 0 : index
      %c0_67 = arith.constant 0 : index
      %141 = vector.load %arg3[%c0_65, %c0_66, %c0_67] : memref<2x1x2xf32, #tpu.memory_space<vmem>>, vector<2x1x1xf32>
      %142 = vector.broadcast %141 : vector<2x1x1xf32> to vector<2x8x64xf32>
      %143 = arith.subf %140, %142 : vector<2x8x64xf32>
      %c0_68 = arith.constant 0 : index
      %c0_69 = arith.constant 0 : index
      %c1 = arith.constant 1 : index
      %144 = vector.load %arg3[%c0_68, %c0_69, %c1] : memref<2x1x2xf32, #tpu.memory_space<vmem>>, vector<2x1x1xf32>
      %145 = vector.broadcast %144 : vector<2x1x1xf32> to vector<2x8x64xf32>
      %146 = arith.divf %143, %145 : vector<2x8x64xf32>
      %147 = vector.shape_cast %146 : vector<2x8x64xf32> to vector<16x64xf32>
      %c0_70 = arith.constant 0 : index
      %c0_71 = arith.constant 0 : index
      %148 = vector.load %arg5[%c0_70, %c0_71] : memref<64x32xbf16, #tpu.memory_space<vmem>>, vector<64x32xbf16>
      %c0_72 = arith.constant 0 : index
      %c0_73 = arith.constant 0 : index
      %149 = vector.load %arg6[%c0_72, %c0_73] : memref<1x32xf32, #tpu.memory_space<vmem>>, vector<1x32xf32>
      %150 = arith.truncf %147 : vector<16x64xf32> to vector<16x64xbf16>
      %cst_74 = arith.constant dense<0.000000e+00> : vector<16x32xf32>
      %151 = tpu.matmul %150, %148, %cst_74 {dimension_numbers = #tpu.dot_dimension_numbers<[1], [0], [0], [1], [0, 0, 1, 1], [], []>} : vector<16x64xbf16>, vector<64x32xbf16>, vector<16x32xf32> -> vector<16x32xf32>
      %152 = vector.broadcast %149 : vector<1x32xf32> to vector<16x32xf32>
      %153 = arith.addf %151, %152 : vector<16x32xf32>
      %154 = vector.shape_cast %153 : vector<16x32xf32> to vector<2x8x32xf32>
      %c0_75 = arith.constant 0 : index
      %c0_76 = arith.constant 0 : index
      %c0_77 = arith.constant 0 : index
      %155 = vector.load %arg4[%c0_75, %c0_76, %c0_77] : memref<1x8x32xf32, #tpu.memory_space<vmem>>, vector<1x8x32xf32>
      %156 = vector.shape_cast %155 : vector<1x8x32xf32> to vector<8x32xf32>
      %157 = vector.shape_cast %156 : vector<8x32xf32> to vector<1x8x32xf32>
      %158 = vector.broadcast %157 : vector<1x8x32xf32> to vector<2x8x32xf32>
      %159 = arith.addf %154, %158 : vector<2x8x32xf32>
      %160 = vector.shape_cast %159 : vector<2x8x32xf32> to vector<16x32xf32>
      %c0_78 = arith.constant 0 : index
      %c0_79 = arith.constant 0 : index
      %161 = vector.load %arg24[%c0_78, %c0_79] : memref<16x32xf32, #tpu.memory_space<vmem>>, vector<16x32xf32>
      tpu.vector_store %arg24[%c0_78, %c0_79], %160 {strides = array<i32>} : memref<16x32xf32, #tpu.memory_space<vmem>>, vector<16x32xf32>,
    } else {
    }
    %c0 = arith.constant 0 : index
    %c0_1 = arith.constant 0 : index
    %3 = vector.load %arg24[%c0, %c0_1] : memref<16x32xf32, #tpu.memory_space<vmem>>, vector<16x32xf32>
    %c0_2 = arith.constant 0 : index
    %c0_3 = arith.constant 0 : index
    %c0_4 = arith.constant 0 : index
    %4 = vector.load %arg7[%c0_2, %c0_3, %c0_4] : memref<1x1x32xf32, #tpu.memory_space<vmem>>, vector<1x1x32xf32>
    %5 = vector.shape_cast %4 : vector<1x1x32xf32> to vector<1x32xf32>
    %c0_5 = arith.constant 0 : index
    %c0_6 = arith.constant 0 : index
    %c0_7 = arith.constant 0 : index
    %6 = vector.load %arg8[%c0_5, %c0_6, %c0_7] : memref<1x1x32xf32, #tpu.memory_space<vmem>>, vector<1x1x32xf32>
    %7 = vector.shape_cast %6 : vector<1x1x32xf32> to vector<1x32xf32>
    %cst = arith.constant dense<0.000000e+00> : vector<16xf32>
    %8 = vector.multi_reduction <add>, %3, %cst [1] : vector<16x32xf32> to vector<16xf32>
    %9 = vector.shape_cast %8 : vector<16xf32> to vector<16x1xf32>
    %cst_8 = arith.constant 3.200000e+01 : f32
    %10 = vector.broadcast %cst_8 : f32 to vector<16x1xf32>
    %11 = arith.divf %9, %10 : vector<16x1xf32>
    %12 = vector.broadcast %11 : vector<16x1xf32> to vector<16x32xf32>
    %13 = arith.subf %3, %12 : vector<16x32xf32>
    %14 = arith.mulf %13, %13 : vector<16x32xf32>
    %cst_9 = arith.constant dense<0.000000e+00> : vector<16xf32>
    %15 = vector.multi_reduction <add>, %14, %cst_9 [1] : vector<16x32xf32> to vector<16xf32>
    %16 = vector.shape_cast %15 : vector<16xf32> to vector<16x1xf32>
    %cst_10 = arith.constant 3.200000e+01 : f32
    %17 = vector.broadcast %cst_10 : f32 to vector<16x1xf32>
    %18 = arith.divf %16, %17 : vector<16x1xf32>
    %19 = vector.broadcast %11 : vector<16x1xf32> to vector<16x32xf32>
    %20 = arith.subf %3, %19 : vector<16x32xf32>
    %cst_11 = arith.constant 9.99999974E-6 : f32
    %21 = vector.broadcast %cst_11 : f32 to vector<16x1xf32>
    %22 = arith.addf %18, %21 : vector<16x1xf32>
    %23 = math.rsqrt %22 : vector<16x1xf32>
    %24 = vector.broadcast %23 : vector<16x1xf32> to vector<16x32xf32>
    %25 = arith.mulf %20, %24 : vector<16x32xf32>
    %26 = vector.broadcast %5 : vector<1x32xf32> to vector<16x32xf32>
    %27 = arith.mulf %25, %26 : vector<16x32xf32>
    %28 = vector.broadcast %7 : vector<1x32xf32> to vector<16x32xf32>
    %29 = arith.addf %27, %28 : vector<16x32xf32>
    %c0_12 = arith.constant 0 : index
    %c0_13 = arith.constant 0 : index
    %c0_14 = arith.constant 0 : index
    %30 = vector.load %arg9[%c0_12, %c0_13, %c0_14] : memref<1x32x96xbf16, #tpu.memory_space<vmem>>, vector<1x32x96xbf16>
    %31 = vector.shape_cast %30 : vector<1x32x96xbf16> to vector<32x96xbf16>
    %c0_15 = arith.constant 0 : index
    %c0_16 = arith.constant 0 : index
    %c0_17 = arith.constant 0 : index
    %32 = vector.load %arg10[%c0_15, %c0_16, %c0_17] : memref<1x1x96xf32, #tpu.memory_space<vmem>>, vector<1x1x96xf32>
    %33 = vector.shape_cast %32 : vector<1x1x96xf32> to vector<1x96xf32>
    %34 = arith.truncf %29 : vector<16x32xf32> to vector<16x32xbf16>
    %cst_18 = arith.constant dense<0.000000e+00> : vector<16x96xf32>
    %35 = tpu.matmul %34, %31, %cst_18 {dimension_numbers = #tpu.dot_dimension_numbers<[1], [0], [0], [1], [0, 0, 1, 1], [], []>} : vector<16x32xbf16>, vector<32x96xbf16>, vector<16x96xf32> -> vector<16x96xf32>
    %36 = vector.broadcast %33 : vector<1x96xf32> to vector<16x96xf32>
    %37 = arith.addf %35, %36 : vector<16x96xf32>
    %38 = vector.shape_cast %37 : vector<16x96xf32> to vector<2x8x96xf32>
    %39 = vector.extract_strided_slice %38 {offsets = [0, 0, 0], sizes = [2, 8, 8], strides = [1, 1, 1]} : vector<2x8x96xf32> to vector<2x8x8xf32>
    %40 = vector.extract_strided_slice %38 {offsets = [0, 0, 8], sizes = [2, 8, 8], strides = [1, 1, 1]} : vector<2x8x96xf32> to vector<2x8x8xf32>
    %41 = vector.extract_strided_slice %38 {offsets = [0, 0, 16], sizes = [2, 8, 8], strides = [1, 1, 1]} : vector<2x8x96xf32> to vector<2x8x8xf32>
    %42 = vector.extract_strided_slice %38 {offsets = [0, 0, 24], sizes = [2, 8, 8], strides = [1, 1, 1]} : vector<2x8x96xf32> to vector<2x8x8xf32>
    %43 = vector.extract_strided_slice %38 {offsets = [0, 0, 32], sizes = [2, 8, 8], strides = [1, 1, 1]} : vector<2x8x96xf32> to vector<2x8x8xf32>
    %44 = vector.extract_strided_slice %38 {offsets = [0, 0, 40], sizes = [2, 8, 8], strides = [1, 1, 1]} : vector<2x8x96xf32> to vector<2x8x8xf32>
    %45 = vector.extract_strided_slice %38 {offsets = [0, 0, 48], sizes = [2, 8, 8], strides = [1, 1, 1]} : vector<2x8x96xf32> to vector<2x8x8xf32>
    %46 = vector.extract_strided_slice %38 {offsets = [0, 0, 56], sizes = [2, 8, 8], strides = [1, 1, 1]} : vector<2x8x96xf32> to vector<2x8x8xf32>
    %47 = vector.extract_strided_slice %38 {offsets = [0, 0, 64], sizes = [2, 8, 8], strides = [1, 1, 1]} : vector<2x8x96xf32> to vector<2x8x8xf32>
    %48 = vector.extract_strided_slice %38 {offsets = [0, 0, 72], sizes = [2, 8, 8], strides = [1, 1, 1]} : vector<2x8x96xf32> to vector<2x8x8xf32>
    %49 = vector.extract_strided_slice %38 {offsets = [0, 0, 80], sizes = [2, 8, 8], strides = [1, 1, 1]} : vector<2x8x96xf32> to vector<2x8x8xf32>
    %50 = vector.extract_strided_slice %38 {offsets = [0, 0, 88], sizes = [2, 8, 8], strides = [1, 1, 1]} : vector<2x8x96xf32> to vector<2x8x8xf32>
    %51 = tpu.concatenate %39, %40, %41, %42, %43, %44, %45, %46, %47, %48, %49, %50 in 0 : vector<2x8x8xf32>, vector<2x8x8xf32>, vector<2x8x8xf32>, vector<2x8x8xf32>, vector<2x8x8xf32>, vector<2x8x8xf32>, vector<2x8x8xf32>, vector<2x8x8xf32>, vector<2x8x8xf32>, vector<2x8x8xf32>, vector<2x8x8xf32>, vector<2x8x8xf32> -> vector<24x8x8xf32>
    %52 = vector.extract_strided_slice %51 {offsets = [0, 0, 0], sizes = [8, 8, 8], strides = [1, 1, 1]} : vector<24x8x8xf32> to vector<8x8x8xf32>
    %cst_19 = arith.constant 0.353553385 : f32
    %53 = vector.broadcast %cst_19 : f32 to vector<8x8x8xf32>
    %54 = arith.mulf %52, %53 : vector<8x8x8xf32>
    %55 = vector.extract_strided_slice %51 {offsets = [8, 0, 0], sizes = [8, 8, 8], strides = [1, 1, 1]} : vector<24x8x8xf32> to vector<8x8x8xf32>
    %56 = vector.extract_strided_slice %51 {offsets = [16, 0, 0], sizes = [8, 8, 8], strides = [1, 1, 1]} : vector<24x8x8xf32> to vector<8x8x8xf32>
    "tpu.trace_start"() <{level = 10 : i32, message = "bqd,bkd->bqk"}> : () -> ()
    %cst_20 = arith.constant dense<0.000000e+00> : vector<8x8x8xf32>
    %57 = tpu.matmul %54, %55, %cst_20 {dimension_numbers = #tpu.dot_dimension_numbers<[2], [2], [1], [1], [0, 0, 0, 1, 1, 1], [0], [0]>} : vector<8x8x8xf32>, vector<8x8x8xf32>, vector<8x8x8xf32> -> vector<8x8x8xf32>
    "tpu.trace_stop"() : () -> ()
    %cst_21 = arith.constant dense<0xFF800000> : vector<8x8xf32>
    %58 = vector.multi_reduction <maximumf>, %57, %cst_21 [2] : vector<8x8x8xf32> to vector<8x8xf32>
    %59 = vector.shape_cast %58 : vector<8x8xf32> to vector<8x8x1xf32>
    %60 = vector.broadcast %59 : vector<8x8x1xf32> to vector<8x8x8xf32>
    %61 = arith.subf %57, %60 : vector<8x8x8xf32>
    %62 = math.exp %61 : vector<8x8x8xf32>
    %cst_22 = arith.constant dense<0.000000e+00> : vector<8x8xf32>
    %63 = vector.multi_reduction <add>, %62, %cst_22 [2] : vector<8x8x8xf32> to vector<8x8xf32>
    %64 = vector.shape_cast %63 : vector<8x8xf32> to vector<8x8x1xf32>
    %65 = tpu.reciprocal %64 {approx = true} : vector<8x8x1xf32> -> vector<8x8x1xf32>
    %66 = vector.broadcast %65 : vector<8x8x1xf32> to vector<8x8x8xf32>
    %67 = arith.mulf %62, %66 : vector<8x8x8xf32>
    "tpu.trace_start"() <{level = 10 : i32, message = "bqk,bkd->bqd"}> : () -> ()
    %cst_23 = arith.constant dense<0.000000e+00> : vector<8x8x8xf32>
    %68 = tpu.matmul %67, %56, %cst_23 {dimension_numbers = #tpu.dot_dimension_numbers<[2], [1], [1], [2], [0, 0, 0, 1, 1, 2], [0], [0]>} : vector<8x8x8xf32>, vector<8x8x8xf32>, vector<8x8x8xf32> -> vector<8x8x8xf32>
    "tpu.trace_stop"() : () -> ()
    %69 = vector.extract_strided_slice %68 {offsets = [0, 0, 0], sizes = [2, 8, 8], strides = [1, 1, 1]} : vector<8x8x8xf32> to vector<2x8x8xf32>
    %70 = vector.extract_strided_slice %68 {offsets = [2, 0, 0], sizes = [2, 8, 8], strides = [1, 1, 1]} : vector<8x8x8xf32> to vector<2x8x8xf32>
    %71 = vector.extract_strided_slice %68 {offsets = [4, 0, 0], sizes = [2, 8, 8], strides = [1, 1, 1]} : vector<8x8x8xf32> to vector<2x8x8xf32>
    %72 = vector.extract_strided_slice %68 {offsets = [6, 0, 0], sizes = [2, 8, 8], strides = [1, 1, 1]} : vector<8x8x8xf32> to vector<2x8x8xf32>
    %73 = tpu.concatenate %69, %70, %71, %72 in 2 : vector<2x8x8xf32>, vector<2x8x8xf32>, vector<2x8x8xf32>, vector<2x8x8xf32> -> vector<2x8x32xf32>
    %74 = vector.shape_cast %73 : vector<2x8x32xf32> to vector<16x32xf32>
    %c0_24 = arith.constant 0 : index
    %c0_25 = arith.constant 0 : index
    %c0_26 = arith.constant 0 : index
    %75 = vector.load %arg11[%c0_24, %c0_25, %c0_26] : memref<1x32x32xbf16, #tpu.memory_space<vmem>>, vector<1x32x32xbf16>
    %76 = vector.shape_cast %75 : vector<1x32x32xbf16> to vector<32x32xbf16>
    %c0_27 = arith.constant 0 : index
    %c0_28 = arith.constant 0 : index
    %c0_29 = arith.constant 0 : index
    %77 = vector.load %arg12[%c0_27, %c0_28, %c0_29] : memref<1x1x32xf32, #tpu.memory_space<vmem>>, vector<1x1x32xf32>
    %78 = vector.shape_cast %77 : vector<1x1x32xf32> to vector<1x32xf32>
    %79 = arith.truncf %74 : vector<16x32xf32> to vector<16x32xbf16>
    %cst_30 = arith.constant dense<0.000000e+00> : vector<16x32xf32>
    %80 = tpu.matmul %79, %76, %cst_30 {dimension_numbers = #tpu.dot_dimension_numbers<[1], [0], [0], [1], [0, 0, 1, 1], [], []>} : vector<16x32xbf16>, vector<32x32xbf16>, vector<16x32xf32> -> vector<16x32xf32>
    %81 = vector.broadcast %78 : vector<1x32xf32> to vector<16x32xf32>
    %82 = arith.addf %80, %81 : vector<16x32xf32>
    %83 = arith.addf %3, %82 : vector<16x32xf32>
    %c0_31 = arith.constant 0 : index
    %c0_32 = arith.constant 0 : index
    %c0_33 = arith.constant 0 : index
    %84 = vector.load %arg13[%c0_31, %c0_32, %c0_33] : memref<1x1x32xf32, #tpu.memory_space<vmem>>, vector<1x1x32xf32>
    %85 = vector.shape_cast %84 : vector<1x1x32xf32> to vector<1x32xf32>
    %c0_34 = arith.constant 0 : index
    %c0_35 = arith.constant 0 : index
    %c0_36 = arith.constant 0 : index
    %86 = vector.load %arg14[%c0_34, %c0_35, %c0_36] : memref<1x1x32xf32, #tpu.memory_space<vmem>>, vector<1x1x32xf32>
    %87 = vector.shape_cast %86 : vector<1x1x32xf32> to vector<1x32xf32>
    %cst_37 = arith.constant dense<0.000000e+00> : vector<16xf32>
    %88 = vector.multi_reduction <add>, %83, %cst_37 [1] : vector<16x32xf32> to vector<16xf32>
    %89 = vector.shape_cast %88 : vector<16xf32> to vector<16x1xf32>
    %cst_38 = arith.constant 3.200000e+01 : f32
    %90 = vector.broadcast %cst_38 : f32 to vector<16x1xf32>
    %91 = arith.divf %89, %90 : vector<16x1xf32>
    %92 = vector.broadcast %91 : vector<16x1xf32> to vector<16x32xf32>
    %93 = arith.subf %83, %92 : vector<16x32xf32>
    %94 = arith.mulf %93, %93 : vector<16x32xf32>
    %cst_39 = arith.constant dense<0.000000e+00> : vector<16xf32>
    %95 = vector.multi_reduction <add>, %94, %cst_39 [1] : vector<16x32xf32> to vector<16xf32>
    %96 = vector.shape_cast %95 : vector<16xf32> to vector<16x1xf32>
    %cst_40 = arith.constant 3.200000e+01 : f32
    %97 = vector.broadcast %cst_40 : f32 to vector<16x1xf32>
    %98 = arith.divf %96, %97 : vector<16x1xf32>
    %99 = vector.broadcast %91 : vector<16x1xf32> to vector<16x32xf32>
    %100 = arith.subf %83, %99 : vector<16x32xf32>
    %cst_41 = arith.constant 9.99999974E-6 : f32
    %101 = vector.broadcast %cst_41 : f32 to vector<16x1xf32>
    %102 = arith.addf %98, %101 : vector<16x1xf32>
    %103 = math.rsqrt %102 : vector<16x1xf32>
    %104 = vector.broadcast %103 : vector<16x1xf32> to vector<16x32xf32>
    %105 = arith.mulf %100, %104 : vector<16x32xf32>
    %106 = vector.broadcast %85 : vector<1x32xf32> to vector<16x32xf32>
    %107 = arith.mulf %105, %106 : vector<16x32xf32>
    %108 = vector.broadcast %87 : vector<1x32xf32> to vector<16x32xf32>
    %109 = arith.addf %107, %108 : vector<16x32xf32>
    %c0_42 = arith.constant 0 : index
    %c0_43 = arith.constant 0 : index
    %c0_44 = arith.constant 0 : index
    %110 = vector.load %arg15[%c0_42, %c0_43, %c0_44] : memref<1x32x128xbf16, #tpu.memory_space<vmem>>, vector<1x32x128xbf16>
    %111 = vector.shape_cast %110 : vector<1x32x128xbf16> to vector<32x128xbf16>
    %c0_45 = arith.constant 0 : index
    %c0_46 = arith.constant 0 : index
    %c0_47 = arith.constant 0 : index
    %112 = vector.load %arg16[%c0_45, %c0_46, %c0_47] : memref<1x1x128xf32, #tpu.memory_space<vmem>>, vector<1x1x128xf32>
    %113 = vector.shape_cast %112 : vector<1x1x128xf32> to vector<1x128xf32>
    %114 = arith.truncf %109 : vector<16x32xf32> to vector<16x32xbf16>
    %cst_48 = arith.constant dense<0.000000e+00> : vector<16x128xf32>
    %115 = tpu.matmul %114, %111, %cst_48 {dimension_numbers = #tpu.dot_dimension_numbers<[1], [0], [0], [1], [0, 0, 1, 1], [], []>} : vector<16x32xbf16>, vector<32x128xbf16>, vector<16x128xf32> -> vector<16x128xf32>
    %116 = vector.broadcast %113 : vector<1x128xf32> to vector<16x128xf32>
    %117 = arith.addf %115, %116 : vector<16x128xf32>
    %cst_49 = arith.constant 5.000000e-01 : f32
    %118 = vector.broadcast %cst_49 : f32 to vector<16x128xf32>
    %119 = arith.mulf %118, %117 : vector<16x128xf32>
    %cst_50 = arith.constant 0.707106769 : f32
    %120 = vector.broadcast %cst_50 : f32 to vector<16x128xf32>
    %121 = arith.mulf %117, %120 : vector<16x128xf32>
    %122 = math.erf %121 : vector<16x128xf32>
    %cst_51 = arith.constant 1.000000e+00 : f32
    %123 = vector.broadcast %cst_51 : f32 to vector<16x128xf32>
    %124 = arith.addf %123, %122 : vector<16x128xf32>
    %125 = arith.mulf %119, %124 : vector<16x128xf32>
    %c0_52 = arith.constant 0 : index
    %c0_53 = arith.constant 0 : index
    %c0_54 = arith.constant 0 : index
    %126 = vector.load %arg17[%c0_52, %c0_53, %c0_54] : memref<1x128x32xbf16, #tpu.memory_space<vmem>>, vector<1x128x32xbf16>
    %127 = vector.shape_cast %126 : vector<1x128x32xbf16> to vector<128x32xbf16>
    %c0_55 = arith.constant 0 : index
    %c0_56 = arith.constant 0 : index
    %c0_57 = arith.constant 0 : index
    %128 = vector.load %arg18[%c0_55, %c0_56, %c0_57] : memref<1x1x32xf32, #tpu.memory_space<vmem>>, vector<1x1x32xf32>
    %129 = vector.shape_cast %128 : vector<1x1x32xf32> to vector<1x32xf32>
    %130 = arith.truncf %125 : vector<16x128xf32> to vector<16x128xbf16>
    %cst_58 = arith.constant dense<0.000000e+00> : vector<16x32xf32>
    %131 = tpu.matmul %130, %127, %cst_58 {dimension_numbers = #tpu.dot_dimension_numbers<[1], [0], [0], [1], [0, 0, 1, 1], [], []>} : vector<16x128xbf16>, vector<128x32xbf16>, vector<16x32xf32> -> vector<16x32xf32>
    %132 = vector.broadcast %129 : vector<1x32xf32> to vector<16x32xf32>
    %133 = arith.addf %131, %132 : vector<16x32xf32>
    %134 = arith.addf %83, %133 : vector<16x32xf32>
    %c0_59 = arith.constant 0 : index
    %c0_60 = arith.constant 0 : index
    %135 = vector.load %arg24[%c0_59, %c0_60] : memref<16x32xf32, #tpu.memory_space<vmem>>, vector<16x32xf32>
    tpu.vector_store %arg24[%c0_59, %c0_60], %134 {strides = array<i32>} : memref<16x32xf32, #tpu.memory_space<vmem>>, vector<16x32xf32>,
    %c1_i32 = arith.constant 1 : i32
    %136 = arith.cmpi eq, %arg1, %c1_i32 : i32
    %137 = arith.extui %136 : i1 to i32
    %c0_i32_61 = arith.constant 0 : i32
    %138 = arith.cmpi ne, %137, %c0_i32_61 : i32
    scf.if %138 {
      %c0_62 = arith.constant 0 : index
      %c0_63 = arith.constant 0 : index
      %139 = vector.load %arg19[%c0_62, %c0_63] : memref<1x32xf32, #tpu.memory_space<vmem>>, vector<1x32xf32>
      %c0_64 = arith.constant 0 : index
      %c0_65 = arith.constant 0 : index
      %140 = vector.load %arg20[%c0_64, %c0_65] : memref<1x32xf32, #tpu.memory_space<vmem>>, vector<1x32xf32>
      %cst_66 = arith.constant dense<0.000000e+00> : vector<16xf32>
      %141 = vector.multi_reduction <add>, %134, %cst_66 [1] : vector<16x32xf32> to vector<16xf32>
      %142 = vector.shape_cast %141 : vector<16xf32> to vector<16x1xf32>
      %cst_67 = arith.constant 3.200000e+01 : f32
      %143 = vector.broadcast %cst_67 : f32 to vector<16x1xf32>
      %144 = arith.divf %142, %143 : vector<16x1xf32>
      %145 = vector.broadcast %144 : vector<16x1xf32> to vector<16x32xf32>
      %146 = arith.subf %134, %145 : vector<16x32xf32>
      %147 = arith.mulf %146, %146 : vector<16x32xf32>
      %cst_68 = arith.constant dense<0.000000e+00> : vector<16xf32>
      %148 = vector.multi_reduction <add>, %147, %cst_68 [1] : vector<16x32xf32> to vector<16xf32>
      %149 = vector.shape_cast %148 : vector<16xf32> to vector<16x1xf32>
      %cst_69 = arith.constant 3.200000e+01 : f32
      %150 = vector.broadcast %cst_69 : f32 to vector<16x1xf32>
      %151 = arith.divf %149, %150 : vector<16x1xf32>
      %152 = vector.broadcast %144 : vector<16x1xf32> to vector<16x32xf32>
      %153 = arith.subf %134, %152 : vector<16x32xf32>
      %cst_70 = arith.constant 9.99999974E-6 : f32
      %154 = vector.broadcast %cst_70 : f32 to vector<16x1xf32>
      %155 = arith.addf %151, %154 : vector<16x1xf32>
      %156 = math.rsqrt %155 : vector<16x1xf32>
      %157 = vector.broadcast %156 : vector<16x1xf32> to vector<16x32xf32>
      %158 = arith.mulf %153, %157 : vector<16x32xf32>
      %159 = vector.broadcast %139 : vector<1x32xf32> to vector<16x32xf32>
      %160 = arith.mulf %158, %159 : vector<16x32xf32>
      %161 = vector.broadcast %140 : vector<1x32xf32> to vector<16x32xf32>
      %162 = arith.addf %160, %161 : vector<16x32xf32>
      %c0_71 = arith.constant 0 : index
      %c0_72 = arith.constant 0 : index
      %163 = vector.load %arg21[%c0_71, %c0_72] : memref<32x64xbf16, #tpu.memory_space<vmem>>, vector<32x64xbf16>
      %c0_73 = arith.constant 0 : index
      %c0_74 = arith.constant 0 : index
      %164 = vector.load %arg22[%c0_73, %c0_74] : memref<1x64xf32, #tpu.memory_space<vmem>>, vector<1x64xf32>
      %165 = arith.truncf %162 : vector<16x32xf32> to vector<16x32xbf16>
      %cst_75 = arith.constant dense<0.000000e+00> : vector<16x64xf32>
      %166 = tpu.matmul %165, %163, %cst_75 {dimension_numbers = #tpu.dot_dimension_numbers<[1], [0], [0], [1], [0, 0, 1, 1], [], []>} : vector<16x32xbf16>, vector<32x64xbf16>, vector<16x64xf32> -> vector<16x64xf32>
      %167 = vector.broadcast %164 : vector<1x64xf32> to vector<16x64xf32>
      %168 = arith.addf %166, %167 : vector<16x64xf32>
      %169 = vector.shape_cast %168 : vector<16x64xf32> to vector<2x8x64xf32>
      %c0_76 = arith.constant 0 : index
      %c0_77 = arith.constant 0 : index
      %c1 = arith.constant 1 : index
      %170 = vector.load %arg3[%c0_76, %c0_77, %c1] : memref<2x1x2xf32, #tpu.memory_space<vmem>>, vector<2x1x1xf32>
      %171 = vector.broadcast %170 : vector<2x1x1xf32> to vector<2x8x64xf32>
      %172 = arith.mulf %169, %171 : vector<2x8x64xf32>
      %c0_78 = arith.constant 0 : index
      %c0_79 = arith.constant 0 : index
      %c0_80 = arith.constant 0 : index
      %173 = vector.load %arg3[%c0_78, %c0_79, %c0_80] : memref<2x1x2xf32, #tpu.memory_space<vmem>>, vector<2x1x1xf32>
      %174 = vector.broadcast %173 : vector<2x1x1xf32> to vector<2x8x64xf32>
      %175 = arith.addf %172, %174 : vector<2x8x64xf32>
      %176 = vector.extract_strided_slice %175 {offsets = [0, 0, 0], sizes = [2, 1, 64], strides = [1, 1, 1]} : vector<2x8x64xf32> to vector<2x1x64xf32>
      %177 = vector.shape_cast %176 : vector<2x1x64xf32> to vector<2x64xf32>
      %178 = vector.extract_strided_slice %175 {offsets = [0, 1, 0], sizes = [2, 1, 64], strides = [1, 1, 1]} : vector<2x8x64xf32> to vector<2x1x64xf32>
      %179 = vector.shape_cast %178 : vector<2x1x64xf32> to vector<2x64xf32>
      %180 = vector.extract_strided_slice %175 {offsets = [0, 2, 0], sizes = [2, 1, 64], strides = [1, 1, 1]} : vector<2x8x64xf32> to vector<2x1x64xf32>
      %181 = vector.shape_cast %180 : vector<2x1x64xf32> to vector<2x64xf32>
      %182 = vector.extract_strided_slice %175 {offsets = [0, 3, 0], sizes = [2, 1, 64], strides = [1, 1, 1]} : vector<2x8x64xf32> to vector<2x1x64xf32>
      %183 = vector.shape_cast %182 : vector<2x1x64xf32> to vector<2x64xf32>
      %184 = vector.extract_strided_slice %175 {offsets = [0, 4, 0], sizes = [2, 1, 64], strides = [1, 1, 1]} : vector<2x8x64xf32> to vector<2x1x64xf32>
      %185 = vector.shape_cast %184 : vector<2x1x64xf32> to vector<2x64xf32>
      %186 = vector.extract_strided_slice %175 {offsets = [0, 5, 0], sizes = [2, 1, 64], strides = [1, 1, 1]} : vector<2x8x64xf32> to vector<2x1x64xf32>
      %187 = vector.shape_cast %186 : vector<2x1x64xf32> to vector<2x64xf32>
      %188 = vector.extract_strided_slice %175 {offsets = [0, 6, 0], sizes = [2, 1, 64], strides = [1, 1, 1]} : vector<2x8x64xf32> to vector<2x1x64xf32>
      %189 = vector.shape_cast %188 : vector<2x1x64xf32> to vector<2x64xf32>
      %190 = vector.extract_strided_slice %175 {offsets = [0, 7, 0], sizes = [2, 1, 64], strides = [1, 1, 1]} : vector<2x8x64xf32> to vector<2x1x64xf32>
      %191 = vector.shape_cast %190 : vector<2x1x64xf32> to vector<2x64xf32>
      %192 = tpu.concatenate %177, %179, %181, %183, %185, %187, %189, %191 in 1 : vector<2x64xf32>, vector<2x64xf32>, vector<2x64xf32>, vector<2x64xf32>, vector<2x64xf32>, vector<2x64xf32>, vector<2x64xf32>, vector<2x64xf32> -> vector<2x512xf32>
      %c0_81 = arith.constant 0 : index
      %c0_82 = arith.constant 0 : index
      %193 = vector.load %arg23[%c0_81, %c0_82] : memref<2x512xf32, #tpu.memory_space<vmem>>, vector<2x512xf32>
      tpu.vector_store %arg23[%c0_81, %c0_82], %192 {strides = array<i32>} : memref<2x512xf32, #tpu.memory_space<vmem>>, vector<2x512xf32>,
    } else {
    }
    return
  }
  func.func @transform_0(%arg0: i32, %arg1: i32) -> (i32, i32, i32) {
    %c0_i32 = arith.constant 0 : i32
    %c0_i32_0 = arith.constant 0 : i32
    %c0_i32_1 = arith.constant 0 : i32
    return %arg0, %c0_i32, %c0_i32_0 : i32, i32, i32
  }
  func.func @transform_1(%arg0: i32, %arg1: i32) -> (i32, i32, i32) {
    %c0_i32 = arith.constant 0 : i32
    %c0_i32_0 = arith.constant 0 : i32
    %c0_i32_1 = arith.constant 0 : i32
    return %arg0, %c0_i32, %c0_i32_0 : i32, i32, i32
  }
  func.func @transform_2(%arg0: i32, %arg1: i32) -> (i32, i32, i32) {
    %c0_i32 = arith.constant 0 : i32
    %c0_i32_0 = arith.constant 0 : i32
    %c0_i32_1 = arith.constant 0 : i32
    %c0_i32_2 = arith.constant 0 : i32
    return %c0_i32, %c0_i32_0, %c0_i32_1 : i32, i32, i32
  }
  func.func @transform_3(%arg0: i32, %arg1: i32) -> (i32, i32) {
    %c0_i32 = arith.constant 0 : i32
    %c0_i32_0 = arith.constant 0 : i32
    %c0_i32_1 = arith.constant 0 : i32
    return %c0_i32, %c0_i32_0 : i32, i32
  }
  func.func @transform_4(%arg0: i32, %arg1: i32) -> (i32, i32) {
    %c0_i32 = arith.constant 0 : i32
    %c0_i32_0 = arith.constant 0 : i32
    %c0_i32_1 = arith.constant 0 : i32
    return %c0_i32, %c0_i32_0 : i32, i32
  }
  func.func @transform_5(%arg0: i32, %arg1: i32) -> (i32, i32, i32) {
    %c0_i32 = arith.constant 0 : i32
    %c0_i32_0 = arith.constant 0 : i32
    %c0_i32_1 = arith.constant 0 : i32
    return %arg1, %c0_i32, %c0_i32_0 : i32, i32, i32
  }
  func.func @transform_6(%arg0: i32, %arg1: i32) -> (i32, i32, i32) {
    %c0_i32 = arith.constant 0 : i32
    %c0_i32_0 = arith.constant 0 : i32
    %c0_i32_1 = arith.constant 0 : i32
    return %arg1, %c0_i32, %c0_i32_0 : i32, i32, i32
  }
  func.func @transform_7(%arg0: i32, %arg1: i32) -> (i32, i32, i32) {
    %c0_i32 = arith.constant 0 : i32
    %c0_i32_0 = arith.constant 0 : i32
    %c0_i32_1 = arith.constant 0 : i32
    return %arg1, %c0_i32, %c0_i32_0 : i32, i32, i32
  }
  func.func @transform_8(%arg0: i32, %arg1: i32) -> (i32, i32, i32) {
    %c0_i32 = arith.constant 0 : i32
    %c0_i32_0 = arith.constant 0 : i32
    %c0_i32_1 = arith.constant 0 : i32
    return %arg1, %c0_i32, %c0_i32_0 : i32, i32, i32
  }
  func.func @transform_9(%arg0: i32, %arg1: i32) -> (i32, i32, i32) {
    %c0_i32 = arith.constant 0 : i32
    %c0_i32_0 = arith.constant 0 : i32
    %c0_i32_1 = arith.constant 0 : i32
    return %arg1, %c0_i32, %c0_i32_0 : i32, i32, i32
  }
  func.func @transform_10(%arg0: i32, %arg1: i32) -> (i32, i32, i32) {
    %c0_i32 = arith.constant 0 : i32
    %c0_i32_0 = arith.constant 0 : i32
    %c0_i32_1 = arith.constant 0 : i32
    return %arg1, %c0_i32, %c0_i32_0 : i32, i32, i32
  }
  func.func @transform_11(%arg0: i32, %arg1: i32) -> (i32, i32, i32) {
    %c0_i32 = arith.constant 0 : i32
    %c0_i32_0 = arith.constant 0 : i32
    %c0_i32_1 = arith.constant 0 : i32
    return %arg1, %c0_i32, %c0_i32_0 : i32, i32, i32
  }
  func.func @transform_12(%arg0: i32, %arg1: i32) -> (i32, i32, i32) {
    %c0_i32 = arith.constant 0 : i32
    %c0_i32_0 = arith.constant 0 : i32
    %c0_i32_1 = arith.constant 0 : i32
    return %arg1, %c0_i32, %c0_i32_0 : i32, i32, i32
  }
  func.func @transform_13(%arg0: i32, %arg1: i32) -> (i32, i32, i32) {
    %c0_i32 = arith.constant 0 : i32
    %c0_i32_0 = arith.constant 0 : i32
    %c0_i32_1 = arith.constant 0 : i32
    return %arg1, %c0_i32, %c0_i32_0 : i32, i32, i32
  }
  func.func @transform_14(%arg0: i32, %arg1: i32) -> (i32, i32, i32) {
    %c0_i32 = arith.constant 0 : i32
    %c0_i32_0 = arith.constant 0 : i32
    %c0_i32_1 = arith.constant 0 : i32
    return %arg1, %c0_i32, %c0_i32_0 : i32, i32, i32
  }
  func.func @transform_15(%arg0: i32, %arg1: i32) -> (i32, i32, i32) {
    %c0_i32 = arith.constant 0 : i32
    %c0_i32_0 = arith.constant 0 : i32
    %c0_i32_1 = arith.constant 0 : i32
    return %arg1, %c0_i32, %c0_i32_0 : i32, i32, i32
  }
  func.func @transform_16(%arg0: i32, %arg1: i32) -> (i32, i32, i32) {
    %c0_i32 = arith.constant 0 : i32
    %c0_i32_0 = arith.constant 0 : i32
    %c0_i32_1 = arith.constant 0 : i32
    return %arg1, %c0_i32, %c0_i32_0 : i32, i32, i32
  }
  func.func @transform_17(%arg0: i32, %arg1: i32) -> (i32, i32) {
    %c0_i32 = arith.constant 0 : i32
    %c0_i32_0 = arith.constant 0 : i32
    %c0_i32_1 = arith.constant 0 : i32
    return %c0_i32, %c0_i32_0 : i32, i32
  }
  func.func @transform_18(%arg0: i32, %arg1: i32) -> (i32, i32) {
    %c0_i32 = arith.constant 0 : i32
    %c0_i32_0 = arith.constant 0 : i32
    %c0_i32_1 = arith.constant 0 : i32
    return %c0_i32, %c0_i32_0 : i32, i32
  }
  func.func @transform_19(%arg0: i32, %arg1: i32) -> (i32, i32) {
    %c0_i32 = arith.constant 0 : i32
    %c0_i32_0 = arith.constant 0 : i32
    %c0_i32_1 = arith.constant 0 : i32
    return %c0_i32, %c0_i32_0 : i32, i32
  }
  func.func @transform_20(%arg0: i32, %arg1: i32) -> (i32, i32) {
    %c0_i32 = arith.constant 0 : i32
    %c0_i32_0 = arith.constant 0 : i32
    %c0_i32_1 = arith.constant 0 : i32
    return %c0_i32, %c0_i32_0 : i32, i32
  }
  func.func @transform_21(%arg0: i32, %arg1: i32) -> (i32, i32) {
    %c0_i32 = arith.constant 0 : i32
    %c0_i32_0 = arith.constant 0 : i32
    return %arg0, %c0_i32 : i32, i32
  }
}

</mosaic_0001>

<llo_original>
// kernel: image_domain_mri_vit3d_forward.2
$region0: #{image_domain_mri_vit3d_forward.2}
  #allocation0 [shape = 'u32[]', space=smem, size = 0x4, offset = 0x4, fixed_abs, tag = 'smem constant byte address 0x4 - core index']
  #allocation1 [shape = 'u32[72,128]{1,0:T(1,128)}', space=vmem, size = 0x9000, scoped, tag = 'internal scratch']
  %s0 = inlined_call_operand.vmem [shape: f32[2,2,256], index: 0, kind: input, shape index: {}]
  %s1 = inlined_call_operand.vmem [shape: f32[2,2,256], index: 1, kind: input, shape index: {}]
  %s2 = inlined_call_operand.vmem [shape: f32[2,2,256], index: 2, kind: input, shape index: {}]
  %s3 = inlined_call_operand.vmem [shape: f32[2,2,256], index: 3, kind: input, shape index: {}]
  %s4 = inlined_call_operand.vmem [shape: f32[2,2,256], index: 4, kind: output, shape index: {0}]
  %s5 = inlined_call_operand.vmem [shape: f32[2,1,2], index: 5, kind: output, shape index: {1}]
  %6 = xla_tuple %s4, %s5
  %s7 = sld [smem:[#allocation0]]
  $region61: #{image_domain_mri_vit3d_forward.2} parent=0
    _
  %s9 = ssub.s32 1, %s7
  %s10 = scalar_select 0, %s9, %s7
  loop: start=0, step=1, limit=4
  $region2: #{image_domain_mri_vit3d_forward.2} parent=0 // loop_pre_header
    _
  $region3: #{image_domain_mri_vit3d_forward.2} parent=0 // loop_header
    %s12 = sphi 0, %s16
    %p13 = scmp.ge.s32.totalorder %s12, 4
    %s19 = sphi 0, %s31
    %s20 = sphi 0, %s27
    %s21 = sphi 0, %s19
    %s22 = sphi 0, %s20
    %s23 = sphi 0, %s21
    %s24 = sphi 0, %s22
    %s36 = sphi 0, %s38
    %s39 = sphi 0, %s36
    %s40 = sphi 0, %s39
    %s56 = sphi 0, %s40
    %s64 = sphi 0, %s66
    %s67 = sphi 0, %s64
    %s68 = sphi 0, %s67
    %s84 = sphi 0, %s68
    %s92 = sphi 0, %s94
    %s95 = sphi 0, %s92
    %s96 = sphi 0, %s95
    %s112 = sphi 0, %s96
    %s120 = sphi 0, %s122
    %s123 = sphi 0, %s120
    %s124 = sphi 0, %s123
    %s140 = sphi 0, %s124
    %s148 = sphi 0, %s150
    %s151 = sphi 0, %s148
    %s152 = sphi 0, %s151
    %s168 = sphi 0, %s152
    %s174 = sphi 0, %s176
    %s177 = sphi 0, %s174
    %s178 = sphi 0, %s177
    %s194 = sphi 0, %s178
  $region4: #{image_domain_mri_vit3d_forward.2} parent=0 // loop_header_branch
    %15 = sbr.rel (%p13) target = $region8
  $region5: #{image_domain_mri_vit3d_forward.2} parent=0 // loop_body
    %s17 = ssub.s32 %s12, 1
    %s18 = ssub.s32 %s12, 2
    %s25 = sadd.s32 1, %s20
    %p26 = scmp.ge.s32.totalorder %s25, 1
    %s27 = scalar_select %p26, 0, %s25
    %s28 = sadd.s32 1, %s19
    %s29 = scalar_select %p26, %s28, %s19
    %p30 = scmp.ge.s32.totalorder %s29, 2
    %s31 = scalar_select %p30, 0, %s29
    %s32 = ssub.s32 %s19, %s31
    %s33 = ssub.s32 %s20, %s27
    %s34 = sor.u32 %s32, %s33
    %p35 = scmp.eq.s32.totalorder %s34, 0
    %s37 = sadd.s32 %s36, 1
    %s38 = scalar_select %p35, %s36, %s37
    %p41 = pneg %p35
    %p42 = scmp.eq.s32.totalorder %s12, 1
    %p43 = por %p41, %p42
    %p44 = scmp.ne.s32.totalorder %s36, %s39
    %p45 = scmp.eq.s32.totalorder %s12, 0
    %p46 = por %p44, %p45
    %p47 = scmp.ne.s32.totalorder %s36, %s39
    %p48 = scmp.eq.s32.totalorder %s17, 1
    %p49 = por %p47, %p48
    %p50 = scmp.ne.s32.totalorder %s39, %s40
    %p51 = scmp.eq.s32.totalorder %s17, 0
    %p52 = por %p50, %p51
    %p53 = scmp.ne.s32.totalorder %s39, %s40
    %p54 = scmp.eq.s32.totalorder %s18, 1
    %p55 = por %p53, %p54
    %p57 = scmp.ne.s32.totalorder %s40, %s56
    %p58 = scmp.eq.s32.totalorder %s18, 0
    %p59 = por %p57, %p58
    %s60 = ssub.s32 %s19, %s31
    %s61 = ssub.s32 %s20, %s27
    %s62 = sor.u32 %s60, %s61
    %p63 = scmp.eq.s32.totalorder %s62, 0
    %s65 = sadd.s32 %s64, 1
    %s66 = scalar_select %p63, %s64, %s65
    %p69 = pneg %p63
    %p70 = scmp.eq.s32.totalorder %s12, 1
    %p71 = por %p69, %p70
    %p72 = scmp.ne.s32.totalorder %s64, %s67
    %p73 = scmp.eq.s32.totalorder %s12, 0
    %p74 = por %p72, %p73
    %p75 = scmp.ne.s32.totalorder %s64, %s67
    %p76 = scmp.eq.s32.totalorder %s17, 1
    %p77 = por %p75, %p76
    %p78 = scmp.ne.s32.totalorder %s67, %s68
    %p79 = scmp.eq.s32.totalorder %s17, 0
    %p80 = por %p78, %p79
    %p81 = scmp.ne.s32.totalorder %s67, %s68
    %p82 = scmp.eq.s32.totalorder %s18, 1
    %p83 = por %p81, %p82
    %p85 = scmp.ne.s32.totalorder %s68, %s84
    %p86 = scmp.eq.s32.totalorder %s18, 0
    %p87 = por %p85, %p86
    %s88 = ssub.s32 %s19, %s31
    %s89 = ssub.s32 %s20, %s27
    %s90 = sor.u32 %s88, %s89
    %p91 = scmp.eq.s32.totalorder %s90, 0
    %s93 = sadd.s32 %s92, 1
    %s94 = scalar_select %p91, %s92, %s93
    %p97 = pneg %p91
    %p98 = scmp.eq.s32.totalorder %s12, 1
    %p99 = por %p97, %p98
    %p100 = scmp.ne.s32.totalorder %s92, %s95
    %p101 = scmp.eq.s32.totalorder %s12, 0
    %p102 = por %p100, %p101
    %p103 = scmp.ne.s32.totalorder %s92, %s95
    %p104 = scmp.eq.s32.totalorder %s17, 1
    %p105 = por %p103, %p104
    %p106 = scmp.ne.s32.totalorder %s95, %s96
    %p107 = scmp.eq.s32.totalorder %s17, 0
    %p108 = por %p106, %p107
    %p109 = scmp.ne.s32.totalorder %s95, %s96
    %p110 = scmp.eq.s32.totalorder %s18, 1
    %p111 = por %p109, %p110
    %p113 = scmp.ne.s32.totalorder %s96, %s112
    %p114 = scmp.eq.s32.totalorder %s18, 0
    %p115 = por %p113, %p114
    %s116 = ssub.s32 %s19, %s31
    %s117 = ssub.s32 %s20, %s27
    %s118 = sor.u32 %s116, %s117
    %p119 = scmp.eq.s32.totalorder %s118, 0
    %s121 = sadd.s32 %s120, 1
    %s122 = scalar_select %p119, %s120, %s121
    %p125 = pneg %p119
    %p126 = scmp.eq.s32.totalorder %s12, 1
    %p127 = por %p125, %p126
    %p128 = scmp.ne.s32.totalorder %s120, %s123
    %p129 = scmp.eq.s32.totalorder %s12, 0
    %p130 = por %p128, %p129
    %p131 = scmp.ne.s32.totalorder %s120, %s123
    %p132 = scmp.eq.s32.totalorder %s17, 1
    %p133 = por %p131, %p132
    %p134 = scmp.ne.s32.totalorder %s123, %s124
    %p135 = scmp.eq.s32.totalorder %s17, 0
    %p136 = por %p134, %p135
    %p137 = scmp.ne.s32.totalorder %s123, %s124
    %p138 = scmp.eq.s32.totalorder %s18, 1
    %p139 = por %p137, %p138
    %p141 = scmp.ne.s32.totalorder %s124, %s140
    %p142 = scmp.eq.s32.totalorder %s18, 0
    %p143 = por %p141, %p142
    %s144 = ssub.s32 %s19, %s31
    %s145 = ssub.s32 %s20, %s27
    %s146 = sor.u32 %s144, %s145
    %p147 = scmp.eq.s32.totalorder %s146, 0
    %s149 = sadd.s32 %s148, 1
    %s150 = scalar_select %p147, %s148, %s149
    %p153 = pneg %p147
    %p154 = scmp.eq.s32.totalorder %s12, 1
    %p155 = por %p153, %p154
    %p156 = scmp.ne.s32.totalorder %s148, %s151
    %p157 = scmp.eq.s32.totalorder %s12, 0
    %p158 = por %p156, %p157
    %p159 = scmp.ne.s32.totalorder %s148, %s151
    %p160 = scmp.eq.s32.totalorder %s17, 1
    %p161 = por %p159, %p160
    %p162 = scmp.ne.s32.totalorder %s151, %s152
    %p163 = scmp.eq.s32.totalorder %s17, 0
    %p164 = por %p162, %p163
    %p165 = scmp.ne.s32.totalorder %s151, %s152
    %p166 = scmp.eq.s32.totalorder %s18, 1
    %p167 = por %p165, %p166
    %p169 = scmp.ne.s32.totalorder %s152, %s168
    %p170 = scmp.eq.s32.totalorder %s18, 0
    %p171 = por %p169, %p170
    %s172 = ssub.s32 %s19, %s31
    %p173 = scmp.eq.s32.totalorder %s172, 0
    %s175 = sadd.s32 %s174, 1
    %s176 = scalar_select %p173, %s174, %s175
    %p179 = pneg %p173
    %p180 = scmp.eq.s32.totalorder %s12, 1
    %p181 = por %p179, %p180
    %p182 = scmp.ne.s32.totalorder %s174, %s177
    %p183 = scmp.eq.s32.totalorder %s12, 0
    %p184 = por %p182, %p183
    %p185 = scmp.ne.s32.totalorder %s174, %s177
    %p186 = scmp.eq.s32.totalorder %s17, 1
    %p187 = por %p185, %p186
    %p188 = scmp.ne.s32.totalorder %s177, %s178
    %p189 = scmp.eq.s32.totalorder %s17, 0
    %p190 = por %p188, %p189
    %p191 = scmp.ne.s32.totalorder %s177, %s178
    %p192 = scmp.eq.s32.totalorder %s18, 1
    %p193 = por %p191, %p192
    %p195 = scmp.ne.s32.totalorder %s178, %s194
    %p196 = scmp.eq.s32.totalorder %s18, 0
    %p197 = por %p195, %p196
    %p198 = scmp.le.s32.totalorder 1, %s12
    %p199 = scmp.lt.s32.totalorder %s12, 3
    %p200 = pnand %p198, %p199
    %p201 = pneg %p200
    // Predicated region
    $region9: #{image_domain_mri_vit3d_forward.2} parent=5 // pred_check
      _
    $region10: #{image_domain_mri_vit3d_forward.2} parent=5 // pred_check_branch
      %203 = sbr.rel (%p200) target = $region12
    $region11: #{image_domain_mri_vit3d_forward.2} parent=5 // pred_region
      %s204 = ssub.s32 %s12, 1
    $region12: #{image_domain_mri_vit3d_forward.2} parent=5 // pred_fallthru
      _
    %p205 = scmp.lt.s32.totalorder %s12, 2
    // Predicated region
    $region13: #{image_domain_mri_vit3d_forward.2} parent=5 // pred_check
      %p206 = pneg %p205
    $region14: #{image_domain_mri_vit3d_forward.2} parent=5 // pred_check_branch
      %208 = sbr.rel (%p206) target = $region16
    $region15: #{image_domain_mri_vit3d_forward.2} parent=5 // pred_region
      // Predicated region
      $region17: #{image_domain_mri_vit3d_forward.2} parent=15 // pred_check
        %p209 = pneg %p46
      $region18: #{image_domain_mri_vit3d_forward.2} parent=15 // pred_check_branch
        %211 = sbr.rel (%p209) target = $region20
      $region19: #{image_domain_mri_vit3d_forward.2} parent=15 // pred_region
        %s212 = smul.u32 2, %s20
        %p213 = scmp.lt.s32.totalorder %s19, 1
        %s214 = scalar_select %p213, %s19, 1
        %p215 = scmp.lt.s32.totalorder %s212, 1
        %s216 = scalar_select %p215, %s212, 1
        %s217 = smul.addr %s214, 2
        %s218 = sadd.s32 %s216, %s217
        %s219 = smul.addr %s218, 2
        %s220 = scalar_lea.vmem %s0, %s219
        %s221 = smul.u32 2, %s20
      $region20: #{image_domain_mri_vit3d_forward.2} parent=15 // pred_fallthru
        _
      // Predicated region
      $region21: #{image_domain_mri_vit3d_forward.2} parent=15 // pred_check
        %p222 = pneg %p74
      $region22: #{image_domain_mri_vit3d_forward.2} parent=15 // pred_check_branch
        %224 = sbr.rel (%p222) target = $region24
      $region23: #{image_domain_mri_vit3d_forward.2} parent=15 // pred_region
        %s225 = smul.u32 2, %s20
        %p226 = scmp.lt.s32.totalorder %s19, 1
        %s227 = scalar_select %p226, %s19, 1
        %p228 = scmp.lt.s32.totalorder %s225, 1
        %s229 = scalar_select %p228, %s225, 1
        %s230 = smul.addr %s227, 2
        %s231 = sadd.s32 %s229, %s230
        %s232 = smul.addr %s231, 2
        %s233 = scalar_lea.vmem %s1, %s232
        %s234 = smul.u32 2, %s20
      $region24: #{image_domain_mri_vit3d_forward.2} parent=15 // pred_fallthru
        _
      // Predicated region
      $region25: #{image_domain_mri_vit3d_forward.2} parent=15 // pred_check
        %p235 = pneg %p102
      $region26: #{image_domain_mri_vit3d_forward.2} parent=15 // pred_check_branch
        %237 = sbr.rel (%p235) target = $region28
      $region27: #{image_domain_mri_vit3d_forward.2} parent=15 // pred_region
        %s238 = smul.u32 2, %s20
        %p239 = scmp.lt.s32.totalorder %s19, 1
        %s240 = scalar_select %p239, %s19, 1
        %p241 = scmp.lt.s32.totalorder %s238, 1
        %s242 = scalar_select %p241, %s238, 1
        %s243 = smul.addr %s240, 2
        %s244 = sadd.s32 %s242, %s243
        %s245 = smul.addr %s244, 2
        %s246 = scalar_lea.vmem %s2, %s245
        %s247 = smul.u32 2, %s20
      $region28: #{image_domain_mri_vit3d_forward.2} parent=15 // pred_fallthru
        _
      // Predicated region
      $region29: #{image_domain_mri_vit3d_forward.2} parent=15 // pred_check
        %p248 = pneg %p130
      $region30: #{image_domain_mri_vit3d_forward.2} parent=15 // pred_check_branch
        %250 = sbr.rel (%p248) target = $region32
      $region31: #{image_domain_mri_vit3d_forward.2} parent=15 // pred_region
        %s251 = smul.u32 2, %s20
        %p252 = scmp.lt.s32.totalorder %s19, 1
        %s253 = scalar_select %p252, %s19, 1
        %p254 = scmp.lt.s32.totalorder %s251, 1
        %s255 = scalar_select %p254, %s251, 1
        %s256 = smul.addr %s253, 2
        %s257 = sadd.s32 %s255, %s256
        %s258 = smul.addr %s257, 2
        %s259 = scalar_lea.vmem %s3, %s258
        %s260 = smul.u32 2, %s20
      $region32: #{image_domain_mri_vit3d_forward.2} parent=15 // pred_fallthru
        _
    $region16: #{image_domain_mri_vit3d_forward.2} parent=5 // pred_fallthru
      _
    %p261 = scmp.le.s32.totalorder 1, %s12
    %p262 = scmp.lt.s32.totalorder %s12, 3
    %p263 = pnand %p261, %p262
    %p264 = pneg %p263
    // Predicated region
    $region33: #{image_domain_mri_vit3d_forward.2} parent=5 // pred_check
      _
    $region34: #{image_domain_mri_vit3d_forward.2} parent=5 // pred_check_branch
      %266 = sbr.rel (%p263) target = $region36
    $region35: #{image_domain_mri_vit3d_forward.2} parent=5 // pred_region
      %s267 = ssub.s32 %s12, 1
      %s268 = smul.u32 2, %s22
      %p269 = scmp.lt.s32.totalorder %s21, 1
      %s270 = scalar_select %p269, %s21, 1
      %p271 = scmp.lt.s32.totalorder %s268, 1
      %s272 = scalar_select %p271, %s268, 1
      %s273 = smul.addr %s270, 2
      %s274 = sadd.s32 %s272, %s273
      %s275 = smul.addr %s274, 2
      %s276 = scalar_lea.vmem %s0, %s275
      %p277 = pneg %p52
      %p278 = pneg %p49
      %s279 = smul.u32 2, %s22
      %p280 = scmp.lt.s32.totalorder %s21, 1
      %s281 = scalar_select %p280, %s21, 1
      %p282 = scmp.lt.s32.totalorder %s279, 1
      %s283 = scalar_select %p282, %s279, 1
      %s284 = smul.addr %s281, 2
      %s285 = sadd.s32 %s283, %s284
      %s286 = smul.addr %s285, 2
      %s287 = scalar_lea.vmem %s1, %s286
      %p288 = pneg %p80
      %p289 = pneg %p77
      %s290 = smul.u32 2, %s22
      %p291 = scmp.lt.s32.totalorder %s21, 1
      %s292 = scalar_select %p291, %s21, 1
      %p293 = scmp.lt.s32.totalorder %s290, 1
      %s294 = scalar_select %p293, %s290, 1
      %s295 = smul.addr %s292, 2
      %s296 = sadd.s32 %s294, %s295
      %s297 = smul.addr %s296, 2
      %s298 = scalar_lea.vmem %s2, %s297
      %p299 = pneg %p108
      %p300 = pneg %p105
      %s301 = smul.u32 2, %s22
      %p302 = scmp.lt.s32.totalorder %s21, 1
      %s303 = scalar_select %p302, %s21, 1
      %p304 = scmp.lt.s32.totalorder %s301, 1
      %s305 = scalar_select %p304, %s301, 1
      %s306 = smul.addr %s303, 2
      %s307 = sadd.s32 %s305, %s306
      %s308 = smul.addr %s307, 2
      %s309 = scalar_lea.vmem %s3, %s308
      %p310 = pneg %p136
      %p311 = pneg %p133
      %p312 = pneg %p164
      %p313 = pneg %p161
      %s314 = smul.u32 2, %s22
      %p315 = scmp.lt.s32.totalorder %s21, 1
      %s316 = scalar_select %p315, %s21, 1
      %p317 = scmp.lt.s32.totalorder %s314, 1
      %s318 = scalar_select %p317, %s314, 1
      %s319 = smul.addr %s316, 2
      %s320 = sadd.s32 %s318, %s319
      %s321 = smul.addr %s320, 2
      %s322 = scalar_lea.vmem %s4, %s321
      %p323 = pneg %p190
      %p324 = pneg %p187
      %p325 = scmp.lt.s32.totalorder %s21, 1
      %s326 = scalar_select %p325, %s21, 1
      %s327 = scalar_lea.vmem %s5, %s326
      %s328 = smul.u32 2, %s22
      %p329 = scmp.lt.s32.totalorder %s21, 1
      %s330 = scalar_select %p329, %s21, 1
      %p331 = scmp.lt.s32.totalorder %s328, 1
      %s332 = scalar_select %p331, %s328, 1
      %s333 = smul.addr %s330, 2
      %s334 = sadd.s32 %s332, %s333
      %s335 = smul.addr %s334, 2
      %s336 = scalar_lea.vmem %s0, %s335
      %s337 = smul.u32 2, %s22
      %s338 = smul.u32 2, %s22
      %p339 = scmp.lt.s32.totalorder %s21, 1
      %s340 = scalar_select %p339, %s21, 1
      %p341 = scmp.lt.s32.totalorder %s338, 1
      %s342 = scalar_select %p341, %s338, 1
      %s343 = smul.addr %s340, 2
      %s344 = sadd.s32 %s342, %s343
      %s345 = smul.addr %s344, 2
      %s346 = scalar_lea.vmem %s1, %s345
      %s347 = smul.u32 2, %s22
      %s348 = smul.u32 2, %s22
      %p349 = scmp.lt.s32.totalorder %s21, 1
      %s350 = scalar_select %p349, %s21, 1
      %p351 = scmp.lt.s32.totalorder %s348, 1
      %s352 = scalar_select %p351, %s348, 1
      %s353 = smul.addr %s350, 2
      %s354 = sadd.s32 %s352, %s353
      %s355 = smul.addr %s354, 2
      %s356 = scalar_lea.vmem %s2, %s355
      %s357 = smul.u32 2, %s22
      %s358 = smul.u32 2, %s22
      %p359 = scmp.lt.s32.totalorder %s21, 1
      %s360 = scalar_select %p359, %s21, 1
      %p361 = scmp.lt.s32.totalorder %s358, 1
      %s362 = scalar_select %p361, %s358, 1
      %s363 = smul.addr %s360, 2
      %s364 = sadd.s32 %s362, %s363
      %s365 = smul.addr %s364, 2
      %s366 = scalar_lea.vmem %s3, %s365
      %s367 = smul.u32 2, %s22
      %s368 = smul.u32 2, %s22
      %p369 = scmp.lt.s32.totalorder %s21, 1
      %s370 = scalar_select %p369, %s21, 1
      %p371 = scmp.lt.s32.totalorder %s368, 1
      %s372 = scalar_select %p371, %s368, 1
      %s373 = smul.addr %s370, 2
      %s374 = sadd.s32 %s372, %s373
      %s375 = smul.addr %s374, 2
      %s376 = scalar_lea.vmem %s4, %s375
      %s377 = smul.u32 2, %s22
      %p378 = scmp.lt.s32.totalorder %s21, 1
      %s379 = scalar_select %p378, %s21, 1
      %s380 = scalar_lea.vmem %s5, %s379
      %v381 = vld [vmem:[%s336] sm:$0xf]
      %v382 = vld [vmem:[%s346] sm:$0xf]
      %v383 = vld [vmem:[%s356] sm:$0xf]
      %v384 = vld [vmem:[%s366] sm:$0xf]
      %v385 = vmul.f32 %v383, %v381
      %v386 = vmul.f32 %v384, %v382
      %v387 = vadd.f32 %v385, %v386
      %389 = vst [vmem:[#allocation1] ss:$4 sm:$0xff] %v387
      %v390 = vld.sshfl [vmem:[#allocation1] sm:$0xff pattern:$0x73625140]
      %v391 = vld.sshfl [vmem:[#allocation1 + $0x8] sm:$0xff pattern:$0x73625140]
      %vm394 = vcmask 1041408
      %v395 = vsel %vm394, %v390, 0.0
      %v396 = vrot.slane %v395, 4
      %v397 = vadd.f32 %v395, %v396
      %v398 = vrot.slane %v397, 2
      %v399 = vadd.f32 %v397, %v398
      %v400 = vrot.slane %v399, 1
      %v401 = vadd.f32 %v399, %v400
      %v402 = vsel %vm394, %v391, 0.0
      %v403 = vrot.slane %v402, 4
      %v404 = vadd.f32 %v402, %v403
      %v405 = vrot.slane %v404, 2
      %v406 = vadd.f32 %v404, %v405
      %v407 = vrot.slane %v406, 1
      %v408 = vadd.f32 %v406, %v407
      %v409 = vmul.f32 %v383, %v382
      %v410 = vmul.f32 %v384, %v381
      %v411 = vsub.f32 %v409, %v410
      %413 = vst [vmem:[#allocation1] ss:$4 sm:$0xff] %v411
      %v414 = vld.sshfl [vmem:[#allocation1] sm:$0xff pattern:$0x73625140]
      %v415 = vld.sshfl [vmem:[#allocation1 + $0x8] sm:$0xff pattern:$0x73625140]
      %v418 = vsel %vm394, %v414, 0.0
      %v419 = vrot.slane %v418, 4
      %v420 = vadd.f32 %v418, %v419
      %v421 = vrot.slane %v420, 2
      %v422 = vadd.f32 %v420, %v421
      %v423 = vrot.slane %v422, 1
      %v424 = vadd.f32 %v422, %v423
      %v425 = vsel %vm394, %v415, 0.0
      %v426 = vrot.slane %v425, 4
      %v427 = vadd.f32 %v425, %v426
      %v428 = vrot.slane %v427, 2
      %v429 = vadd.f32 %v427, %v428
      %v430 = vrot.slane %v429, 1
      %v431 = vadd.f32 %v429, %v430
      %v434 = vrot.slane %v408, 7
      %vm435 = vcmask 1040384
      %v436 = vsel %vm435, %v401, %v434
      %v438 = vlaneseq
      %vm439 = vcmp.ge.s32.totalorder %v438, 0
      %vm440 = vcmp.lt.s32.totalorder %v438, 256
      %vm441 = vmand %vm439, %vm440
      %442 = vst.msk [vmem:[%s376] ss:$2 sm:$0x3] %vm441, %v436
      %v445 = vrot.slane %v431, 7
      %v446 = vsel %vm435, %v424, %v445
      %s448 = scalar_lea.vmem %s376, 1
      %449 = vst.msk [vmem:[%s448] ss:$2 sm:$0x3] %vm441, %v446
      %p450 = scmp.eq.s32.totalorder %s22, 0
      // Predicated region
      $region37: #{image_domain_mri_vit3d_forward.2} parent=35 // pred_check
        %p451 = pneg %p450
      $region38: #{image_domain_mri_vit3d_forward.2} parent=35 // pred_check_branch
        %453 = sbr.rel (%p451) target = $region40
      $region39: #{image_domain_mri_vit3d_forward.2} parent=35 // pred_region
        %vm454 = vcmask 8192
        %455 = vst.msk [vmem:[%s380] sm:$0x1] %vm454, 0.0
      $region40: #{image_domain_mri_vit3d_forward.2} parent=35 // pred_fallthru
        _
      %v456 = vsel %vm435, %v401, 0.0
      %v457 = vsel %vm435, %v408, 0.0
      %v458 = vadd.f32 %v456, %v457
      %459 = vadd.xlane.f32.xlu0 %v458
      %v460 = vpop.xlane.xlu0 %459
      %v461 = vrot.slane %v460, 4
      %v462 = vadd.f32 %v460, %v461
      %v463 = vrot.slane %v462, 2
      %v464 = vadd.f32 %v462, %v463
      %v465 = vrot.slane %v464, 1
      %v466 = vadd.f32 %v464, %v465
      %s467 = vtos %v466
      %v468 = vsel %vm435, %v424, 0.0
      %v469 = vsel %vm435, %v431, 0.0
      %v470 = vadd.f32 %v468, %v469
      %471 = vadd.xlane.f32.xlu0 %v470
      %v472 = vpop.xlane.xlu0 %471
      %v473 = vrot.slane %v472, 4
      %v474 = vadd.f32 %v472, %v473
      %v475 = vrot.slane %v474, 2
      %v476 = vadd.f32 %v474, %v475
      %v477 = vrot.slane %v476, 1
      %v478 = vadd.f32 %v476, %v477
      %s479 = vtos %v478
      %s480 = sadd.f32 %s467, %s479
      %v481 = vmul.f32 %v401, %v401
      %v482 = vmul.f32 %v408, %v408
      %v483 = vsel %vm435, %v481, 0.0
      %v484 = vsel %vm435, %v482, 0.0
      %v485 = vadd.f32 %v483, %v484
      %486 = vadd.xlane.f32.xlu0 %v485
      %v487 = vpop.xlane.xlu0 %486
      %v488 = vrot.slane %v487, 4
      %v489 = vadd.f32 %v487, %v488
      %v490 = vrot.slane %v489, 2
      %v491 = vadd.f32 %v489, %v490
      %v492 = vrot.slane %v491, 1
      %v493 = vadd.f32 %v491, %v492
      %s494 = vtos %v493
      %v495 = vmul.f32 %v424, %v424
      %v496 = vmul.f32 %v431, %v431
      %v497 = vsel %vm435, %v495, 0.0
      %v498 = vsel %vm435, %v496, 0.0
      %v499 = vadd.f32 %v497, %v498
      %500 = vadd.xlane.f32.xlu0 %v499
      %v501 = vpop.xlane.xlu0 %500
      %v502 = vrot.slane %v501, 4
      %v503 = vadd.f32 %v501, %v502
      %v504 = vrot.slane %v503, 2
      %v505 = vadd.f32 %v503, %v504
      %v506 = vrot.slane %v505, 1
      %v507 = vadd.f32 %v505, %v506
      %s508 = vtos %v507
      %s509 = sadd.f32 %s494, %s508
      %v510 = vlaneseq
      %v511 = vand.u32 %v510, 127
      %vm512 = vcmp.eq.s32.totalorder %v511, 0
      %v513 = vld [vmem:[%s380] sm:$0x1]
      %v514 = vstv %s480
      %v515 = vstv %s509
      %v516 = vsel %vm512, %v514, %v515
      %v517 = vadd.f32 %v513, %v516
      %vm518 = vcmask 8192
      %519 = vst.msk [vmem:[%s380] sm:$0x1] %vm518, %v517
      %s520 = smul.u32 2, %s22
      %p521 = scmp.lt.s32.totalorder %s21, 1
      %s522 = scalar_select %p521, %s21, 1
      %p523 = scmp.lt.s32.totalorder %s520, 1
      %s524 = scalar_select %p523, %s520, 1
      %s525 = smul.addr %s522, 2
      %s526 = sadd.s32 %s524, %s525
      %s527 = smul.addr %s526, 2
      %s528 = scalar_lea.vmem %s4, %s527
      %p529 = scmp.lt.s32.totalorder %s21, 1
      %s530 = scalar_select %p529, %s21, 1
      %s531 = scalar_lea.vmem %s5, %s530
      // Predicated region
      $region41: #{image_domain_mri_vit3d_forward.2} parent=35 // pred_check
        %p532 = pneg %p161
      $region42: #{image_domain_mri_vit3d_forward.2} parent=35 // pred_check_branch
        %534 = sbr.rel (%p532) target = $region44
      $region43: #{image_domain_mri_vit3d_forward.2} parent=35 // pred_region
        %s535 = smul.u32 2, %s22
      $region44: #{image_domain_mri_vit3d_forward.2} parent=35 // pred_fallthru
        _
      // Predicated region
      $region45: #{image_domain_mri_vit3d_forward.2} parent=35 // pred_check
        %p536 = pneg %p187
      $region46: #{image_domain_mri_vit3d_forward.2} parent=35 // pred_check_branch
        %538 = sbr.rel (%p536) target = $region48
      $region47: #{image_domain_mri_vit3d_forward.2} parent=35 // pred_region
        _
      $region48: #{image_domain_mri_vit3d_forward.2} parent=35 // pred_fallthru
        _
    $region36: #{image_domain_mri_vit3d_forward.2} parent=5 // pred_fallthru
      _
    %p539 = scmp.le.s32.totalorder 2, %s12
    // Predicated region
    $region49: #{image_domain_mri_vit3d_forward.2} parent=5 // pred_check
      %p540 = pneg %p539
    $region50: #{image_domain_mri_vit3d_forward.2} parent=5 // pred_check_branch
      %542 = sbr.rel (%p540) target = $region52
    $region51: #{image_domain_mri_vit3d_forward.2} parent=5 // pred_region
      %s543 = ssub.s32 %s12, 2
      // Predicated region
      $region53: #{image_domain_mri_vit3d_forward.2} parent=51 // pred_check
        %p544 = pneg %p167
      $region54: #{image_domain_mri_vit3d_forward.2} parent=51 // pred_check_branch
        %546 = sbr.rel (%p544) target = $region56
      $region55: #{image_domain_mri_vit3d_forward.2} parent=51 // pred_region
        %s547 = smul.u32 2, %s24
        %p548 = scmp.lt.s32.totalorder %s23, 1
        %s549 = scalar_select %p548, %s23, 1
        %p550 = scmp.lt.s32.totalorder %s547, 1
        %s551 = scalar_select %p550, %s547, 1
        %s552 = smul.addr %s549, 2
        %s553 = sadd.s32 %s551, %s552
        %s554 = smul.addr %s553, 2
        %s555 = scalar_lea.vmem %s4, %s554
      $region56: #{image_domain_mri_vit3d_forward.2} parent=51 // pred_fallthru
        _
      // Predicated region
      $region57: #{image_domain_mri_vit3d_forward.2} parent=51 // pred_check
        %p556 = pneg %p193
      $region58: #{image_domain_mri_vit3d_forward.2} parent=51 // pred_check_branch
        %558 = sbr.rel (%p556) target = $region60
      $region59: #{image_domain_mri_vit3d_forward.2} parent=51 // pred_region
        %p559 = scmp.lt.s32.totalorder %s23, 1
        %s560 = scalar_select %p559, %s23, 1
        %s561 = scalar_lea.vmem %s5, %s560
      $region60: #{image_domain_mri_vit3d_forward.2} parent=51 // pred_fallthru
        _
    $region52: #{image_domain_mri_vit3d_forward.2} parent=5 // pred_fallthru
      _
  $region6: #{image_domain_mri_vit3d_forward.2} parent=0 // loop_footer
    %s16 = sadd.s32 1, %s12
  $region7: #{image_domain_mri_vit3d_forward.2} parent=0 // loop_footer_branch
    %11 = sbr.rel target = $region3
  $region8: #{image_domain_mri_vit3d_forward.2} parent=0 // loop_exit
    _

// kernel: image_domain_mri_vit3d_forward.3
$region0: #{image_domain_mri_vit3d_forward.3}
  #allocation0 [shape = 'u32[]', space=smem, size = 0x4, offset = 0x4, fixed_abs, tag = 'smem constant byte address 0x4 - core index']
  #allocation1 [shape = 'u32[72,128]{1,0:T(1,128)}', space=vmem, size = 0x9000, scoped, tag = 'internal scratch']
  #allocation2 [shape = 'f32[16,32]{1,0:T(8,128)}', space=vmem, size = 0x2000, scoped, tag = 'scratch operand']
  %s0 = inlined_call_operand.vmem [shape: bf16[2,8,64], index: 0, kind: input, shape index: {}]
  %s1 = inlined_call_operand.vmem [shape: f32[2,1,2], index: 1, kind: input, shape index: {}]
  %s2 = inlined_call_operand.vmem [shape: f32[1,8,32], index: 2, kind: input, shape index: {}]
  %s3 = inlined_call_operand.vmem [shape: bf16[64,32], index: 3, kind: input, shape index: {}]
  %s4 = inlined_call_operand.vmem [shape: f32[1,32], index: 4, kind: input, shape index: {}]
  %s5 = inlined_call_operand.vmem [shape: f32[2,1,32], index: 5, kind: input, shape index: {}]
  %s6 = inlined_call_operand.vmem [shape: f32[2,1,32], index: 6, kind: input, shape index: {}]
  %s7 = inlined_call_operand.vmem [shape: bf16[2,32,96], index: 7, kind: input, shape index: {}]
  %s8 = inlined_call_operand.vmem [shape: f32[2,1,96], index: 8, kind: input, shape index: {}]
  %s9 = inlined_call_operand.vmem [shape: bf16[2,32,32], index: 9, kind: input, shape index: {}]
  %s10 = inlined_call_operand.vmem [shape: f32[2,1,32], index: 10, kind: input, shape index: {}]
  %s11 = inlined_call_operand.vmem [shape: f32[2,1,32], index: 11, kind: input, shape index: {}]
  %s12 = inlined_call_operand.vmem [shape: f32[2,1,32], index: 12, kind: input, shape index: {}]
  %s13 = inlined_call_operand.vmem [shape: bf16[2,32,128], index: 13, kind: input, shape index: {}]
  %s14 = inlined_call_operand.vmem [shape: f32[2,1,128], index: 14, kind: input, shape index: {}]
  %s15 = inlined_call_operand.vmem [shape: bf16[2,128,32], index: 15, kind: input, shape index: {}]
  %s16 = inlined_call_operand.vmem [shape: f32[2,1,32], index: 16, kind: input, shape index: {}]
  %s17 = inlined_call_operand.vmem [shape: f32[1,32], index: 17, kind: input, shape index: {}]
  %s18 = inlined_call_operand.vmem [shape: f32[1,32], index: 18, kind: input, shape index: {}]
  %s19 = inlined_call_operand.vmem [shape: bf16[32,64], index: 19, kind: input, shape index: {}]
  %s20 = inlined_call_operand.vmem [shape: f32[1,64], index: 20, kind: input, shape index: {}]
  %s21 = inlined_call_operand.vmem [shape: f32[2,512], index: 21, kind: output, shape index: {}]
  %s22 = sld [smem:[#allocation0]]
  $region125: #{image_domain_mri_vit3d_forward.3} parent=0
    _
  %s24 = ssub.s32 1, %s22
  %s25 = scalar_select 0, %s24, %s22
  loop: start=0, step=1, limit=4
  $region2: #{image_domain_mri_vit3d_forward.3} parent=0 // loop_pre_header
    _
  $region3: #{image_domain_mri_vit3d_forward.3} parent=0 // loop_header
    %s27 = sphi 0, %s31
    %p28 = scmp.ge.s32.totalorder %s27, 4
    %s34 = sphi 0, %s46
    %s35 = sphi 0, %s42
    %s36 = sphi 0, %s34
    %s37 = sphi 0, %s35
    %s38 = sphi 0, %s36
    %s39 = sphi 0, %s37
    %s49 = sphi 0, %s51
    %s52 = sphi 0, %s49
    %s53 = sphi 0, %s52
    %s69 = sphi 0, %s53
    %s75 = sphi 0, %s77
    %s78 = sphi 0, %s75
    %s79 = sphi 0, %s78
    %s95 = sphi 0, %s79
    %s99 = sphi 0, %s99
    %s101 = sphi 0, %s99
    %s102 = sphi 0, %s101
    %s116 = sphi 0, %s102
    %s120 = sphi 0, %s120
    %s122 = sphi 0, %s120
    %s123 = sphi 0, %s122
    %s137 = sphi 0, %s123
    %s141 = sphi 0, %s141
    %s143 = sphi 0, %s141
    %s144 = sphi 0, %s143
    %s158 = sphi 0, %s144
    %s164 = sphi 0, %s166
    %s167 = sphi 0, %s164
    %s168 = sphi 0, %s167
    %s184 = sphi 0, %s168
    %s190 = sphi 0, %s192
    %s193 = sphi 0, %s190
    %s194 = sphi 0, %s193
    %s210 = sphi 0, %s194
    %s216 = sphi 0, %s218
    %s219 = sphi 0, %s216
    %s220 = sphi 0, %s219
    %s236 = sphi 0, %s220
    %s242 = sphi 0, %s244
    %s245 = sphi 0, %s242
    %s246 = sphi 0, %s245
    %s262 = sphi 0, %s246
    %s268 = sphi 0, %s270
    %s271 = sphi 0, %s268
    %s272 = sphi 0, %s271
    %s288 = sphi 0, %s272
    %s294 = sphi 0, %s296
    %s297 = sphi 0, %s294
    %s298 = sphi 0, %s297
    %s314 = sphi 0, %s298
    %s320 = sphi 0, %s322
    %s323 = sphi 0, %s320
    %s324 = sphi 0, %s323
    %s340 = sphi 0, %s324
    %s346 = sphi 0, %s348
    %s349 = sphi 0, %s346
    %s350 = sphi 0, %s349
    %s366 = sphi 0, %s350
    %s372 = sphi 0, %s374
    %s375 = sphi 0, %s372
    %s376 = sphi 0, %s375
    %s392 = sphi 0, %s376
    %s398 = sphi 0, %s400
    %s401 = sphi 0, %s398
    %s402 = sphi 0, %s401
    %s418 = sphi 0, %s402
    %s424 = sphi 0, %s426
    %s427 = sphi 0, %s424
    %s428 = sphi 0, %s427
    %s444 = sphi 0, %s428
    %s450 = sphi 0, %s452
    %s453 = sphi 0, %s450
    %s454 = sphi 0, %s453
    %s470 = sphi 0, %s454
    %s474 = sphi 0, %s474
    %s476 = sphi 0, %s474
    %s477 = sphi 0, %s476
    %s491 = sphi 0, %s477
    %s495 = sphi 0, %s495
    %s497 = sphi 0, %s495
    %s498 = sphi 0, %s497
    %s512 = sphi 0, %s498
    %s516 = sphi 0, %s516
    %s518 = sphi 0, %s516
    %s519 = sphi 0, %s518
    %s533 = sphi 0, %s519
    %s537 = sphi 0, %s537
    %s539 = sphi 0, %s537
    %s540 = sphi 0, %s539
    %s554 = sphi 0, %s540
    %s560 = sphi 0, %s562
    %s563 = sphi 0, %s560
    %s564 = sphi 0, %s563
    %s580 = sphi 0, %s564
  $region4: #{image_domain_mri_vit3d_forward.3} parent=0 // loop_header_branch
    %30 = sbr.rel (%p28) target = $region8
  $region5: #{image_domain_mri_vit3d_forward.3} parent=0 // loop_body
    %s32 = ssub.s32 %s27, 1
    %s33 = ssub.s32 %s27, 2
    %s40 = sadd.s32 1, %s35
    %p41 = scmp.ge.s32.totalorder %s40, 2
    %s42 = scalar_select %p41, 0, %s40
    %s43 = sadd.s32 1, %s34
    %s44 = scalar_select %p41, %s43, %s34
    %p45 = scmp.ge.s32.totalorder %s44, 1
    %s46 = scalar_select %p45, 0, %s44
    %s47 = ssub.s32 %s34, %s46
    %p48 = scmp.eq.s32.totalorder %s47, 0
    %s50 = sadd.s32 %s49, 1
    %s51 = scalar_select %p48, %s49, %s50
    %p54 = pneg %p48
    %p55 = scmp.eq.s32.totalorder %s27, 1
    %p56 = por %p54, %p55
    %p57 = scmp.ne.s32.totalorder %s49, %s52
    %p58 = scmp.eq.s32.totalorder %s27, 0
    %p59 = por %p57, %p58
    %p60 = scmp.ne.s32.totalorder %s49, %s52
    %p61 = scmp.eq.s32.totalorder %s32, 1
    %p62 = por %p60, %p61
    %p63 = scmp.ne.s32.totalorder %s52, %s53
    %p64 = scmp.eq.s32.totalorder %s32, 0
    %p65 = por %p63, %p64
    %p66 = scmp.ne.s32.totalorder %s52, %s53
    %p67 = scmp.eq.s32.totalorder %s33, 1
    %p68 = por %p66, %p67
    %p70 = scmp.ne.s32.totalorder %s53, %s69
    %p71 = scmp.eq.s32.totalorder %s33, 0
    %p72 = por %p70, %p71
    %s73 = ssub.s32 %s34, %s46
    %p74 = scmp.eq.s32.totalorder %s73, 0
    %s76 = sadd.s32 %s75, 1
    %s77 = scalar_select %p74, %s75, %s76
    %p80 = pneg %p74
    %p81 = scmp.eq.s32.totalorder %s27, 1
    %p82 = por %p80, %p81
    %p83 = scmp.ne.s32.totalorder %s75, %s78
    %p84 = scmp.eq.s32.totalorder %s27, 0
    %p85 = por %p83, %p84
    %p86 = scmp.ne.s32.totalorder %s75, %s78
    %p87 = scmp.eq.s32.totalorder %s32, 1
    %p88 = por %p86, %p87
    %p89 = scmp.ne.s32.totalorder %s78, %s79
    %p90 = scmp.eq.s32.totalorder %s32, 0
    %p91 = por %p89, %p90
    %p92 = scmp.ne.s32.totalorder %s78, %s79
    %p93 = scmp.eq.s32.totalorder %s33, 1
    %p94 = por %p92, %p93
    %p96 = scmp.ne.s32.totalorder %s79, %s95
    %p97 = scmp.eq.s32.totalorder %s33, 0
    %p98 = por %p96, %p97
    %s100 = sadd.s32 %s99, 1
    %p103 = scmp.eq.s32.totalorder %s27, 1
    %p104 = scmp.ne.s32.totalorder %s99, %s101
    %p105 = scmp.eq.s32.totalorder %s27, 0
    %p106 = por %p104, %p105
    %p107 = scmp.ne.s32.totalorder %s99, %s101
    %p108 = scmp.eq.s32.totalorder %s32, 1
    %p109 = por %p107, %p108
    %p110 = scmp.ne.s32.totalorder %s101, %s102
    %p111 = scmp.eq.s32.totalorder %s32, 0
    %p112 = por %p110, %p111
    %p113 = scmp.ne.s32.totalorder %s101, %s102
    %p114 = scmp.eq.s32.totalorder %s33, 1
    %p115 = por %p113, %p114
    %p117 = scmp.ne.s32.totalorder %s102, %s116
    %p118 = scmp.eq.s32.totalorder %s33, 0
    %p119 = por %p117, %p118
    %s121 = sadd.s32 %s120, 1
    %p124 = scmp.eq.s32.totalorder %s27, 1
    %p125 = scmp.ne.s32.totalorder %s120, %s122
    %p126 = scmp.eq.s32.totalorder %s27, 0
    %p127 = por %p125, %p126
    %p128 = scmp.ne.s32.totalorder %s120, %s122
    %p129 = scmp.eq.s32.totalorder %s32, 1
    %p130 = por %p128, %p129
    %p131 = scmp.ne.s32.totalorder %s122, %s123
    %p132 = scmp.eq.s32.totalorder %s32, 0
    %p133 = por %p131, %p132
    %p134 = scmp.ne.s32.totalorder %s122, %s123
    %p135 = scmp.eq.s32.totalorder %s33, 1
    %p136 = por %p134, %p135
    %p138 = scmp.ne.s32.totalorder %s123, %s137
    %p139 = scmp.eq.s32.totalorder %s33, 0
    %p140 = por %p138, %p139
    %s142 = sadd.s32 %s141, 1
    %p145 = scmp.eq.s32.totalorder %s27, 1
    %p146 = scmp.ne.s32.totalorder %s141, %s143
    %p147 = scmp.eq.s32.totalorder %s27, 0
    %p148 = por %p146, %p147
    %p149 = scmp.ne.s32.totalorder %s141, %s143
    %p150 = scmp.eq.s32.totalorder %s32, 1
    %p151 = por %p149, %p150
    %p152 = scmp.ne.s32.totalorder %s143, %s144
    %p153 = scmp.eq.s32.totalorder %s32, 0
    %p154 = por %p152, %p153
    %p155 = scmp.ne.s32.totalorder %s143, %s144
    %p156 = scmp.eq.s32.totalorder %s33, 1
    %p157 = por %p155, %p156
    %p159 = scmp.ne.s32.totalorder %s144, %s158
    %p160 = scmp.eq.s32.totalorder %s33, 0
    %p161 = por %p159, %p160
    %s162 = ssub.s32 %s35, %s42
    %p163 = scmp.eq.s32.totalorder %s162, 0
    %s165 = sadd.s32 %s164, 1
    %s166 = scalar_select %p163, %s164, %s165
    %p169 = pneg %p163
    %p170 = scmp.eq.s32.totalorder %s27, 1
    %p171 = por %p169, %p170
    %p172 = scmp.ne.s32.totalorder %s164, %s167
    %p173 = scmp.eq.s32.totalorder %s27, 0
    %p174 = por %p172, %p173
    %p175 = scmp.ne.s32.totalorder %s164, %s167
    %p176 = scmp.eq.s32.totalorder %s32, 1
    %p177 = por %p175, %p176
    %p178 = scmp.ne.s32.totalorder %s167, %s168
    %p179 = scmp.eq.s32.totalorder %s32, 0
    %p180 = por %p178, %p179
    %p181 = scmp.ne.s32.totalorder %s167, %s168
    %p182 = scmp.eq.s32.totalorder %s33, 1
    %p183 = por %p181, %p182
    %p185 = scmp.ne.s32.totalorder %s168, %s184
    %p186 = scmp.eq.s32.totalorder %s33, 0
    %p187 = por %p185, %p186
    %s188 = ssub.s32 %s35, %s42
    %p189 = scmp.eq.s32.totalorder %s188, 0
    %s191 = sadd.s32 %s190, 1
    %s192 = scalar_select %p189, %s190, %s191
    %p195 = pneg %p189
    %p196 = scmp.eq.s32.totalorder %s27, 1
    %p197 = por %p195, %p196
    %p198 = scmp.ne.s32.totalorder %s190, %s193
    %p199 = scmp.eq.s32.totalorder %s27, 0
    %p200 = por %p198, %p199
    %p201 = scmp.ne.s32.totalorder %s190, %s193
    %p202 = scmp.eq.s32.totalorder %s32, 1
    %p203 = por %p201, %p202
    %p204 = scmp.ne.s32.totalorder %s193, %s194
    %p205 = scmp.eq.s32.totalorder %s32, 0
    %p206 = por %p204, %p205
    %p207 = scmp.ne.s32.totalorder %s193, %s194
    %p208 = scmp.eq.s32.totalorder %s33, 1
    %p209 = por %p207, %p208
    %p211 = scmp.ne.s32.totalorder %s194, %s210
    %p212 = scmp.eq.s32.totalorder %s33, 0
    %p213 = por %p211, %p212
    %s214 = ssub.s32 %s35, %s42
    %p215 = scmp.eq.s32.totalorder %s214, 0
    %s217 = sadd.s32 %s216, 1
    %s218 = scalar_select %p215, %s216, %s217
    %p221 = pneg %p215
    %p222 = scmp.eq.s32.totalorder %s27, 1
    %p223 = por %p221, %p222
    %p224 = scmp.ne.s32.totalorder %s216, %s219
    %p225 = scmp.eq.s32.totalorder %s27, 0
    %p226 = por %p224, %p225
    %p227 = scmp.ne.s32.totalorder %s216, %s219
    %p228 = scmp.eq.s32.totalorder %s32, 1
    %p229 = por %p227, %p228
    %p230 = scmp.ne.s32.totalorder %s219, %s220
    %p231 = scmp.eq.s32.totalorder %s32, 0
    %p232 = por %p230, %p231
    %p233 = scmp.ne.s32.totalorder %s219, %s220
    %p234 = scmp.eq.s32.totalorder %s33, 1
    %p235 = por %p233, %p234
    %p237 = scmp.ne.s32.totalorder %s220, %s236
    %p238 = scmp.eq.s32.totalorder %s33, 0
    %p239 = por %p237, %p238
    %s240 = ssub.s32 %s35, %s42
    %p241 = scmp.eq.s32.totalorder %s240, 0
    %s243 = sadd.s32 %s242, 1
    %s244 = scalar_select %p241, %s242, %s243
    %p247 = pneg %p241
    %p248 = scmp.eq.s32.totalorder %s27, 1
    %p249 = por %p247, %p248
    %p250 = scmp.ne.s32.totalorder %s242, %s245
    %p251 = scmp.eq.s32.totalorder %s27, 0
    %p252 = por %p250, %p251
    %p253 = scmp.ne.s32.totalorder %s242, %s245
    %p254 = scmp.eq.s32.totalorder %s32, 1
    %p255 = por %p253, %p254
    %p256 = scmp.ne.s32.totalorder %s245, %s246
    %p257 = scmp.eq.s32.totalorder %s32, 0
    %p258 = por %p256, %p257
    %p259 = scmp.ne.s32.totalorder %s245, %s246
    %p260 = scmp.eq.s32.totalorder %s33, 1
    %p261 = por %p259, %p260
    %p263 = scmp.ne.s32.totalorder %s246, %s262
    %p264 = scmp.eq.s32.totalorder %s33, 0
    %p265 = por %p263, %p264
    %s266 = ssub.s32 %s35, %s42
    %p267 = scmp.eq.s32.totalorder %s266, 0
    %s269 = sadd.s32 %s268, 1
    %s270 = scalar_select %p267, %s268, %s269
    %p273 = pneg %p267
    %p274 = scmp.eq.s32.totalorder %s27, 1
    %p275 = por %p273, %p274
    %p276 = scmp.ne.s32.totalorder %s268, %s271
    %p277 = scmp.eq.s32.totalorder %s27, 0
    %p278 = por %p276, %p277
    %p279 = scmp.ne.s32.totalorder %s268, %s271
    %p280 = scmp.eq.s32.totalorder %s32, 1
    %p281 = por %p279, %p280
    %p282 = scmp.ne.s32.totalorder %s271, %s272
    %p283 = scmp.eq.s32.totalorder %s32, 0
    %p284 = por %p282, %p283
    %p285 = scmp.ne.s32.totalorder %s271, %s272
    %p286 = scmp.eq.s32.totalorder %s33, 1
    %p287 = por %p285, %p286
    %p289 = scmp.ne.s32.totalorder %s272, %s288
    %p290 = scmp.eq.s32.totalorder %s33, 0
    %p291 = por %p289, %p290
    %s292 = ssub.s32 %s35, %s42
    %p293 = scmp.eq.s32.totalorder %s292, 0
    %s295 = sadd.s32 %s294, 1
    %s296 = scalar_select %p293, %s294, %s295
    %p299 = pneg %p293
    %p300 = scmp.eq.s32.totalorder %s27, 1
    %p301 = por %p299, %p300
    %p302 = scmp.ne.s32.totalorder %s294, %s297
    %p303 = scmp.eq.s32.totalorder %s27, 0
    %p304 = por %p302, %p303
    %p305 = scmp.ne.s32.totalorder %s294, %s297
    %p306 = scmp.eq.s32.totalorder %s32, 1
    %p307 = por %p305, %p306
    %p308 = scmp.ne.s32.totalorder %s297, %s298
    %p309 = scmp.eq.s32.totalorder %s32, 0
    %p310 = por %p308, %p309
    %p311 = scmp.ne.s32.totalorder %s297, %s298
    %p312 = scmp.eq.s32.totalorder %s33, 1
    %p313 = por %p311, %p312
    %p315 = scmp.ne.s32.totalorder %s298, %s314
    %p316 = scmp.eq.s32.totalorder %s33, 0
    %p317 = por %p315, %p316
    %s318 = ssub.s32 %s35, %s42
    %p319 = scmp.eq.s32.totalorder %s318, 0
    %s321 = sadd.s32 %s320, 1
    %s322 = scalar_select %p319, %s320, %s321
    %p325 = pneg %p319
    %p326 = scmp.eq.s32.totalorder %s27, 1
    %p327 = por %p325, %p326
    %p328 = scmp.ne.s32.totalorder %s320, %s323
    %p329 = scmp.eq.s32.totalorder %s27, 0
    %p330 = por %p328, %p329
    %p331 = scmp.ne.s32.totalorder %s320, %s323
    %p332 = scmp.eq.s32.totalorder %s32, 1
    %p333 = por %p331, %p332
    %p334 = scmp.ne.s32.totalorder %s323, %s324
    %p335 = scmp.eq.s32.totalorder %s32, 0
    %p336 = por %p334, %p335
    %p337 = scmp.ne.s32.totalorder %s323, %s324
    %p338 = scmp.eq.s32.totalorder %s33, 1
    %p339 = por %p337, %p338
    %p341 = scmp.ne.s32.totalorder %s324, %s340
    %p342 = scmp.eq.s32.totalorder %s33, 0
    %p343 = por %p341, %p342
    %s344 = ssub.s32 %s35, %s42
    %p345 = scmp.eq.s32.totalorder %s344, 0
    %s347 = sadd.s32 %s346, 1
    %s348 = scalar_select %p345, %s346, %s347
    %p351 = pneg %p345
    %p352 = scmp.eq.s32.totalorder %s27, 1
    %p353 = por %p351, %p352
    %p354 = scmp.ne.s32.totalorder %s346, %s349
    %p355 = scmp.eq.s32.totalorder %s27, 0
    %p356 = por %p354, %p355
    %p357 = scmp.ne.s32.totalorder %s346, %s349
    %p358 = scmp.eq.s32.totalorder %s32, 1
    %p359 = por %p357, %p358
    %p360 = scmp.ne.s32.totalorder %s349, %s350
    %p361 = scmp.eq.s32.totalorder %s32, 0
    %p362 = por %p360, %p361
    %p363 = scmp.ne.s32.totalorder %s349, %s350
    %p364 = scmp.eq.s32.totalorder %s33, 1
    %p365 = por %p363, %p364
    %p367 = scmp.ne.s32.totalorder %s350, %s366
    %p368 = scmp.eq.s32.totalorder %s33, 0
    %p369 = por %p367, %p368
    %s370 = ssub.s32 %s35, %s42
    %p371 = scmp.eq.s32.totalorder %s370, 0
    %s373 = sadd.s32 %s372, 1
    %s374 = scalar_select %p371, %s372, %s373
    %p377 = pneg %p371
    %p378 = scmp.eq.s32.totalorder %s27, 1
    %p379 = por %p377, %p378
    %p380 = scmp.ne.s32.totalorder %s372, %s375
    %p381 = scmp.eq.s32.totalorder %s27, 0
    %p382 = por %p380, %p381
    %p383 = scmp.ne.s32.totalorder %s372, %s375
    %p384 = scmp.eq.s32.totalorder %s32, 1
    %p385 = por %p383, %p384
    %p386 = scmp.ne.s32.totalorder %s375, %s376
    %p387 = scmp.eq.s32.totalorder %s32, 0
    %p388 = por %p386, %p387
    %p389 = scmp.ne.s32.totalorder %s375, %s376
    %p390 = scmp.eq.s32.totalorder %s33, 1
    %p391 = por %p389, %p390
    %p393 = scmp.ne.s32.totalorder %s376, %s392
    %p394 = scmp.eq.s32.totalorder %s33, 0
    %p395 = por %p393, %p394
    %s396 = ssub.s32 %s35, %s42
    %p397 = scmp.eq.s32.totalorder %s396, 0
    %s399 = sadd.s32 %s398, 1
    %s400 = scalar_select %p397, %s398, %s399
    %p403 = pneg %p397
    %p404 = scmp.eq.s32.totalorder %s27, 1
    %p405 = por %p403, %p404
    %p406 = scmp.ne.s32.totalorder %s398, %s401
    %p407 = scmp.eq.s32.totalorder %s27, 0
    %p408 = por %p406, %p407
    %p409 = scmp.ne.s32.totalorder %s398, %s401
    %p410 = scmp.eq.s32.totalorder %s32, 1
    %p411 = por %p409, %p410
    %p412 = scmp.ne.s32.totalorder %s401, %s402
    %p413 = scmp.eq.s32.totalorder %s32, 0
    %p414 = por %p412, %p413
    %p415 = scmp.ne.s32.totalorder %s401, %s402
    %p416 = scmp.eq.s32.totalorder %s33, 1
    %p417 = por %p415, %p416
    %p419 = scmp.ne.s32.totalorder %s402, %s418
    %p420 = scmp.eq.s32.totalorder %s33, 0
    %p421 = por %p419, %p420
    %s422 = ssub.s32 %s35, %s42
    %p423 = scmp.eq.s32.totalorder %s422, 0
    %s425 = sadd.s32 %s424, 1
    %s426 = scalar_select %p423, %s424, %s425
    %p429 = pneg %p423
    %p430 = scmp.eq.s32.totalorder %s27, 1
    %p431 = por %p429, %p430
    %p432 = scmp.ne.s32.totalorder %s424, %s427
    %p433 = scmp.eq.s32.totalorder %s27, 0
    %p434 = por %p432, %p433
    %p435 = scmp.ne.s32.totalorder %s424, %s427
    %p436 = scmp.eq.s32.totalorder %s32, 1
    %p437 = por %p435, %p436
    %p438 = scmp.ne.s32.totalorder %s427, %s428
    %p439 = scmp.eq.s32.totalorder %s32, 0
    %p440 = por %p438, %p439
    %p441 = scmp.ne.s32.totalorder %s427, %s428
    %p442 = scmp.eq.s32.totalorder %s33, 1
    %p443 = por %p441, %p442
    %p445 = scmp.ne.s32.totalorder %s428, %s444
    %p446 = scmp.eq.s32.totalorder %s33, 0
    %p447 = por %p445, %p446
    %s448 = ssub.s32 %s35, %s42
    %p449 = scmp.eq.s32.totalorder %s448, 0
    %s451 = sadd.s32 %s450, 1
    %s452 = scalar_select %p449, %s450, %s451
    %p455 = pneg %p449
    %p456 = scmp.eq.s32.totalorder %s27, 1
    %p457 = por %p455, %p456
    %p458 = scmp.ne.s32.totalorder %s450, %s453
    %p459 = scmp.eq.s32.totalorder %s27, 0
    %p460 = por %p458, %p459
    %p461 = scmp.ne.s32.totalorder %s450, %s453
    %p462 = scmp.eq.s32.totalorder %s32, 1
    %p463 = por %p461, %p462
    %p464 = scmp.ne.s32.totalorder %s453, %s454
    %p465 = scmp.eq.s32.totalorder %s32, 0
    %p466 = por %p464, %p465
    %p467 = scmp.ne.s32.totalorder %s453, %s454
    %p468 = scmp.eq.s32.totalorder %s33, 1
    %p469 = por %p467, %p468
    %p471 = scmp.ne.s32.totalorder %s454, %s470
    %p472 = scmp.eq.s32.totalorder %s33, 0
    %p473 = por %p471, %p472
    %s475 = sadd.s32 %s474, 1
    %p478 = scmp.eq.s32.totalorder %s27, 1
    %p479 = scmp.ne.s32.totalorder %s474, %s476
    %p480 = scmp.eq.s32.totalorder %s27, 0
    %p481 = por %p479, %p480
    %p482 = scmp.ne.s32.totalorder %s474, %s476
    %p483 = scmp.eq.s32.totalorder %s32, 1
    %p484 = por %p482, %p483
    %p485 = scmp.ne.s32.totalorder %s476, %s477
    %p486 = scmp.eq.s32.totalorder %s32, 0
    %p487 = por %p485, %p486
    %p488 = scmp.ne.s32.totalorder %s476, %s477
    %p489 = scmp.eq.s32.totalorder %s33, 1
    %p490 = por %p488, %p489
    %p492 = scmp.ne.s32.totalorder %s477, %s491
    %p493 = scmp.eq.s32.totalorder %s33, 0
    %p494 = por %p492, %p493
    %s496 = sadd.s32 %s495, 1
    %p499 = scmp.eq.s32.totalorder %s27, 1
    %p500 = scmp.ne.s32.totalorder %s495, %s497
    %p501 = scmp.eq.s32.totalorder %s27, 0
    %p502 = por %p500, %p501
    %p503 = scmp.ne.s32.totalorder %s495, %s497
    %p504 = scmp.eq.s32.totalorder %s32, 1
    %p505 = por %p503, %p504
    %p506 = scmp.ne.s32.totalorder %s497, %s498
    %p507 = scmp.eq.s32.totalorder %s32, 0
    %p508 = por %p506, %p507
    %p509 = scmp.ne.s32.totalorder %s497, %s498
    %p510 = scmp.eq.s32.totalorder %s33, 1
    %p511 = por %p509, %p510
    %p513 = scmp.ne.s32.totalorder %s498, %s512
    %p514 = scmp.eq.s32.totalorder %s33, 0
    %p515 = por %p513, %p514
    %s517 = sadd.s32 %s516, 1
    %p520 = scmp.eq.s32.totalorder %s27, 1
    %p521 = scmp.ne.s32.totalorder %s516, %s518
    %p522 = scmp.eq.s32.totalorder %s27, 0
    %p523 = por %p521, %p522
    %p524 = scmp.ne.s32.totalorder %s516, %s518
    %p525 = scmp.eq.s32.totalorder %s32, 1
    %p526 = por %p524, %p525
    %p527 = scmp.ne.s32.totalorder %s518, %s519
    %p528 = scmp.eq.s32.totalorder %s32, 0
    %p529 = por %p527, %p528
    %p530 = scmp.ne.s32.totalorder %s518, %s519
    %p531 = scmp.eq.s32.totalorder %s33, 1
    %p532 = por %p530, %p531
    %p534 = scmp.ne.s32.totalorder %s519, %s533
    %p535 = scmp.eq.s32.totalorder %s33, 0
    %p536 = por %p534, %p535
    %s538 = sadd.s32 %s537, 1
    %p541 = scmp.eq.s32.totalorder %s27, 1
    %p542 = scmp.ne.s32.totalorder %s537, %s539
    %p543 = scmp.eq.s32.totalorder %s27, 0
    %p544 = por %p542, %p543
    %p545 = scmp.ne.s32.totalorder %s537, %s539
    %p546 = scmp.eq.s32.totalorder %s32, 1
    %p547 = por %p545, %p546
    %p548 = scmp.ne.s32.totalorder %s539, %s540
    %p549 = scmp.eq.s32.totalorder %s32, 0
    %p550 = por %p548, %p549
    %p551 = scmp.ne.s32.totalorder %s539, %s540
    %p552 = scmp.eq.s32.totalorder %s33, 1
    %p553 = por %p551, %p552
    %p555 = scmp.ne.s32.totalorder %s540, %s554
    %p556 = scmp.eq.s32.totalorder %s33, 0
    %p557 = por %p555, %p556
    %s558 = ssub.s32 %s34, %s46
    %p559 = scmp.eq.s32.totalorder %s558, 0
    %s561 = sadd.s32 %s560, 1
    %s562 = scalar_select %p559, %s560, %s561
    %p565 = pneg %p559
    %p566 = scmp.eq.s32.totalorder %s27, 1
    %p567 = por %p565, %p566
    %p568 = scmp.ne.s32.totalorder %s560, %s563
    %p569 = scmp.eq.s32.totalorder %s27, 0
    %p570 = por %p568, %p569
    %p571 = scmp.ne.s32.totalorder %s560, %s563
    %p572 = scmp.eq.s32.totalorder %s32, 1
    %p573 = por %p571, %p572
    %p574 = scmp.ne.s32.totalorder %s563, %s564
    %p575 = scmp.eq.s32.totalorder %s32, 0
    %p576 = por %p574, %p575
    %p577 = scmp.ne.s32.totalorder %s563, %s564
    %p578 = scmp.eq.s32.totalorder %s33, 1
    %p579 = por %p577, %p578
    %p581 = scmp.ne.s32.totalorder %s564, %s580
    %p582 = scmp.eq.s32.totalorder %s33, 0
    %p583 = por %p581, %p582
    %p584 = scmp.le.s32.totalorder 1, %s27
    %p585 = scmp.lt.s32.totalorder %s27, 3
    %p586 = pnand %p584, %p585
    %p587 = pneg %p586
    // Predicated region
    $region9: #{image_domain_mri_vit3d_forward.3} parent=5 // pred_check
      _
    $region10: #{image_domain_mri_vit3d_forward.3} parent=5 // pred_check_branch
      %589 = sbr.rel (%p586) target = $region12
    $region11: #{image_domain_mri_vit3d_forward.3} parent=5 // pred_region
      %s590 = ssub.s32 %s27, 1
      // Predicated region
      $region13: #{image_domain_mri_vit3d_forward.3} parent=11 // pred_check
        %p591 = pneg %p65
      $region14: #{image_domain_mri_vit3d_forward.3} parent=11 // pred_check_branch
        %593 = sbr.rel (%p591) target = $region16
      $region15: #{image_domain_mri_vit3d_forward.3} parent=11 // pred_region
        %s594 = smul.u32 2, %s36
        %p595 = scmp.lt.s32.totalorder %s594, 1
        %s596 = scalar_select %p595, %s594, 1
        %s597 = smul.addr %s596, 4
        %s598 = scalar_lea.vmem %s0, %s597
        %s599 = smul.u32 2, %s36
      $region16: #{image_domain_mri_vit3d_forward.3} parent=11 // pred_fallthru
        _
      // Predicated region
      $region17: #{image_domain_mri_vit3d_forward.3} parent=11 // pred_check
        %p600 = pneg %p91
      $region18: #{image_domain_mri_vit3d_forward.3} parent=11 // pred_check_branch
        %602 = sbr.rel (%p600) target = $region20
      $region19: #{image_domain_mri_vit3d_forward.3} parent=11 // pred_region
        %s603 = smul.u32 2, %s36
        %p604 = scmp.lt.s32.totalorder %s603, 1
        %s605 = scalar_select %p604, %s603, 1
        %s606 = scalar_lea.vmem %s1, %s605
        %s607 = smul.u32 2, %s36
      $region20: #{image_domain_mri_vit3d_forward.3} parent=11 // pred_fallthru
        _
      // Predicated region
      $region21: #{image_domain_mri_vit3d_forward.3} parent=11 // pred_check
        %p608 = pneg %p112
      $region22: #{image_domain_mri_vit3d_forward.3} parent=11 // pred_check_branch
        %610 = sbr.rel (%p608) target = $region24
      $region23: #{image_domain_mri_vit3d_forward.3} parent=11 // pred_region
        _
      $region24: #{image_domain_mri_vit3d_forward.3} parent=11 // pred_fallthru
        _
      // Predicated region
      $region25: #{image_domain_mri_vit3d_forward.3} parent=11 // pred_check
        %p611 = pneg %p133
      $region26: #{image_domain_mri_vit3d_forward.3} parent=11 // pred_check_branch
        %613 = sbr.rel (%p611) target = $region28
      $region27: #{image_domain_mri_vit3d_forward.3} parent=11 // pred_region
        _
      $region28: #{image_domain_mri_vit3d_forward.3} parent=11 // pred_fallthru
        _
      // Predicated region
      $region29: #{image_domain_mri_vit3d_forward.3} parent=11 // pred_check
        %p614 = pneg %p154
      $region30: #{image_domain_mri_vit3d_forward.3} parent=11 // pred_check_branch
        %616 = sbr.rel (%p614) target = $region32
      $region31: #{image_domain_mri_vit3d_forward.3} parent=11 // pred_region
        _
      $region32: #{image_domain_mri_vit3d_forward.3} parent=11 // pred_fallthru
        _
      // Predicated region
      $region33: #{image_domain_mri_vit3d_forward.3} parent=11 // pred_check
        %p617 = pneg %p487
      $region34: #{image_domain_mri_vit3d_forward.3} parent=11 // pred_check_branch
        %619 = sbr.rel (%p617) target = $region36
      $region35: #{image_domain_mri_vit3d_forward.3} parent=11 // pred_region
        _
      $region36: #{image_domain_mri_vit3d_forward.3} parent=11 // pred_fallthru
        _
      // Predicated region
      $region37: #{image_domain_mri_vit3d_forward.3} parent=11 // pred_check
        %p620 = pneg %p508
      $region38: #{image_domain_mri_vit3d_forward.3} parent=11 // pred_check_branch
        %622 = sbr.rel (%p620) target = $region40
      $region39: #{image_domain_mri_vit3d_forward.3} parent=11 // pred_region
        _
      $region40: #{image_domain_mri_vit3d_forward.3} parent=11 // pred_fallthru
        _
      // Predicated region
      $region41: #{image_domain_mri_vit3d_forward.3} parent=11 // pred_check
        %p623 = pneg %p529
      $region42: #{image_domain_mri_vit3d_forward.3} parent=11 // pred_check_branch
        %625 = sbr.rel (%p623) target = $region44
      $region43: #{image_domain_mri_vit3d_forward.3} parent=11 // pred_region
        _
      $region44: #{image_domain_mri_vit3d_forward.3} parent=11 // pred_fallthru
        _
      // Predicated region
      $region45: #{image_domain_mri_vit3d_forward.3} parent=11 // pred_check
        %p626 = pneg %p550
      $region46: #{image_domain_mri_vit3d_forward.3} parent=11 // pred_check_branch
        %628 = sbr.rel (%p626) target = $region48
      $region47: #{image_domain_mri_vit3d_forward.3} parent=11 // pred_region
        _
      $region48: #{image_domain_mri_vit3d_forward.3} parent=11 // pred_fallthru
        _
    $region12: #{image_domain_mri_vit3d_forward.3} parent=5 // pred_fallthru
      _
    %p629 = scmp.lt.s32.totalorder %s27, 2
    // Predicated region
    $region49: #{image_domain_mri_vit3d_forward.3} parent=5 // pred_check
      %p630 = pneg %p629
    $region50: #{image_domain_mri_vit3d_forward.3} parent=5 // pred_check_branch
      %632 = sbr.rel (%p630) target = $region52
    $region51: #{image_domain_mri_vit3d_forward.3} parent=5 // pred_region
      // Predicated region
      $region53: #{image_domain_mri_vit3d_forward.3} parent=51 // pred_check
        %p633 = pneg %p174
      $region54: #{image_domain_mri_vit3d_forward.3} parent=51 // pred_check_branch
        %635 = sbr.rel (%p633) target = $region56
      $region55: #{image_domain_mri_vit3d_forward.3} parent=51 // pred_region
        %p636 = scmp.lt.s32.totalorder %s35, 1
        %s637 = scalar_select %p636, %s35, 1
        %s638 = scalar_lea.vmem %s5, %s637
      $region56: #{image_domain_mri_vit3d_forward.3} parent=51 // pred_fallthru
        _
      // Predicated region
      $region57: #{image_domain_mri_vit3d_forward.3} parent=51 // pred_check
        %p639 = pneg %p200
      $region58: #{image_domain_mri_vit3d_forward.3} parent=51 // pred_check_branch
        %641 = sbr.rel (%p639) target = $region60
      $region59: #{image_domain_mri_vit3d_forward.3} parent=51 // pred_region
        %p642 = scmp.lt.s32.totalorder %s35, 1
        %s643 = scalar_select %p642, %s35, 1
        %s644 = scalar_lea.vmem %s6, %s643
      $region60: #{image_domain_mri_vit3d_forward.3} parent=51 // pred_fallthru
        _
      // Predicated region
      $region61: #{image_domain_mri_vit3d_forward.3} parent=51 // pred_check
        %p645 = pneg %p226
      $region62: #{image_domain_mri_vit3d_forward.3} parent=51 // pred_check_branch
        %647 = sbr.rel (%p645) target = $region64
      $region63: #{image_domain_mri_vit3d_forward.3} parent=51 // pred_region
        %p648 = scmp.lt.s32.totalorder %s35, 1
        %s649 = scalar_select %p648, %s35, 1
        %s650 = smul.addr %s649, 4
        %s651 = smul.addr %s650, 4
        %s652 = scalar_lea.vmem %s7, %s651
      $region64: #{image_domain_mri_vit3d_forward.3} parent=51 // pred_fallthru
        _
      // Predicated region
      $region65: #{image_domain_mri_vit3d_forward.3} parent=51 // pred_check
        %p653 = pneg %p252
      $region66: #{image_domain_mri_vit3d_forward.3} parent=51 // pred_check_branch
        %655 = sbr.rel (%p653) target = $region68
      $region67: #{image_domain_mri_vit3d_forward.3} parent=51 // pred_region
        %p656 = scmp.lt.s32.totalorder %s35, 1
        %s657 = scalar_select %p656, %s35, 1
        %s658 = scalar_lea.vmem %s8, %s657
      $region68: #{image_domain_mri_vit3d_forward.3} parent=51 // pred_fallthru
        _
      // Predicated region
      $region69: #{image_domain_mri_vit3d_forward.3} parent=51 // pred_check
        %p659 = pneg %p278
      $region70: #{image_domain_mri_vit3d_forward.3} parent=51 // pred_check_branch
        %661 = sbr.rel (%p659) target = $region72
      $region71: #{image_domain_mri_vit3d_forward.3} parent=51 // pred_region
        %p662 = scmp.lt.s32.totalorder %s35, 1
        %s663 = scalar_select %p662, %s35, 1
        %s664 = smul.addr %s663, 4
        %s665 = smul.addr %s664, 4
        %s666 = scalar_lea.vmem %s9, %s665
      $region72: #{image_domain_mri_vit3d_forward.3} parent=51 // pred_fallthru
        _
      // Predicated region
      $region73: #{image_domain_mri_vit3d_forward.3} parent=51 // pred_check
        %p667 = pneg %p304
      $region74: #{image_domain_mri_vit3d_forward.3} parent=51 // pred_check_branch
        %669 = sbr.rel (%p667) target = $region76
      $region75: #{image_domain_mri_vit3d_forward.3} parent=51 // pred_region
        %p670 = scmp.lt.s32.totalorder %s35, 1
        %s671 = scalar_select %p670, %s35, 1
        %s672 = scalar_lea.vmem %s10, %s671
      $region76: #{image_domain_mri_vit3d_forward.3} parent=51 // pred_fallthru
        _
      // Predicated region
      $region77: #{image_domain_mri_vit3d_forward.3} parent=51 // pred_check
        %p673 = pneg %p330
      $region78: #{image_domain_mri_vit3d_forward.3} parent=51 // pred_check_branch
        %675 = sbr.rel (%p673) target = $region80
      $region79: #{image_domain_mri_vit3d_forward.3} parent=51 // pred_region
        %p676 = scmp.lt.s32.totalorder %s35, 1
        %s677 = scalar_select %p676, %s35, 1
        %s678 = scalar_lea.vmem %s11, %s677
      $region80: #{image_domain_mri_vit3d_forward.3} parent=51 // pred_fallthru
        _
      // Predicated region
      $region81: #{image_domain_mri_vit3d_forward.3} parent=51 // pred_check
        %p679 = pneg %p356
      $region82: #{image_domain_mri_vit3d_forward.3} parent=51 // pred_check_branch
        %681 = sbr.rel (%p679) target = $region84
      $region83: #{image_domain_mri_vit3d_forward.3} parent=51 // pred_region
        %p682 = scmp.lt.s32.totalorder %s35, 1
        %s683 = scalar_select %p682, %s35, 1
        %s684 = scalar_lea.vmem %s12, %s683
      $region84: #{image_domain_mri_vit3d_forward.3} parent=51 // pred_fallthru
        _
      // Predicated region
      $region85: #{image_domain_mri_vit3d_forward.3} parent=51 // pred_check
        %p685 = pneg %p382
      $region86: #{image_domain_mri_vit3d_forward.3} parent=51 // pred_check_branch
        %687 = sbr.rel (%p685) target = $region88
      $region87: #{image_domain_mri_vit3d_forward.3} parent=51 // pred_region
        %p688 = scmp.lt.s32.totalorder %s35, 1
        %s689 = scalar_select %p688, %s35, 1
        %s690 = smul.addr %s689, 4
        %s691 = smul.addr %s690, 4
        %s692 = scalar_lea.vmem %s13, %s691
      $region88: #{image_domain_mri_vit3d_forward.3} parent=51 // pred_fallthru
        _
      // Predicated region
      $region89: #{image_domain_mri_vit3d_forward.3} parent=51 // pred_check
        %p693 = pneg %p408
      $region90: #{image_domain_mri_vit3d_forward.3} parent=51 // pred_check_branch
        %695 = sbr.rel (%p693) target = $region92
      $region91: #{image_domain_mri_vit3d_forward.3} parent=51 // pred_region
        %p696 = scmp.lt.s32.totalorder %s35, 1
        %s697 = scalar_select %p696, %s35, 1
        %s698 = scalar_lea.vmem %s14, %s697
      $region92: #{image_domain_mri_vit3d_forward.3} parent=51 // pred_fallthru
        _
      // Predicated region
      $region93: #{image_domain_mri_vit3d_forward.3} parent=51 // pred_check
        %p699 = pneg %p434
      $region94: #{image_domain_mri_vit3d_forward.3} parent=51 // pred_check_branch
        %701 = sbr.rel (%p699) target = $region96
      $region95: #{image_domain_mri_vit3d_forward.3} parent=51 // pred_region
        %p702 = scmp.lt.s32.totalorder %s35, 1
        %s703 = scalar_select %p702, %s35, 1
        %s704 = smul.addr %s703, 16
        %s705 = smul.addr %s704, 4
        %s706 = scalar_lea.vmem %s15, %s705
      $region96: #{image_domain_mri_vit3d_forward.3} parent=51 // pred_fallthru
        _
      // Predicated region
      $region97: #{image_domain_mri_vit3d_forward.3} parent=51 // pred_check
        %p707 = pneg %p460
      $region98: #{image_domain_mri_vit3d_forward.3} parent=51 // pred_check_branch
        %709 = sbr.rel (%p707) target = $region100
      $region99: #{image_domain_mri_vit3d_forward.3} parent=51 // pred_region
        %p710 = scmp.lt.s32.totalorder %s35, 1
        %s711 = scalar_select %p710, %s35, 1
        %s712 = scalar_lea.vmem %s16, %s711
      $region100: #{image_domain_mri_vit3d_forward.3} parent=51 // pred_fallthru
        _
    $region52: #{image_domain_mri_vit3d_forward.3} parent=5 // pred_fallthru
      _
    %p713 = scmp.le.s32.totalorder 1, %s27
    %p714 = scmp.lt.s32.totalorder %s27, 3
    %p715 = pnand %p713, %p714
    %p716 = pneg %p715
    // Predicated region
    $region101: #{image_domain_mri_vit3d_forward.3} parent=5 // pred_check
      _
    $region102: #{image_domain_mri_vit3d_forward.3} parent=5 // pred_check_branch
      %718 = sbr.rel (%p715) target = $region104
    $region103: #{image_domain_mri_vit3d_forward.3} parent=5 // pred_region
      %s719 = ssub.s32 %s27, 1
      %s720 = smul.u32 2, %s36
      %p721 = scmp.lt.s32.totalorder %s720, 1
      %s722 = scalar_select %p721, %s720, 1
      %s723 = smul.addr %s722, 4
      %s724 = scalar_lea.vmem %s0, %s723
      %p725 = pneg %p65
      %p726 = pneg %p62
      %s727 = smul.u32 2, %s36
      %p728 = scmp.lt.s32.totalorder %s727, 1
      %s729 = scalar_select %p728, %s727, 1
      %s730 = scalar_lea.vmem %s1, %s729
      %p731 = pneg %p91
      %p732 = pneg %p88
      %p733 = pneg %p112
      %p734 = pneg %p109
      %p735 = pneg %p133
      %p736 = pneg %p130
      %p737 = pneg %p154
      %p738 = pneg %p151
      %p739 = scmp.lt.s32.totalorder %s37, 1
      %s740 = scalar_select %p739, %s37, 1
      %s741 = scalar_lea.vmem %s5, %s740
      %p742 = pneg %p180
      %p743 = pneg %p177
      %p744 = scmp.lt.s32.totalorder %s37, 1
      %s745 = scalar_select %p744, %s37, 1
      %s746 = scalar_lea.vmem %s6, %s745
      %p747 = pneg %p206
      %p748 = pneg %p203
      %p749 = scmp.lt.s32.totalorder %s37, 1
      %s750 = scalar_select %p749, %s37, 1
      %s751 = smul.addr %s750, 4
      %s752 = smul.addr %s751, 4
      %s753 = scalar_lea.vmem %s7, %s752
      %p754 = pneg %p232
      %p755 = pneg %p229
      %p756 = scmp.lt.s32.totalorder %s37, 1
      %s757 = scalar_select %p756, %s37, 1
      %s758 = scalar_lea.vmem %s8, %s757
      %p759 = pneg %p258
      %p760 = pneg %p255
      %p761 = scmp.lt.s32.totalorder %s37, 1
      %s762 = scalar_select %p761, %s37, 1
      %s763 = smul.addr %s762, 4
      %s764 = smul.addr %s763, 4
      %s765 = scalar_lea.vmem %s9, %s764
      %p766 = pneg %p284
      %p767 = pneg %p281
      %p768 = scmp.lt.s32.totalorder %s37, 1
      %s769 = scalar_select %p768, %s37, 1
      %s770 = scalar_lea.vmem %s10, %s769
      %p771 = pneg %p310
      %p772 = pneg %p307
      %p773 = scmp.lt.s32.totalorder %s37, 1
      %s774 = scalar_select %p773, %s37, 1
      %s775 = scalar_lea.vmem %s11, %s774
      %p776 = pneg %p336
      %p777 = pneg %p333
      %p778 = scmp.lt.s32.totalorder %s37, 1
      %s779 = scalar_select %p778, %s37, 1
      %s780 = scalar_lea.vmem %s12, %s779
      %p781 = pneg %p362
      %p782 = pneg %p359
      %p783 = scmp.lt.s32.totalorder %s37, 1
      %s784 = scalar_select %p783, %s37, 1
      %s785 = smul.addr %s784, 4
      %s786 = smul.addr %s785, 4
      %s787 = scalar_lea.vmem %s13, %s786
      %p788 = pneg %p388
      %p789 = pneg %p385
      %p790 = scmp.lt.s32.totalorder %s37, 1
      %s791 = scalar_select %p790, %s37, 1
      %s792 = scalar_lea.vmem %s14, %s791
      %p793 = pneg %p414
      %p794 = pneg %p411
      %p795 = scmp.lt.s32.totalorder %s37, 1
      %s796 = scalar_select %p795, %s37, 1
      %s797 = smul.addr %s796, 16
      %s798 = smul.addr %s797, 4
      %s799 = scalar_lea.vmem %s15, %s798
      %p800 = pneg %p440
      %p801 = pneg %p437
      %p802 = scmp.lt.s32.totalorder %s37, 1
      %s803 = scalar_select %p802, %s37, 1
      %s804 = scalar_lea.vmem %s16, %s803
      %p805 = pneg %p466
      %p806 = pneg %p463
      %p807 = pneg %p487
      %p808 = pneg %p484
      %p809 = pneg %p508
      %p810 = pneg %p505
      %p811 = pneg %p529
      %p812 = pneg %p526
      %p813 = pneg %p550
      %p814 = pneg %p547
      %p815 = pneg %p576
      %p816 = pneg %p573
      %p817 = scmp.lt.s32.totalorder %s36, 0
      %s818 = scalar_select %p817, %s36, 0
      %s819 = smul.addr %s818, 4
      %s820 = smul.addr %s819, 2
      %s821 = scalar_lea.vmem %s21, %s820
      %s822 = smul.u32 2, %s36
      %p823 = scmp.lt.s32.totalorder %s822, 1
      %s824 = scalar_select %p823, %s822, 1
      %s825 = smul.addr %s824, 4
      %s826 = scalar_lea.vmem %s0, %s825
      %s827 = smul.u32 2, %s36
      %s828 = smul.u32 2, %s36
      %p829 = scmp.lt.s32.totalorder %s828, 1
      %s830 = scalar_select %p829, %s828, 1
      %s831 = scalar_lea.vmem %s1, %s830
      %s832 = smul.u32 2, %s36
      %p833 = scmp.lt.s32.totalorder %s37, 1
      %s834 = scalar_select %p833, %s37, 1
      %s835 = scalar_lea.vmem %s5, %s834
      %p836 = scmp.lt.s32.totalorder %s37, 1
      %s837 = scalar_select %p836, %s37, 1
      %s838 = scalar_lea.vmem %s6, %s837
      %p839 = scmp.lt.s32.totalorder %s37, 1
      %s840 = scalar_select %p839, %s37, 1
      %s841 = smul.addr %s840, 4
      %s842 = smul.addr %s841, 4
      %s843 = scalar_lea.vmem %s7, %s842
      %p844 = scmp.lt.s32.totalorder %s37, 1
      %s845 = scalar_select %p844, %s37, 1
      %s846 = scalar_lea.vmem %s8, %s845
      %p847 = scmp.lt.s32.totalorder %s37, 1
      %s848 = scalar_select %p847, %s37, 1
      %s849 = smul.addr %s848, 4
      %s850 = smul.addr %s849, 4
      %s851 = scalar_lea.vmem %s9, %s850
      %p852 = scmp.lt.s32.totalorder %s37, 1
      %s853 = scalar_select %p852, %s37, 1
      %s854 = scalar_lea.vmem %s10, %s853
      %p855 = scmp.lt.s32.totalorder %s37, 1
      %s856 = scalar_select %p855, %s37, 1
      %s857 = scalar_lea.vmem %s11, %s856
      %p858 = scmp.lt.s32.totalorder %s37, 1
      %s859 = scalar_select %p858, %s37, 1
      %s860 = scalar_lea.vmem %s12, %s859
      %p861 = scmp.lt.s32.totalorder %s37, 1
      %s862 = scalar_select %p861, %s37, 1
      %s863 = smul.addr %s862, 4
      %s864 = smul.addr %s863, 4
      %s865 = scalar_lea.vmem %s13, %s864
      %p866 = scmp.lt.s32.totalorder %s37, 1
      %s867 = scalar_select %p866, %s37, 1
      %s868 = scalar_lea.vmem %s14, %s867
      %p869 = scmp.lt.s32.totalorder %s37, 1
      %s870 = scalar_select %p869, %s37, 1
      %s871 = smul.addr %s870, 16
      %s872 = smul.addr %s871, 4
      %s873 = scalar_lea.vmem %s15, %s872
      %p874 = scmp.lt.s32.totalorder %s37, 1
      %s875 = scalar_select %p874, %s37, 1
      %s876 = scalar_lea.vmem %s16, %s875
      %p877 = scmp.lt.s32.totalorder %s36, 0
      %s878 = scalar_select %p877, %s36, 0
      %s879 = smul.addr %s878, 4
      %s880 = smul.addr %s879, 2
      %s881 = scalar_lea.vmem %s21, %s880
      %p883 = scmp.eq.s32.totalorder %s37, 0
      // Predicated region
      $region105: #{image_domain_mri_vit3d_forward.3} parent=103 // pred_check
        %p884 = pneg %p883
      $region106: #{image_domain_mri_vit3d_forward.3} parent=103 // pred_check_branch
        %886 = sbr.rel (%p884) target = $region108
      $region107: #{image_domain_mri_vit3d_forward.3} parent=103 // pred_region
        %v887 = vld [vmem:[%s826] sm:$0xf]
        %v888 = vld [vmem:[%s826 + $0x4] sm:$0xf]
        %v889 = vunpack.c.l.bf16 %v887
        %v890 = vunpack.c.l.bf16 %v888
        %v891 = vld [vmem:[%s831] sm:$0x1]
        %v892 = vld [vmem:[%s831 + $0x1] sm:$0x1]
        %v895 = vperm.slane %v891, 0
        %v896 = vperm.slane %v892, 0
        %897 = vset.pattern.permute.xlu0 0
        %898 = vperm.xlu0 %897, %v895
        %v899 = vpop.permute.xlu0 %898
        %901 = vset.pattern.permute.xlu0 0
        %902 = vperm.xlu0 %901, %v896
        %v903 = vpop.permute.xlu0 %902
        %v905 = vsub.f32 %v889, %v899
        %v906 = vsub.f32 %v890, %v903
        %907 = vset.pattern.permute.xlu0 1
        %908 = vperm.xlu0 %907, %v895
        %v909 = vpop.permute.xlu0 %908
        %911 = vset.pattern.permute.xlu0 1
        %912 = vperm.xlu0 %911, %v896
        %v913 = vpop.permute.xlu0 %912
        %v915 = vrcp.pop %v909
        %v916 = vmul.f32 %v909, %v915
        %v917 = vsub.f32 1.0, %v916
        %v918 = vmul.f32 %v915, %v917
        %v919 = vadd.f32 %v915, %v918
        %vm920 = vweird.f32 %v909
        %vm921 = vweird.f32 %v915
        %vm922 = vmor %vm920, %vm921
        %v923 = vsel %vm922, %v915, %v919
        %v924 = vand.u32 2147483647, %v909
        %vm925 = vcmp.eq.f32.partialorder %v924, 8.507059e+37
        %v926 = vand.u32 %v909, 2147483648
        %v927 = vor.u32 1.1754944e-38, %v926
        %v928 = vsel %vm925, %v927, %v923
        %v929 = vmul.f32 %v905, %v928
        %v930 = vrcp.pop %v913
        %v931 = vmul.f32 %v913, %v930
        %v932 = vsub.f32 1.0, %v931
        %v933 = vmul.f32 %v930, %v932
        %v934 = vadd.f32 %v930, %v933
        %vm935 = vweird.f32 %v913
        %vm936 = vweird.f32 %v930
        %vm937 = vmor %vm935, %vm936
        %v938 = vsel %vm937, %v930, %v934
        %v939 = vand.u32 2147483647, %v913
        %vm940 = vcmp.eq.f32.partialorder %v939, 8.507059e+37
        %v941 = vand.u32 %v913, 2147483648
        %v942 = vor.u32 1.1754944e-38, %v941
        %v943 = vsel %vm940, %v942, %v938
        %v944 = vmul.f32 %v906, %v943
        %v945 = vld [vmem:[%s3] sm:$0xf]
        %v946 = vld [vmem:[%s3 + $0x4] sm:$0xf]
        %v947 = vld [vmem:[%s3 + $0x8] sm:$0xf]
        %v948 = vld [vmem:[%s3 + $0xc] sm:$0xf]
        %v949 = vld [vmem:[%s3 + $0x10] sm:$0xf]
        %v950 = vld [vmem:[%s3 + $0x14] sm:$0xf]
        %v951 = vld [vmem:[%s3 + $0x18] sm:$0xf]
        %v952 = vld [vmem:[%s3 + $0x1c] sm:$0xf]
        %v953 = vld [vmem:[%s4] sm:$0x1]
        %v954 = vpack.c.bf16 %v944, %v929
        %v956 = vperm.slane %v953, 0
        %v966 = vunpack.c.l.b16 %v945
        %v967 = vunpack.c.l.b16 %v946
        %v968 = vunpack.c.l.b16 %v947
        %v969 = vunpack.c.l.b16 %v948
        %v970 = vunpack.c.l.b16 %v949
        %v971 = vunpack.c.l.b16 %v950
        %v972 = vunpack.c.l.b16 %v951
        %v973 = vunpack.c.l.b16 %v952
        %v974 = vpack.c.b16 %v967, %v966
        %v975 = vpack.c.b16 %v969, %v968
        %v976 = vpack.c.b16 %v971, %v970
        %v977 = vpack.c.b16 %v973, %v972
        %vm982 = vcmask 523264
        %v984 = vsel %vm982, %v954, 0
        %986 = vmatpush.bf16.msra.mxu0 0
        %987 = vmatpush.bf16.msra.mxu0 0
        %988 = vmatpush.bf16.msra.mxu0 0
        %989 = vmatpush.bf16.msra.mxu0 0
        %990 = vmatpush.bf16.msra.mxu0 %v977
        %991 = vmatpush.bf16.msra.mxu0 %v976
        %992 = vmatpush.bf16.msra.mxu0 %v975
        %993 = vmatpush.bf16.msra.mxu0 %v974
        %994 = vmatmul.bf16.gmra.mxu0 %v984
        %v995 = vpop.f32.mrf.mxu0
        %v996 = vadd.f32 %v956, %v995
        %v997 = vpop.f32.mrf.mxu0
        %v998 = vadd.f32 %v956, %v997
        %999 = vdwg.mxu0
        %v1000 = vld [vmem:[%s2] sm:$0xff]
        %v1001 = vadd.f32 %v996, %v1000
        %v1002 = vadd.f32 %v998, %v1000
        %vm1003 = vcmask 261120
        %1004 = vst.msk [vmem:[#allocation2] sm:$0xff] %vm1003, %v1001
        %1005 = vst.msk [vmem:[#allocation2 + $0x8] sm:$0xff] %vm1003, %v1002
      $region108: #{image_domain_mri_vit3d_forward.3} parent=103 // pred_fallthru
        _
      %v1006 = vld [vmem:[#allocation2] sm:$0xff]
      %v1007 = vld [vmem:[#allocation2 + $0x8] sm:$0xff]
      %v1008 = vld [vmem:[%s835] sm:$0x1]
      %v1009 = vld [vmem:[%s838] sm:$0x1]
      %vm1010 = vcmask 261120
      %v1011 = vsel %vm1010, %v1006, 0.0
      %1012 = vadd.xlane.f32.xlu0 %v1011
      %v1013 = vpop.xlane.xlu0 %1012
      %v1014 = vsel %vm1010, %v1007, 0.0
      %1015 = vadd.xlane.f32.xlu0 %v1014
      %v1016 = vpop.xlane.xlu0 %1015
      %v1017 = vrcp.pop 32.0
      %v1018 = vmul.f32 32.0, %v1017
      %v1019 = vsub.f32 1.0, %v1018
      %v1020 = vmul.f32 %v1017, %v1019
      %v1021 = vadd.f32 %v1017, %v1020
      %vm1022 = vweird.f32 %v1017
      %v1023 = vsel %vm1022, %v1017, %v1021
      %v1024 = vmul.f32 %v1013, %v1023
      %v1025 = vmul.f32 %v1016, %v1023
      %v1026 = vsub.f32 %v1006, %v1024
      %v1027 = vsub.f32 %v1007, %v1025
      %v1028 = vmul.f32 %v1026, %v1026
      %v1029 = vmul.f32 %v1027, %v1027
      %v1030 = vsel %vm1010, %v1028, 0.0
      %1031 = vadd.xlane.f32.xlu0 %v1030
      %v1032 = vpop.xlane.xlu0 %1031
      %v1033 = vsel %vm1010, %v1029, 0.0
      %1034 = vadd.xlane.f32.xlu0 %v1033
      %v1035 = vpop.xlane.xlu0 %1034
      %v1036 = vmul.f32 %v1032, %v1023
      %v1037 = vmul.f32 %v1035, %v1023
      %v1038 = vadd.f32 %v1036, 1e-05
      %v1039 = vadd.f32 %v1037, 1e-05
      %v1040 = vrsqrt.pop %v1038
      %v1041 = vmul.f32 %v1040, %v1038
      %v1042 = vmul.f32 %v1041, %v1040
      %v1043 = vmul.f32 0.5, %v1042
      %v1044 = vsub.f32 1.5, %v1043
      %v1045 = vmul.f32 %v1040, %v1044
      %vm1046 = vweird.f32 %v1038
      %vm1047 = vweird.f32 %v1040
      %vm1048 = vmor %vm1046, %vm1047
      %v1049 = vsel %vm1048, %v1040, %v1045
      %v1050 = vrsqrt.pop %v1039
      %v1051 = vmul.f32 %v1050, %v1039
      %v1052 = vmul.f32 %v1051, %v1050
      %v1053 = vmul.f32 0.5, %v1052
      %v1054 = vsub.f32 1.5, %v1053
      %v1055 = vmul.f32 %v1050, %v1054
      %vm1056 = vweird.f32 %v1039
      %vm1057 = vweird.f32 %v1050
      %vm1058 = vmor %vm1056, %vm1057
      %v1059 = vsel %vm1058, %v1050, %v1055
      %v1060 = vmul.f32 %v1026, %v1049
      %v1061 = vmul.f32 %v1027, %v1059
      %v1063 = vperm.slane %v1008, 0
      %v1065 = vmul.f32 %v1060, %v1063
      %v1066 = vmul.f32 %v1061, %v1063
      %v1068 = vperm.slane %v1009, 0
      %v1070 = vadd.f32 %v1065, %v1068
      %v1071 = vadd.f32 %v1066, %v1068
      %v1072 = vld [vmem:[%s843] sm:$0xf]
      %v1073 = vld [vmem:[%s843 + $0x4] sm:$0xf]
      %v1074 = vld [vmem:[%s843 + $0x8] sm:$0xf]
      %v1075 = vld [vmem:[%s843 + $0xc] sm:$0xf]
      %v1076 = vld [vmem:[%s846] sm:$0x1]
      %v1077 = vpack.c.bf16 %v1071, %v1070
      %v1079 = vperm.slane %v1076, 0
      %v1085 = vunpack.c.l.b16 %v1072
      %v1086 = vunpack.c.l.b16 %v1073
      %v1087 = vunpack.c.l.b16 %v1074
      %v1088 = vunpack.c.l.b16 %v1075
      %v1089 = vpack.c.b16 %v1086, %v1085
      %v1090 = vpack.c.b16 %v1088, %v1087
      %v1094 = vsel %vm1010, %v1077, 0
      %1096 = vmatpush.bf16.msra.mxu0 0
      %1097 = vmatpush.bf16.msra.mxu0 0
      %1098 = vmatpush.bf16.msra.mxu0 0
      %1099 = vmatpush.bf16.msra.mxu0 0
      %1100 = vmatpush.bf16.msra.mxu0 0
      %1101 = vmatpush.bf16.msra.mxu0 0
      %1102 = vmatpush.bf16.msra.mxu0 %v1090
      %1103 = vmatpush.bf16.msra.mxu0 %v1089
      %1104 = vmatmul.bf16.gmra.mxu0 %v1094
      %v1105 = vpop.f32.mrf.mxu0
      %v1106 = vadd.f32 %v1079, %v1105
      %v1107 = vpop.f32.mrf.mxu0
      %v1108 = vadd.f32 %v1079, %v1107
      %1109 = vdwg.mxu0
      %1112 = vrot.lane.b32.xlu0 %v1106, 120
      %v1113 = vpop.permute.xlu0 %1112
      %1114 = vrot.lane.b32.xlu0 %v1108, 120
      %v1115 = vpop.permute.xlu0 %1114
      %1118 = vrot.lane.b32.xlu0 %v1106, 112
      %v1119 = vpop.permute.xlu0 %1118
      %1120 = vrot.lane.b32.xlu0 %v1108, 112
      %v1121 = vpop.permute.xlu0 %1120
      %1124 = vrot.lane.b32.xlu0 %v1106, 104
      %v1125 = vpop.permute.xlu0 %1124
      %1126 = vrot.lane.b32.xlu0 %v1108, 104
      %v1127 = vpop.permute.xlu0 %1126
      %1130 = vrot.lane.b32.xlu0 %v1106, 96
      %v1131 = vpop.permute.xlu0 %1130
      %1132 = vrot.lane.b32.xlu0 %v1108, 96
      %v1133 = vpop.permute.xlu0 %1132
      %1134 = vrot.lane.b32.xlu0 %v1106, 88
      %v1135 = vpop.permute.xlu0 %1134
      %1136 = vrot.lane.b32.xlu0 %v1108, 88
      %v1137 = vpop.permute.xlu0 %1136
      %1138 = vrot.lane.b32.xlu0 %v1106, 80
      %v1139 = vpop.permute.xlu0 %1138
      %1140 = vrot.lane.b32.xlu0 %v1108, 80
      %v1141 = vpop.permute.xlu0 %1140
      %1142 = vrot.lane.b32.xlu0 %v1106, 72
      %v1143 = vpop.permute.xlu0 %1142
      %1144 = vrot.lane.b32.xlu0 %v1108, 72
      %v1145 = vpop.permute.xlu0 %1144
      %1146 = vrot.lane.b32.xlu0 %v1106, 64
      %v1147 = vpop.permute.xlu0 %1146
      %1148 = vrot.lane.b32.xlu0 %v1108, 64
      %v1149 = vpop.permute.xlu0 %1148
      %1152 = vrot.lane.b32.xlu0 %v1106, 56
      %v1153 = vpop.permute.xlu0 %1152
      %1154 = vrot.lane.b32.xlu0 %v1108, 56
      %v1155 = vpop.permute.xlu0 %1154
      %1158 = vrot.lane.b32.xlu0 %v1106, 48
      %v1159 = vpop.permute.xlu0 %1158
      %1160 = vrot.lane.b32.xlu0 %v1108, 48
      %v1161 = vpop.permute.xlu0 %1160
      %1164 = vrot.lane.b32.xlu0 %v1106, 40
      %v1165 = vpop.permute.xlu0 %1164
      %1166 = vrot.lane.b32.xlu0 %v1108, 40
      %v1167 = vpop.permute.xlu0 %1166
      %v1170 = vmul.f32 %v1106, 0.35355338
      %v1171 = vmul.f32 %v1108, 0.35355338
      %v1172 = vmul.f32 %v1113, 0.35355338
      %v1173 = vmul.f32 %v1115, 0.35355338
      %v1174 = vmul.f32 %v1119, 0.35355338
      %v1175 = vmul.f32 %v1121, 0.35355338
      %v1176 = vmul.f32 %v1125, 0.35355338
      %v1177 = vmul.f32 %v1127, 0.35355338
      %vm1178 = vcmask 64512
      %v1180 = vsel %vm1178, %v1170, 0
      %v1182 = vsel %vm1178, %v1131, 0
      %1184 = vmatpush.xpose.msra.mxu0 0.0
      %1185 = vmatpush.xpose.msra.mxu0 0.0
      %1186 = vmatpush.xpose.msra.mxu0 0.0
      %1187 = vmatpush.xpose.msra.mxu0 0.0
      %1188 = vmatpush.xpose.msra.mxu0 0.0
      %1189 = vmatpush.xpose.msra.mxu0 0.0
      %1190 = vmatpush.xpose.msra.mxu0 0.0
      %1191 = vmatpush.xpose.msra.mxu0 0.0
      %1192 = vmatpush.xpose.msra.mxu0 0.0
      %1193 = vmatpush.xpose.msra.mxu0 0.0
      %1194 = vmatpush.xpose.msra.mxu0 0.0
      %1195 = vmatpush.xpose.msra.mxu0 0.0
      %1196 = vmatpush.xpose.msra.mxu0 0.0
      %1197 = vmatpush.xpose.msra.mxu0 0.0
      %1198 = vmatpush.xpose.msra.mxu0 0.0
      %1199 = vmatpush.xpose.msra.mxu0 %v1182
      %1200 = vmatmul.f32.gmra.mxu0 %v1180
      %v1201 = vpop.f32.mrf.mxu0
      %v1202 = vadd.f32 0.0, %v1201
      %1203 = vdwg.mxu0
      %v1205 = vsel %vm1178, %v1171, 0
      %v1207 = vsel %vm1178, %v1133, 0
      %1209 = vmatpush.xpose.msra.mxu0 0.0
      %1210 = vmatpush.xpose.msra.mxu0 0.0
      %1211 = vmatpush.xpose.msra.mxu0 0.0
      %1212 = vmatpush.xpose.msra.mxu0 0.0
      %1213 = vmatpush.xpose.msra.mxu0 0.0
      %1214 = vmatpush.xpose.msra.mxu0 0.0
      %1215 = vmatpush.xpose.msra.mxu0 0.0
      %1216 = vmatpush.xpose.msra.mxu0 0.0
      %1217 = vmatpush.xpose.msra.mxu0 0.0
      %1218 = vmatpush.xpose.msra.mxu0 0.0
      %1219 = vmatpush.xpose.msra.mxu0 0.0
      %1220 = vmatpush.xpose.msra.mxu0 0.0
      %1221 = vmatpush.xpose.msra.mxu0 0.0
      %1222 = vmatpush.xpose.msra.mxu0 0.0
      %1223 = vmatpush.xpose.msra.mxu0 0.0
      %1224 = vmatpush.xpose.msra.mxu0 %v1207
      %1225 = vmatmul.f32.gmra.mxu0 %v1205
      %v1226 = vpop.f32.mrf.mxu0
      %v1227 = vadd.f32 0.0, %v1226
      %1228 = vdwg.mxu0
      %v1230 = vsel %vm1178, %v1172, 0
      %v1232 = vsel %vm1178, %v1135, 0
      %1234 = vmatpush.xpose.msra.mxu0 0.0
      %1235 = vmatpush.xpose.msra.mxu0 0.0
      %1236 = vmatpush.xpose.msra.mxu0 0.0
      %1237 = vmatpush.xpose.msra.mxu0 0.0
      %1238 = vmatpush.xpose.msra.mxu0 0.0
      %1239 = vmatpush.xpose.msra.mxu0 0.0
      %1240 = vmatpush.xpose.msra.mxu0 0.0
      %1241 = vmatpush.xpose.msra.mxu0 0.0
      %1242 = vmatpush.xpose.msra.mxu0 0.0
      %1243 = vmatpush.xpose.msra.mxu0 0.0
      %1244 = vmatpush.xpose.msra.mxu0 0.0
      %1245 = vmatpush.xpose.msra.mxu0 0.0
      %1246 = vmatpush.xpose.msra.mxu0 0.0
      %1247 = vmatpush.xpose.msra.mxu0 0.0
      %1248 = vmatpush.xpose.msra.mxu0 0.0
      %1249 = vmatpush.xpose.msra.mxu0 %v1232
      %1250 = vmatmul.f32.gmra.mxu0 %v1230
      %v1251 = vpop.f32.mrf.mxu0
      %v1252 = vadd.f32 0.0, %v1251
      %1253 = vdwg.mxu0
      %v1255 = vsel %vm1178, %v1173, 0
      %v1257 = vsel %vm1178, %v1137, 0
      %1259 = vmatpush.xpose.msra.mxu0 0.0
      %1260 = vmatpush.xpose.msra.mxu0 0.0
      %1261 = vmatpush.xpose.msra.mxu0 0.0
      %1262 = vmatpush.xpose.msra.mxu0 0.0
      %1263 = vmatpush.xpose.msra.mxu0 0.0
      %1264 = vmatpush.xpose.msra.mxu0 0.0
      %1265 = vmatpush.xpose.msra.mxu0 0.0
      %1266 = vmatpush.xpose.msra.mxu0 0.0
      %1267 = vmatpush.xpose.msra.mxu0 0.0
      %1268 = vmatpush.xpose.msra.mxu0 0.0
      %1269 = vmatpush.xpose.msra.mxu0 0.0
      %1270 = vmatpush.xpose.msra.mxu0 0.0
      %1271 = vmatpush.xpose.msra.mxu0 0.0
      %1272 = vmatpush.xpose.msra.mxu0 0.0
      %1273 = vmatpush.xpose.msra.mxu0 0.0
      %1274 = vmatpush.xpose.msra.mxu0 %v1257
      %1275 = vmatmul.f32.gmra.mxu0 %v1255
      %v1276 = vpop.f32.mrf.mxu0
      %v1277 = vadd.f32 0.0, %v1276
      %1278 = vdwg.mxu0
      %v1280 = vsel %vm1178, %v1174, 0
      %v1282 = vsel %vm1178, %v1139, 0
      %1284 = vmatpush.xpose.msra.mxu0 0.0
      %1285 = vmatpush.xpose.msra.mxu0 0.0
      %1286 = vmatpush.xpose.msra.mxu0 0.0
      %1287 = vmatpush.xpose.msra.mxu0 0.0
      %1288 = vmatpush.xpose.msra.mxu0 0.0
      %1289 = vmatpush.xpose.msra.mxu0 0.0
      %1290 = vmatpush.xpose.msra.mxu0 0.0
      %1291 = vmatpush.xpose.msra.mxu0 0.0
      %1292 = vmatpush.xpose.msra.mxu0 0.0
      %1293 = vmatpush.xpose.msra.mxu0 0.0
      %1294 = vmatpush.xpose.msra.mxu0 0.0
      %1295 = vmatpush.xpose.msra.mxu0 0.0
      %1296 = vmatpush.xpose.msra.mxu0 0.0
      %1297 = vmatpush.xpose.msra.mxu0 0.0
      %1298 = vmatpush.xpose.msra.mxu0 0.0
      %1299 = vmatpush.xpose.msra.mxu0 %v1282
      %1300 = vmatmul.f32.gmra.mxu0 %v1280
      %v1301 = vpop.f32.mrf.mxu0
      %v1302 = vadd.f32 0.0, %v1301
      %1303 = vdwg.mxu0
      %v1305 = vsel %vm1178, %v1175, 0
      %v1307 = vsel %vm1178, %v1141, 0
      %1309 = vmatpush.xpose.msra.mxu0 0.0
      %1310 = vmatpush.xpose.msra.mxu0 0.0
      %1311 = vmatpush.xpose.msra.mxu0 0.0
      %1312 = vmatpush.xpose.msra.mxu0 0.0
      %1313 = vmatpush.xpose.msra.mxu0 0.0
      %1314 = vmatpush.xpose.msra.mxu0 0.0
      %1315 = vmatpush.xpose.msra.mxu0 0.0
      %1316 = vmatpush.xpose.msra.mxu0 0.0
      %1317 = vmatpush.xpose.msra.mxu0 0.0
      %1318 = vmatpush.xpose.msra.mxu0 0.0
      %1319 = vmatpush.xpose.msra.mxu0 0.0
      %1320 = vmatpush.xpose.msra.mxu0 0.0
      %1321 = vmatpush.xpose.msra.mxu0 0.0
      %1322 = vmatpush.xpose.msra.mxu0 0.0
      %1323 = vmatpush.xpose.msra.mxu0 0.0
      %1324 = vmatpush.xpose.msra.mxu0 %v1307
      %1325 = vmatmul.f32.gmra.mxu0 %v1305
      %v1326 = vpop.f32.mrf.mxu0
      %v1327 = vadd.f32 0.0, %v1326
      %1328 = vdwg.mxu0
      %v1330 = vsel %vm1178, %v1176, 0
      %v1332 = vsel %vm1178, %v1143, 0
      %1334 = vmatpush.xpose.msra.mxu0 0.0
      %1335 = vmatpush.xpose.msra.mxu0 0.0
      %1336 = vmatpush.xpose.msra.mxu0 0.0
      %1337 = vmatpush.xpose.msra.mxu0 0.0
      %1338 = vmatpush.xpose.msra.mxu0 0.0
      %1339 = vmatpush.xpose.msra.mxu0 0.0
      %1340 = vmatpush.xpose.msra.mxu0 0.0
      %1341 = vmatpush.xpose.msra.mxu0 0.0
      %1342 = vmatpush.xpose.msra.mxu0 0.0
      %1343 = vmatpush.xpose.msra.mxu0 0.0
      %1344 = vmatpush.xpose.msra.mxu0 0.0
      %1345 = vmatpush.xpose.msra.mxu0 0.0
      %1346 = vmatpush.xpose.msra.mxu0 0.0
      %1347 = vmatpush.xpose.msra.mxu0 0.0
      %1348 = vmatpush.xpose.msra.mxu0 0.0
      %1349 = vmatpush.xpose.msra.mxu0 %v1332
      %1350 = vmatmul.f32.gmra.mxu0 %v1330
      %v1351 = vpop.f32.mrf.mxu0
      %v1352 = vadd.f32 0.0, %v1351
      %1353 = vdwg.mxu0
      %v1355 = vsel %vm1178, %v1177, 0
      %v1357 = vsel %vm1178, %v1145, 0
      %1359 = vmatpush.xpose.msra.mxu0 0.0
      %1360 = vmatpush.xpose.msra.mxu0 0.0
      %1361 = vmatpush.xpose.msra.mxu0 0.0
      %1362 = vmatpush.xpose.msra.mxu0 0.0
      %1363 = vmatpush.xpose.msra.mxu0 0.0
      %1364 = vmatpush.xpose.msra.mxu0 0.0
      %1365 = vmatpush.xpose.msra.mxu0 0.0
      %1366 = vmatpush.xpose.msra.mxu0 0.0
      %1367 = vmatpush.xpose.msra.mxu0 0.0
      %1368 = vmatpush.xpose.msra.mxu0 0.0
      %1369 = vmatpush.xpose.msra.mxu0 0.0
      %1370 = vmatpush.xpose.msra.mxu0 0.0
      %1371 = vmatpush.xpose.msra.mxu0 0.0
      %1372 = vmatpush.xpose.msra.mxu0 0.0
      %1373 = vmatpush.xpose.msra.mxu0 0.0
      %1374 = vmatpush.xpose.msra.mxu0 %v1357
      %1375 = vmatmul.f32.gmra.mxu0 %v1355
      %v1376 = vpop.f32.mrf.mxu0
      %v1377 = vadd.f32 0.0, %v1376
      %1378 = vdwg.mxu0
      %v1379 = vsel %vm1178, %v1202, -inf
      %1380 = vmax.xlane.f32.xlu0 %v1379
      %v1381 = vpop.xlane.xlu0 %1380
      %v1382 = vsel %vm1178, %v1227, -inf
      %1383 = vmax.xlane.f32.xlu0 %v1382
      %v1384 = vpop.xlane.xlu0 %1383
      %v1385 = vsel %vm1178, %v1252, -inf
      %1386 = vmax.xlane.f32.xlu0 %v1385
      %v1387 = vpop.xlane.xlu0 %1386
      %v1388 = vsel %vm1178, %v1277, -inf
      %1389 = vmax.xlane.f32.xlu0 %v1388
      %v1390 = vpop.xlane.xlu0 %1389
      %v1391 = vsel %vm1178, %v1302, -inf
      %1392 = vmax.xlane.f32.xlu0 %v1391
      %v1393 = vpop.xlane.xlu0 %1392
      %v1394 = vsel %vm1178, %v1327, -inf
      %1395 = vmax.xlane.f32.xlu0 %v1394
      %v1396 = vpop.xlane.xlu0 %1395
      %v1397 = vsel %vm1178, %v1352, -inf
      %1398 = vmax.xlane.f32.xlu0 %v1397
      %v1399 = vpop.xlane.xlu0 %1398
      %v1400 = vsel %vm1178, %v1377, -inf
      %1401 = vmax.xlane.f32.xlu0 %v1400
      %v1402 = vpop.xlane.xlu0 %1401
      %v1403 = vsub.f32 %v1202, %v1381
      %v1404 = vsub.f32 %v1227, %v1384
      %v1405 = vsub.f32 %v1252, %v1387
      %v1406 = vsub.f32 %v1277, %v1390
      %v1407 = vsub.f32 %v1302, %v1393
      %v1408 = vsub.f32 %v1327, %v1396
      %v1409 = vsub.f32 %v1352, %v1399
      %v1410 = vsub.f32 %v1377, %v1402
      %v1411 = vmul.f32 %v1403, 1.442695
      %v1412 = vpow.pop %v1411
      %v1413 = vmul.f32 %v1404, 1.442695
      %v1414 = vpow.pop %v1413
      %v1415 = vmul.f32 %v1405, 1.442695
      %v1416 = vpow.pop %v1415
      %v1417 = vmul.f32 %v1406, 1.442695
      %v1418 = vpow.pop %v1417
      %v1419 = vmul.f32 %v1407, 1.442695
      %v1420 = vpow.pop %v1419
      %v1421 = vmul.f32 %v1408, 1.442695
      %v1422 = vpow.pop %v1421
      %v1423 = vmul.f32 %v1409, 1.442695
      %v1424 = vpow.pop %v1423
      %v1425 = vmul.f32 %v1410, 1.442695
      %v1426 = vpow.pop %v1425
      %v1427 = vsel %vm1178, %v1412, 0.0
      %1428 = vadd.xlane.f32.xlu0 %v1427
      %v1429 = vpop.xlane.xlu0 %1428
      %v1430 = vsel %vm1178, %v1414, 0.0
      %1431 = vadd.xlane.f32.xlu0 %v1430
      %v1432 = vpop.xlane.xlu0 %1431
      %v1433 = vsel %vm1178, %v1416, 0.0
      %1434 = vadd.xlane.f32.xlu0 %v1433
      %v1435 = vpop.xlane.xlu0 %1434
      %v1436 = vsel %vm1178, %v1418, 0.0
      %1437 = vadd.xlane.f32.xlu0 %v1436
      %v1438 = vpop.xlane.xlu0 %1437
      %v1439 = vsel %vm1178, %v1420, 0.0
      %1440 = vadd.xlane.f32.xlu0 %v1439
      %v1441 = vpop.xlane.xlu0 %1440
      %v1442 = vsel %vm1178, %v1422, 0.0
      %1443 = vadd.xlane.f32.xlu0 %v1442
      %v1444 = vpop.xlane.xlu0 %1443
      %v1445 = vsel %vm1178, %v1424, 0.0
      %1446 = vadd.xlane.f32.xlu0 %v1445
      %v1447 = vpop.xlane.xlu0 %1446
      %v1448 = vsel %vm1178, %v1426, 0.0
      %1449 = vadd.xlane.f32.xlu0 %v1448
      %v1450 = vpop.xlane.xlu0 %1449
      %v1451 = vrcp.pop %v1429
      %v1452 = vrcp.pop %v1432
      %v1453 = vrcp.pop %v1435
      %v1454 = vrcp.pop %v1438
      %v1455 = vrcp.pop %v1441
      %v1456 = vrcp.pop %v1444
      %v1457 = vrcp.pop %v1447
      %v1458 = vrcp.pop %v1450
      %v1459 = vmul.f32 %v1412, %v1451
      %v1460 = vmul.f32 %v1414, %v1452
      %v1461 = vmul.f32 %v1416, %v1453
      %v1462 = vmul.f32 %v1418, %v1454
      %v1463 = vmul.f32 %v1420, %v1455
      %v1464 = vmul.f32 %v1422, %v1456
      %v1465 = vmul.f32 %v1424, %v1457
      %v1466 = vmul.f32 %v1426, %v1458
      %v1468 = vsel %vm1178, %v1459, 0
      %1470 = vmatpush.msra.mxu0 0.0
      %1471 = vmatpush.msra.mxu0 0.0
      %1472 = vmatpush.msra.mxu0 0.0
      %1473 = vmatpush.msra.mxu0 0.0
      %1474 = vmatpush.msra.mxu0 0.0
      %1475 = vmatpush.msra.mxu0 0.0
      %1476 = vmatpush.msra.mxu0 0.0
      %1477 = vmatpush.msra.mxu0 0.0
      %1478 = vmatpush.msra.mxu0 0.0
      %1479 = vmatpush.msra.mxu0 0.0
      %1480 = vmatpush.msra.mxu0 0.0
      %1481 = vmatpush.msra.mxu0 0.0
      %1482 = vmatpush.msra.mxu0 0.0
      %1483 = vmatpush.msra.mxu0 0.0
      %1484 = vmatpush.msra.mxu0 0.0
      %1485 = vmatpush.msra.mxu0 %v1147
      %1486 = vmatmul.f32.gmra.mxu0 %v1468
      %v1487 = vpop.f32.mrf.mxu0
      %v1488 = vadd.f32 0.0, %v1487
      %1489 = vdwg.mxu0
      %v1491 = vsel %vm1178, %v1460, 0
      %1493 = vmatpush.msra.mxu0 0.0
      %1494 = vmatpush.msra.mxu0 0.0
      %1495 = vmatpush.msra.mxu0 0.0
      %1496 = vmatpush.msra.mxu0 0.0
      %1497 = vmatpush.msra.mxu0 0.0
      %1498 = vmatpush.msra.mxu0 0.0
      %1499 = vmatpush.msra.mxu0 0.0
      %1500 = vmatpush.msra.mxu0 0.0
      %1501 = vmatpush.msra.mxu0 0.0
      %1502 = vmatpush.msra.mxu0 0.0
      %1503 = vmatpush.msra.mxu0 0.0
      %1504 = vmatpush.msra.mxu0 0.0
      %1505 = vmatpush.msra.mxu0 0.0
      %1506 = vmatpush.msra.mxu0 0.0
      %1507 = vmatpush.msra.mxu0 0.0
      %1508 = vmatpush.msra.mxu0 %v1149
      %1509 = vmatmul.f32.gmra.mxu0 %v1491
      %v1510 = vpop.f32.mrf.mxu0
      %v1511 = vadd.f32 0.0, %v1510
      %1512 = vdwg.mxu0
      %v1514 = vsel %vm1178, %v1461, 0
      %1516 = vmatpush.msra.mxu0 0.0
      %1517 = vmatpush.msra.mxu0 0.0
      %1518 = vmatpush.msra.mxu0 0.0
      %1519 = vmatpush.msra.mxu0 0.0
      %1520 = vmatpush.msra.mxu0 0.0
      %1521 = vmatpush.msra.mxu0 0.0
      %1522 = vmatpush.msra.mxu0 0.0
      %1523 = vmatpush.msra.mxu0 0.0
      %1524 = vmatpush.msra.mxu0 0.0
      %1525 = vmatpush.msra.mxu0 0.0
      %1526 = vmatpush.msra.mxu0 0.0
      %1527 = vmatpush.msra.mxu0 0.0
      %1528 = vmatpush.msra.mxu0 0.0
      %1529 = vmatpush.msra.mxu0 0.0
      %1530 = vmatpush.msra.mxu0 0.0
      %1531 = vmatpush.msra.mxu0 %v1153
      %1532 = vmatmul.f32.gmra.mxu0 %v1514
      %v1533 = vpop.f32.mrf.mxu0
      %v1534 = vadd.f32 0.0, %v1533
      %1535 = vdwg.mxu0
      %v1537 = vsel %vm1178, %v1462, 0
      %1539 = vmatpush.msra.mxu0 0.0
      %1540 = vmatpush.msra.mxu0 0.0
      %1541 = vmatpush.msra.mxu0 0.0
      %1542 = vmatpush.msra.mxu0 0.0
      %1543 = vmatpush.msra.mxu0 0.0
      %1544 = vmatpush.msra.mxu0 0.0
      %1545 = vmatpush.msra.mxu0 0.0
      %1546 = vmatpush.msra.mxu0 0.0
      %1547 = vmatpush.msra.mxu0 0.0
      %1548 = vmatpush.msra.mxu0 0.0
      %1549 = vmatpush.msra.mxu0 0.0
      %1550 = vmatpush.msra.mxu0 0.0
      %1551 = vmatpush.msra.mxu0 0.0
      %1552 = vmatpush.msra.mxu0 0.0
      %1553 = vmatpush.msra.mxu0 0.0
      %1554 = vmatpush.msra.mxu0 %v1155
      %1555 = vmatmul.f32.gmra.mxu0 %v1537
      %v1556 = vpop.f32.mrf.mxu0
      %v1557 = vadd.f32 0.0, %v1556
      %1558 = vdwg.mxu0
      %v1560 = vsel %vm1178, %v1463, 0
      %1562 = vmatpush.msra.mxu0 0.0
      %1563 = vmatpush.msra.mxu0 0.0
      %1564 = vmatpush.msra.mxu0 0.0
      %1565 = vmatpush.msra.mxu0 0.0
      %1566 = vmatpush.msra.mxu0 0.0
      %1567 = vmatpush.msra.mxu0 0.0
      %1568 = vmatpush.msra.mxu0 0.0
      %1569 = vmatpush.msra.mxu0 0.0
      %1570 = vmatpush.msra.mxu0 0.0
      %1571 = vmatpush.msra.mxu0 0.0
      %1572 = vmatpush.msra.mxu0 0.0
      %1573 = vmatpush.msra.mxu0 0.0
      %1574 = vmatpush.msra.mxu0 0.0
      %1575 = vmatpush.msra.mxu0 0.0
      %1576 = vmatpush.msra.mxu0 0.0
      %1577 = vmatpush.msra.mxu0 %v1159
      %1578 = vmatmul.f32.gmra.mxu0 %v1560
      %v1579 = vpop.f32.mrf.mxu0
      %v1580 = vadd.f32 0.0, %v1579
      %1581 = vdwg.mxu0
      %v1583 = vsel %vm1178, %v1464, 0
      %1585 = vmatpush.msra.mxu0 0.0
      %1586 = vmatpush.msra.mxu0 0.0
      %1587 = vmatpush.msra.mxu0 0.0
      %1588 = vmatpush.msra.mxu0 0.0
      %1589 = vmatpush.msra.mxu0 0.0
      %1590 = vmatpush.msra.mxu0 0.0
      %1591 = vmatpush.msra.mxu0 0.0
      %1592 = vmatpush.msra.mxu0 0.0
      %1593 = vmatpush.msra.mxu0 0.0
      %1594 = vmatpush.msra.mxu0 0.0
      %1595 = vmatpush.msra.mxu0 0.0
      %1596 = vmatpush.msra.mxu0 0.0
      %1597 = vmatpush.msra.mxu0 0.0
      %1598 = vmatpush.msra.mxu0 0.0
      %1599 = vmatpush.msra.mxu0 0.0
      %1600 = vmatpush.msra.mxu0 %v1161
      %1601 = vmatmul.f32.gmra.mxu0 %v1583
      %v1602 = vpop.f32.mrf.mxu0
      %v1603 = vadd.f32 0.0, %v1602
      %1604 = vdwg.mxu0
      %v1606 = vsel %vm1178, %v1465, 0
      %1608 = vmatpush.msra.mxu0 0.0
      %1609 = vmatpush.msra.mxu0 0.0
      %1610 = vmatpush.msra.mxu0 0.0
      %1611 = vmatpush.msra.mxu0 0.0
      %1612 = vmatpush.msra.mxu0 0.0
      %1613 = vmatpush.msra.mxu0 0.0
      %1614 = vmatpush.msra.mxu0 0.0
      %1615 = vmatpush.msra.mxu0 0.0
      %1616 = vmatpush.msra.mxu0 0.0
      %1617 = vmatpush.msra.mxu0 0.0
      %1618 = vmatpush.msra.mxu0 0.0
      %1619 = vmatpush.msra.mxu0 0.0
      %1620 = vmatpush.msra.mxu0 0.0
      %1621 = vmatpush.msra.mxu0 0.0
      %1622 = vmatpush.msra.mxu0 0.0
      %1623 = vmatpush.msra.mxu0 %v1165
      %1624 = vmatmul.f32.gmra.mxu0 %v1606
      %v1625 = vpop.f32.mrf.mxu0
      %v1626 = vadd.f32 0.0, %v1625
      %1627 = vdwg.mxu0
      %v1629 = vsel %vm1178, %v1466, 0
      %1631 = vmatpush.msra.mxu0 0.0
      %1632 = vmatpush.msra.mxu0 0.0
      %1633 = vmatpush.msra.mxu0 0.0
      %1634 = vmatpush.msra.mxu0 0.0
      %1635 = vmatpush.msra.mxu0 0.0
      %1636 = vmatpush.msra.mxu0 0.0
      %1637 = vmatpush.msra.mxu0 0.0
      %1638 = vmatpush.msra.mxu0 0.0
      %1639 = vmatpush.msra.mxu0 0.0
      %1640 = vmatpush.msra.mxu0 0.0
      %1641 = vmatpush.msra.mxu0 0.0
      %1642 = vmatpush.msra.mxu0 0.0
      %1643 = vmatpush.msra.mxu0 0.0
      %1644 = vmatpush.msra.mxu0 0.0
      %1645 = vmatpush.msra.mxu0 0.0
      %1646 = vmatpush.msra.mxu0 %v1167
      %1647 = vmatmul.f32.gmra.mxu0 %v1629
      %v1648 = vpop.f32.mrf.mxu0
      %v1649 = vadd.f32 0.0, %v1648
      %1650 = vdwg.mxu0
      %1653 = vrot.lane.b32.xlu0 %v1534, 8
      %v1654 = vpop.permute.xlu0 %1653
      %1655 = vrot.lane.b32.xlu0 %v1557, 8
      %v1656 = vpop.permute.xlu0 %1655
      %1661 = vrot.lane.b32.xlu0 %v1580, 16
      %v1662 = vpop.permute.xlu0 %1661
      %1663 = vrot.lane.b32.xlu0 %v1603, 16
      %v1664 = vpop.permute.xlu0 %1663
      %1669 = vrot.lane.b32.xlu0 %v1626, 24
      %v1670 = vpop.permute.xlu0 %1669
      %1671 = vrot.lane.b32.xlu0 %v1649, 24
      %v1672 = vpop.permute.xlu0 %1671
      %v1675 = vsel %vm1178, %v1488, %v1654
      %v1676 = vsel %vm1178, %v1511, %v1656
      %vm1677 = vcmask 130048
      %v1678 = vsel %vm1677, %v1675, %v1662
      %v1679 = vsel %vm1677, %v1676, %v1664
      %vm1680 = vcmask 195584
      %v1681 = vsel %vm1680, %v1678, %v1670
      %v1682 = vsel %vm1680, %v1679, %v1672
      %v1683 = vld [vmem:[%s851] sm:$0xf]
      %v1684 = vld [vmem:[%s851 + $0x4] sm:$0xf]
      %v1685 = vld [vmem:[%s851 + $0x8] sm:$0xf]
      %v1686 = vld [vmem:[%s851 + $0xc] sm:$0xf]
      %v1687 = vld [vmem:[%s854] sm:$0x1]
      %v1688 = vpack.c.bf16 %v1682, %v1681
      %v1690 = vperm.slane %v1687, 0
      %v1696 = vunpack.c.l.b16 %v1683
      %v1697 = vunpack.c.l.b16 %v1684
      %v1698 = vunpack.c.l.b16 %v1685
      %v1699 = vunpack.c.l.b16 %v1686
      %v1700 = vpack.c.b16 %v1697, %v1696
      %v1701 = vpack.c.b16 %v1699, %v1698
      %v1705 = vsel %vm1010, %v1688, 0
      %1707 = vmatpush.bf16.msra.mxu0 0
      %1708 = vmatpush.bf16.msra.mxu0 0
      %1709 = vmatpush.bf16.msra.mxu0 0
      %1710 = vmatpush.bf16.msra.mxu0 0
      %1711 = vmatpush.bf16.msra.mxu0 0
      %1712 = vmatpush.bf16.msra.mxu0 0
      %1713 = vmatpush.bf16.msra.mxu0 %v1701
      %1714 = vmatpush.bf16.msra.mxu0 %v1700
      %1715 = vmatmul.bf16.gmra.mxu0 %v1705
      %v1716 = vpop.f32.mrf.mxu0
      %v1717 = vadd.f32 %v1690, %v1716
      %v1718 = vpop.f32.mrf.mxu0
      %v1719 = vadd.f32 %v1690, %v1718
      %1720 = vdwg.mxu0
      %v1721 = vadd.f32 %v1006, %v1717
      %v1722 = vadd.f32 %v1007, %v1719
      %v1723 = vld [vmem:[%s857] sm:$0x1]
      %v1724 = vld [vmem:[%s860] sm:$0x1]
      %v1725 = vsel %vm1010, %v1721, 0.0
      %1726 = vadd.xlane.f32.xlu0 %v1725
      %v1727 = vpop.xlane.xlu0 %1726
      %v1728 = vsel %vm1010, %v1722, 0.0
      %1729 = vadd.xlane.f32.xlu0 %v1728
      %v1730 = vpop.xlane.xlu0 %1729
      %v1731 = vmul.f32 %v1727, %v1023
      %v1732 = vmul.f32 %v1730, %v1023
      %v1733 = vsub.f32 %v1721, %v1731
      %v1734 = vsub.f32 %v1722, %v1732
      %v1735 = vmul.f32 %v1733, %v1733
      %v1736 = vmul.f32 %v1734, %v1734
      %v1737 = vsel %vm1010, %v1735, 0.0
      %1738 = vadd.xlane.f32.xlu0 %v1737
      %v1739 = vpop.xlane.xlu0 %1738
      %v1740 = vsel %vm1010, %v1736, 0.0
      %1741 = vadd.xlane.f32.xlu0 %v1740
      %v1742 = vpop.xlane.xlu0 %1741
      %v1743 = vmul.f32 %v1739, %v1023
      %v1744 = vmul.f32 %v1742, %v1023
      %v1745 = vadd.f32 %v1743, 1e-05
      %v1746 = vadd.f32 %v1744, 1e-05
      %v1747 = vrsqrt.pop %v1745
      %v1748 = vmul.f32 %v1747, %v1745
      %v1749 = vmul.f32 %v1748, %v1747
      %v1750 = vmul.f32 0.5, %v1749
      %v1751 = vsub.f32 1.5, %v1750
      %v1752 = vmul.f32 %v1747, %v1751
      %vm1753 = vweird.f32 %v1745
      %vm1754 = vweird.f32 %v1747
      %vm1755 = vmor %vm1753, %vm1754
      %v1756 = vsel %vm1755, %v1747, %v1752
      %v1757 = vrsqrt.pop %v1746
      %v1758 = vmul.f32 %v1757, %v1746
      %v1759 = vmul.f32 %v1758, %v1757
      %v1760 = vmul.f32 0.5, %v1759
      %v1761 = vsub.f32 1.5, %v1760
      %v1762 = vmul.f32 %v1757, %v1761
      %vm1763 = vweird.f32 %v1746
      %vm1764 = vweird.f32 %v1757
      %vm1765 = vmor %vm1763, %vm1764
      %v1766 = vsel %vm1765, %v1757, %v1762
      %v1767 = vmul.f32 %v1733, %v1756
      %v1768 = vmul.f32 %v1734, %v1766
      %v1770 = vperm.slane %v1723, 0
      %v1772 = vmul.f32 %v1767, %v1770
      %v1773 = vmul.f32 %v1768, %v1770
      %v1775 = vperm.slane %v1724, 0
      %v1777 = vadd.f32 %v1772, %v1775
      %v1778 = vadd.f32 %v1773, %v1775
      %v1779 = vld [vmem:[%s865] sm:$0xf]
      %v1780 = vld [vmem:[%s865 + $0x4] sm:$0xf]
      %v1781 = vld [vmem:[%s865 + $0x8] sm:$0xf]
      %v1782 = vld [vmem:[%s865 + $0xc] sm:$0xf]
      %v1783 = vld [vmem:[%s868] sm:$0x1]
      %v1784 = vpack.c.bf16 %v1778, %v1777
      %v1786 = vperm.slane %v1783, 0
      %v1792 = vunpack.c.l.b16 %v1779
      %v1793 = vunpack.c.l.b16 %v1780
      %v1794 = vunpack.c.l.b16 %v1781
      %v1795 = vunpack.c.l.b16 %v1782
      %v1796 = vpack.c.b16 %v1793, %v1792
      %v1797 = vpack.c.b16 %v1795, %v1794
      %v1801 = vsel %vm1010, %v1784, 0
      %1803 = vmatpush.bf16.msra.mxu0 0
      %1804 = vmatpush.bf16.msra.mxu0 0
      %1805 = vmatpush.bf16.msra.mxu0 0
      %1806 = vmatpush.bf16.msra.mxu0 0
      %1807 = vmatpush.bf16.msra.mxu0 0
      %1808 = vmatpush.bf16.msra.mxu0 0
      %1809 = vmatpush.bf16.msra.mxu0 %v1797
      %1810 = vmatpush.bf16.msra.mxu0 %v1796
      %1811 = vmatmul.bf16.gmra.mxu0 %v1801
      %v1812 = vpop.f32.mrf.mxu0
      %v1813 = vadd.f32 %v1786, %v1812
      %v1814 = vpop.f32.mrf.mxu0
      %v1815 = vadd.f32 %v1786, %v1814
      %1816 = vdwg.mxu0
      %v1817 = vmul.f32 %v1813, 0.5
      %v1818 = vmul.f32 %v1815, 0.5
      %v1819 = vmul.f32 %v1813, 0.70710677
      %v1820 = vmul.f32 %v1815, 0.70710677
      %v1821 = vmul.f32 %v1819, %v1819
      %v1822 = vmin.f32 16.0, %v1821
      %v1823 = vmul.f32 %v1822, 2.1237322e-06
      %v1824 = vadd.f32 %v1823, 0.00028619796
      %v1825 = vmul.f32 %v1822, %v1824
      %v1826 = vadd.f32 %v1825, 0.0036580483
      %v1827 = vmul.f32 %v1822, %v1826
      %v1828 = vadd.f32 %v1827, 0.05243302
      %v1829 = vmul.f32 %v1822, %v1828
      %v1830 = vadd.f32 %v1829, 0.18741608
      %v1831 = vmul.f32 %v1822, %v1830
      %v1832 = vadd.f32 %v1831, 1.1283791
      %v1833 = vmul.f32 %v1819, %v1832
      %v1834 = vmul.f32 %v1822, 3.8918573e-05
      %v1835 = vadd.f32 %v1834, 0.001143296
      %v1836 = vmul.f32 %v1822, %v1835
      %v1837 = vadd.f32 %v1836, 0.014752088
      %v1838 = vmul.f32 %v1822, %v1837
      %v1839 = vadd.f32 %v1838, 0.112945676
      %v1840 = vmul.f32 %v1822, %v1839
      %v1841 = vadd.f32 %v1840, 0.4994258
      %v1842 = vmul.f32 %v1822, %v1841
      %v1843 = vadd.f32 %v1842, 1.0
      %v1844 = vrcp.pop %v1843
      %v1845 = vmul.f32 %v1843, %v1844
      %v1846 = vsub.f32 1.0, %v1845
      %v1847 = vmul.f32 %v1844, %v1846
      %v1848 = vadd.f32 %v1844, %v1847
      %vm1849 = vweird.f32 %v1843
      %vm1850 = vweird.f32 %v1844
      %vm1851 = vmor %vm1849, %vm1850
      %v1852 = vsel %vm1851, %v1844, %v1848
      %v1853 = vand.u32 2147483647, %v1843
      %vm1854 = vcmp.eq.f32.partialorder %v1853, 8.507059e+37
      %v1855 = vand.u32 %v1843, 2147483648
      %v1856 = vor.u32 1.1754944e-38, %v1855
      %v1857 = vsel %vm1854, %v1856, %v1852
      %v1858 = vmul.f32 %v1833, %v1857
      %v1859 = vmin.f32 %v1858, 1.0
      %v1860 = vmax.f32 %v1859, -1.0
      %v1861 = vmul.f32 %v1820, %v1820
      %v1862 = vmin.f32 16.0, %v1861
      %v1863 = vmul.f32 %v1862, 2.1237322e-06
      %v1864 = vadd.f32 %v1863, 0.00028619796
      %v1865 = vmul.f32 %v1862, %v1864
      %v1866 = vadd.f32 %v1865, 0.0036580483
      %v1867 = vmul.f32 %v1862, %v1866
      %v1868 = vadd.f32 %v1867, 0.05243302
      %v1869 = vmul.f32 %v1862, %v1868
      %v1870 = vadd.f32 %v1869, 0.18741608
      %v1871 = vmul.f32 %v1862, %v1870
      %v1872 = vadd.f32 %v1871, 1.1283791
      %v1873 = vmul.f32 %v1820, %v1872
      %v1874 = vmul.f32 %v1862, 3.8918573e-05
      %v1875 = vadd.f32 %v1874, 0.001143296
      %v1876 = vmul.f32 %v1862, %v1875
      %v1877 = vadd.f32 %v1876, 0.014752088
      %v1878 = vmul.f32 %v1862, %v1877
      %v1879 = vadd.f32 %v1878, 0.112945676
      %v1880 = vmul.f32 %v1862, %v1879
      %v1881 = vadd.f32 %v1880, 0.4994258
      %v1882 = vmul.f32 %v1862, %v1881
      %v1883 = vadd.f32 %v1882, 1.0
      %v1884 = vrcp.pop %v1883
      %v1885 = vmul.f32 %v1883, %v1884
      %v1886 = vsub.f32 1.0, %v1885
      %v1887 = vmul.f32 %v1884, %v1886
      %v1888 = vadd.f32 %v1884, %v1887
      %vm1889 = vweird.f32 %v1883
      %vm1890 = vweird.f32 %v1884
      %vm1891 = vmor %vm1889, %vm1890
      %v1892 = vsel %vm1891, %v1884, %v1888
      %v1893 = vand.u32 2147483647, %v1883
      %vm1894 = vcmp.eq.f32.partialorder %v1893, 8.507059e+37
      %v1895 = vand.u32 %v1883, 2147483648
      %v1896 = vor.u32 1.1754944e-38, %v1895
      %v1897 = vsel %vm1894, %v1896, %v1892
      %v1898 = vmul.f32 %v1873, %v1897
      %v1899 = vmin.f32 %v1898, 1.0
      %v1900 = vmax.f32 %v1899, -1.0
      %v1901 = vadd.f32 %v1860, 1.0
      %v1902 = vadd.f32 %v1900, 1.0
      %v1903 = vmul.f32 %v1817, %v1901
      %v1904 = vmul.f32 %v1818, %v1902
      %v1905 = vld [vmem:[%s873] sm:$0xf]
      %v1906 = vld [vmem:[%s873 + $0x4] sm:$0xf]
      %v1907 = vld [vmem:[%s873 + $0x8] sm:$0xf]
      %v1908 = vld [vmem:[%s873 + $0xc] sm:$0xf]
      %v1909 = vld [vmem:[%s873 + $0x10] sm:$0xf]
      %v1910 = vld [vmem:[%s873 + $0x14] sm:$0xf]
      %v1911 = vld [vmem:[%s873 + $0x18] sm:$0xf]
      %v1912 = vld [vmem:[%s873 + $0x1c] sm:$0xf]
      %v1913 = vld [vmem:[%s873 + $0x20] sm:$0xf]
      %v1914 = vld [vmem:[%s873 + $0x24] sm:$0xf]
      %v1915 = vld [vmem:[%s873 + $0x28] sm:$0xf]
      %v1916 = vld [vmem:[%s873 + $0x2c] sm:$0xf]
      %v1917 = vld [vmem:[%s873 + $0x30] sm:$0xf]
      %v1918 = vld [vmem:[%s873 + $0x34] sm:$0xf]
      %v1919 = vld [vmem:[%s873 + $0x38] sm:$0xf]
      %v1920 = vld [vmem:[%s873 + $0x3c] sm:$0xf]
      %v1921 = vld [vmem:[%s876] sm:$0x1]
      %v1922 = vpack.c.bf16 %v1904, %v1903
      %v1924 = vperm.slane %v1921, 0
      %v1942 = vunpack.c.l.b16 %v1905
      %v1943 = vunpack.c.l.b16 %v1906
      %v1944 = vunpack.c.l.b16 %v1907
      %v1945 = vunpack.c.l.b16 %v1908
      %v1946 = vunpack.c.l.b16 %v1909
      %v1947 = vunpack.c.l.b16 %v1910
      %v1948 = vunpack.c.l.b16 %v1911
      %v1949 = vunpack.c.l.b16 %v1912
      %v1950 = vunpack.c.l.b16 %v1913
      %v1951 = vunpack.c.l.b16 %v1914
      %v1952 = vunpack.c.l.b16 %v1915
      %v1953 = vunpack.c.l.b16 %v1916
      %v1954 = vunpack.c.l.b16 %v1917
      %v1955 = vunpack.c.l.b16 %v1918
      %v1956 = vunpack.c.l.b16 %v1919
      %v1957 = vunpack.c.l.b16 %v1920
      %v1958 = vpack.c.b16 %v1943, %v1942
      %v1959 = vpack.c.b16 %v1945, %v1944
      %v1960 = vpack.c.b16 %v1947, %v1946
      %v1961 = vpack.c.b16 %v1949, %v1948
      %v1962 = vpack.c.b16 %v1951, %v1950
      %v1963 = vpack.c.b16 %v1953, %v1952
      %v1964 = vpack.c.b16 %v1955, %v1954
      %v1965 = vpack.c.b16 %v1957, %v1956
      %1974 = vmatpush.bf16.msra.mxu0 %v1965
      %1975 = vmatpush.bf16.msra.mxu0 %v1964
      %1976 = vmatpush.bf16.msra.mxu0 %v1963
      %1977 = vmatpush.bf16.msra.mxu0 %v1962
      %1978 = vmatpush.bf16.msra.mxu0 %v1961
      %1979 = vmatpush.bf16.msra.mxu0 %v1960
      %1980 = vmatpush.bf16.msra.mxu0 %v1959
      %1981 = vmatpush.bf16.msra.mxu0 %v1958
      %1982 = vmatmul.bf16.gmra.mxu0 %v1922
      %v1983 = vpop.f32.mrf.mxu0
      %v1984 = vadd.f32 %v1924, %v1983
      %v1985 = vpop.f32.mrf.mxu0
      %v1986 = vadd.f32 %v1924, %v1985
      %1987 = vdwg.mxu0
      %v1988 = vadd.f32 %v1721, %v1984
      %v1989 = vadd.f32 %v1722, %v1986
      %1990 = vst.msk [vmem:[#allocation2] sm:$0xff] %vm1010, %v1988
      %1991 = vst.msk [vmem:[#allocation2 + $0x8] sm:$0xff] %vm1010, %v1989
      %p1992 = scmp.eq.s32.totalorder %s37, 1
      // Predicated region
      $region109: #{image_domain_mri_vit3d_forward.3} parent=103 // pred_check
        %p1993 = pneg %p1992
      $region110: #{image_domain_mri_vit3d_forward.3} parent=103 // pred_check_branch
        %1995 = sbr.rel (%p1993) target = $region112
      $region111: #{image_domain_mri_vit3d_forward.3} parent=103 // pred_region
        %v1996 = vld [vmem:[%s17] sm:$0x1]
        %v1997 = vld [vmem:[%s18] sm:$0x1]
        %v1998 = vsel %vm1010, %v1988, 0.0
        %1999 = vadd.xlane.f32.xlu0 %v1998
        %v2000 = vpop.xlane.xlu0 %1999
        %v2001 = vsel %vm1010, %v1989, 0.0
        %2002 = vadd.xlane.f32.xlu0 %v2001
        %v2003 = vpop.xlane.xlu0 %2002
        %v2004 = vmul.f32 %v2000, %v1023
        %v2005 = vmul.f32 %v2003, %v1023
        %v2006 = vsub.f32 %v1988, %v2004
        %v2007 = vsub.f32 %v1989, %v2005
        %v2008 = vmul.f32 %v2006, %v2006
        %v2009 = vmul.f32 %v2007, %v2007
        %v2010 = vsel %vm1010, %v2008, 0.0
        %2011 = vadd.xlane.f32.xlu0 %v2010
        %v2012 = vpop.xlane.xlu0 %2011
        %v2013 = vsel %vm1010, %v2009, 0.0
        %2014 = vadd.xlane.f32.xlu0 %v2013
        %v2015 = vpop.xlane.xlu0 %2014
        %v2016 = vmul.f32 %v2012, %v1023
        %v2017 = vmul.f32 %v2015, %v1023
        %v2018 = vadd.f32 %v2016, 1e-05
        %v2019 = vadd.f32 %v2017, 1e-05
        %v2020 = vrsqrt.pop %v2018
        %v2021 = vmul.f32 %v2020, %v2018
        %v2022 = vmul.f32 %v2021, %v2020
        %v2023 = vmul.f32 0.5, %v2022
        %v2024 = vsub.f32 1.5, %v2023
        %v2025 = vmul.f32 %v2020, %v2024
        %vm2026 = vweird.f32 %v2018
        %vm2027 = vweird.f32 %v2020
        %vm2028 = vmor %vm2026, %vm2027
        %v2029 = vsel %vm2028, %v2020, %v2025
        %v2030 = vrsqrt.pop %v2019
        %v2031 = vmul.f32 %v2030, %v2019
        %v2032 = vmul.f32 %v2031, %v2030
        %v2033 = vmul.f32 0.5, %v2032
        %v2034 = vsub.f32 1.5, %v2033
        %v2035 = vmul.f32 %v2030, %v2034
        %vm2036 = vweird.f32 %v2019
        %vm2037 = vweird.f32 %v2030
        %vm2038 = vmor %vm2036, %vm2037
        %v2039 = vsel %vm2038, %v2030, %v2035
        %v2040 = vmul.f32 %v2006, %v2029
        %v2041 = vmul.f32 %v2007, %v2039
        %v2043 = vperm.slane %v1996, 0
        %v2045 = vmul.f32 %v2040, %v2043
        %v2046 = vmul.f32 %v2041, %v2043
        %v2048 = vperm.slane %v1997, 0
        %v2050 = vadd.f32 %v2045, %v2048
        %v2051 = vadd.f32 %v2046, %v2048
        %v2052 = vld [vmem:[%s19] sm:$0xf]
        %v2053 = vld [vmem:[%s19 + $0x4] sm:$0xf]
        %v2054 = vld [vmem:[%s19 + $0x8] sm:$0xf]
        %v2055 = vld [vmem:[%s19 + $0xc] sm:$0xf]
        %v2056 = vld [vmem:[%s20] sm:$0x1]
        %v2057 = vpack.c.bf16 %v2051, %v2050
        %v2059 = vperm.slane %v2056, 0
        %v2065 = vunpack.c.l.b16 %v2052
        %v2066 = vunpack.c.l.b16 %v2053
        %v2067 = vunpack.c.l.b16 %v2054
        %v2068 = vunpack.c.l.b16 %v2055
        %v2069 = vpack.c.b16 %v2066, %v2065
        %v2070 = vpack.c.b16 %v2068, %v2067
        %v2074 = vsel %vm1010, %v2057, 0
        %2076 = vmatpush.bf16.msra.mxu0 0
        %2077 = vmatpush.bf16.msra.mxu0 0
        %2078 = vmatpush.bf16.msra.mxu0 0
        %2079 = vmatpush.bf16.msra.mxu0 0
        %2080 = vmatpush.bf16.msra.mxu0 0
        %2081 = vmatpush.bf16.msra.mxu0 0
        %2082 = vmatpush.bf16.msra.mxu0 %v2070
        %2083 = vmatpush.bf16.msra.mxu0 %v2069
        %2084 = vmatmul.bf16.gmra.mxu0 %v2074
        %v2085 = vpop.f32.mrf.mxu0
        %v2086 = vadd.f32 %v2059, %v2085
        %v2087 = vpop.f32.mrf.mxu0
        %v2088 = vadd.f32 %v2059, %v2087
        %2089 = vdwg.mxu0
        %v2090 = vld [vmem:[%s831] sm:$0x1]
        %v2091 = vld [vmem:[%s831 + $0x1] sm:$0x1]
        %v2094 = vperm.slane %v2090, 0
        %v2095 = vperm.slane %v2091, 0
        %2096 = vset.pattern.permute.xlu0 1
        %2097 = vperm.xlu0 %2096, %v2094
        %v2098 = vpop.permute.xlu0 %2097
        %2100 = vset.pattern.permute.xlu0 1
        %2101 = vperm.xlu0 %2100, %v2095
        %v2102 = vpop.permute.xlu0 %2101
        %v2104 = vmul.f32 %v2086, %v2098
        %v2105 = vmul.f32 %v2088, %v2102
        %2106 = vset.pattern.permute.xlu0 0
        %2107 = vperm.xlu0 %2106, %v2094
        %v2108 = vpop.permute.xlu0 %2107
        %2110 = vset.pattern.permute.xlu0 0
        %2111 = vperm.xlu0 %2110, %v2095
        %v2112 = vpop.permute.xlu0 %2111
        %v2114 = vadd.f32 %v2104, %v2108
        %v2115 = vadd.f32 %v2105, %v2112
        %v2118 = vrot.slane %v2115, 7
        %vm2119 = vcmask 1041409
        %v2120 = vsel %vm2119, %v2118, %v2114
        %v2122 = vrot.slane %v2114, 1
        %v2123 = vsel %vm2119, %v2115, %v2122
        %2124 = vrot.lane.b32.xlu0 %v2123, 64
        %v2125 = vpop.permute.xlu0 %2124
        %v2127 = vrot.slane %v2114, 2
        %v2128 = vrot.slane %v2115, 1
        %v2129 = vsel %vm2119, %v2128, %v2127
        %v2131 = vrot.slane %v2114, 3
        %v2132 = vrot.slane %v2115, 2
        %v2133 = vsel %vm2119, %v2132, %v2131
        %2134 = vrot.lane.b32.xlu0 %v2133, 64
        %v2135 = vpop.permute.xlu0 %2134
        %v2137 = vrot.slane %v2114, 4
        %v2138 = vrot.slane %v2115, 3
        %v2139 = vsel %vm2119, %v2138, %v2137
        %v2141 = vrot.slane %v2114, 5
        %v2142 = vrot.slane %v2115, 4
        %v2143 = vsel %vm2119, %v2142, %v2141
        %2144 = vrot.lane.b32.xlu0 %v2143, 64
        %v2145 = vpop.permute.xlu0 %2144
        %v2147 = vrot.slane %v2114, 6
        %v2148 = vrot.slane %v2115, 5
        %v2149 = vsel %vm2119, %v2148, %v2147
        %v2151 = vrot.slane %v2114, 7
        %v2152 = vrot.slane %v2115, 6
        %v2153 = vsel %vm2119, %v2152, %v2151
        %2154 = vrot.lane.b32.xlu0 %v2153, 64
        %v2155 = vpop.permute.xlu0 %2154
        %vm2157 = vcmask 523264
        %v2158 = vsel %vm2157, %v2120, %v2125
        %v2159 = vsel %vm2157, %v2129, %v2135
        %v2160 = vsel %vm2157, %v2139, %v2145
        %v2161 = vsel %vm2157, %v2149, %v2155
        %v2166 = vrot.slane %v2159, 6
        %v2167 = vrot.slane %v2160, 4
        %v2168 = vrot.slane %v2161, 2
        %vm2169 = vcmask 1041408
        %v2170 = vsel %vm2169, %v2158, %v2166
        %vm2171 = vcmask 1045508
        %v2172 = vsel %vm2171, %v2167, %v2168
        %vm2173 = vcmask 1043456
        %v2174 = vsel %vm2173, %v2170, %v2172
        %2176 = vst [vmem:[%s881] sm:$0xff] %v2174
      $region112: #{image_domain_mri_vit3d_forward.3} parent=103 // pred_fallthru
        _
      %p2177 = scmp.lt.s32.totalorder %s36, 0
      %s2178 = scalar_select %p2177, %s36, 0
      %s2179 = smul.addr %s2178, 4
      %s2180 = smul.addr %s2179, 2
      %s2181 = scalar_lea.vmem %s21, %s2180
      // Predicated region
      $region113: #{image_domain_mri_vit3d_forward.3} parent=103 // pred_check
        %p2182 = pneg %p573
      $region114: #{image_domain_mri_vit3d_forward.3} parent=103 // pred_check_branch
        %2184 = sbr.rel (%p2182) target = $region116
      $region115: #{image_domain_mri_vit3d_forward.3} parent=103 // pred_region
        _
      $region116: #{image_domain_mri_vit3d_forward.3} parent=103 // pred_fallthru
        _
      // Predicated region
      $region117: #{image_domain_mri_vit3d_forward.3} parent=103 // pred_check
        %p2185 = pneg %p573
      $region118: #{image_domain_mri_vit3d_forward.3} parent=103 // pred_check_branch
        %2187 = sbr.rel (%p2185) target = $region120
      $region119: #{image_domain_mri_vit3d_forward.3} parent=103 // pred_region
        %p2188 = scmp.lt.s32.totalorder %s36, 0
        %s2189 = scalar_select %p2188, %s36, 0
        %s2190 = smul.addr %s2189, 4
        %s2191 = smul.addr %s2190, 2
        %s2192 = scalar_lea.vmem %s21, %s2191
      $region120: #{image_domain_mri_vit3d_forward.3} parent=103 // pred_fallthru
        _
    $region104: #{image_domain_mri_vit3d_forward.3} parent=5 // pred_fallthru
      _
    %p2193 = scmp.le.s32.totalorder 2, %s27
    // Predicated region
    $region121: #{image_domain_mri_vit3d_forward.3} parent=5 // pred_check
      %p2194 = pneg %p2193
    $region122: #{image_domain_mri_vit3d_forward.3} parent=5 // pred_check_branch
      %2196 = sbr.rel (%p2194) target = $region124
    $region123: #{image_domain_mri_vit3d_forward.3} parent=5 // pred_region
      %s2197 = ssub.s32 %s27, 2
    $region124: #{image_domain_mri_vit3d_forward.3} parent=5 // pred_fallthru
      _
  $region6: #{image_domain_mri_vit3d_forward.3} parent=0 // loop_footer
    %s31 = sadd.s32 1, %s27
  $region7: #{image_domain_mri_vit3d_forward.3} parent=0 // loop_footer_branch
    %26 = sbr.rel target = $region3
  $region8: #{image_domain_mri_vit3d_forward.3} parent=0 // loop_exit
    _

</llo_original>
